<compile_context>
chip_gen: v5e
topology: v5e:2x2
jax: 0.10.0
libtpu: 0.0.40
codegen_flags: <defaults>
</compile_context>

<pallas_src>
import jax
import jax.numpy as jnp
from jax.experimental import pallas as pl
from jax.experimental.pallas import tpu as pltpu


FEATURE_MAPS = (0, 1, 2)   # self.feature_maps
FILTERS = (64, 48, 48)     # cdbn_encoder.model.feature_maps


# ----------------------------------------------------------------------------
# Pallas kernels
# ----------------------------------------------------------------------------
def _sigmoid(x):
    # explicit form (EUP exp + divide) - guaranteed to lower in Mosaic
    return 1.0 / (1.0 + jnp.exp(-x))


def _encoder_kernel(x_ref, w1_ref, b1_ref, w2_ref, b2_ref, w3_ref, b3_ref,
                    s1_ref, s2_ref, s3_ref):
    """Fused 3-stage CDBN encoder.

    x_ref rows are hierarchically permuted so that, at every stage, the four
    members of each 2x2 pooling window sit in the four contiguous quarters of
    the row dimension.  pool(sigmoid(xW+b)) == sigmoid(max(xW)+b) because
    sigmoid is monotone and the bias is shared per channel.
    """
    def stage(x_bf16, w_ref, b_ref):
        y = jnp.dot(x_bf16, w_ref[...], preferred_element_type=jnp.float32)
        m = y.shape[0] // 4
        v = jnp.maximum(jnp.maximum(y[0 * m:1 * m], y[1 * m:2 * m]),
                        jnp.maximum(y[2 * m:3 * m], y[3 * m:4 * m]))
        return _sigmoid(v + b_ref[...])                    # f32, m rows

    s1 = stage(x_ref[...], w1_ref, b1_ref)                 # (M/4,  c1)
    s1_ref[...] = s1.astype(s1_ref.dtype)
    s2 = stage(s1.astype(jnp.bfloat16), w2_ref, b2_ref)    # (M/16, c2)
    s2_ref[...] = s2.astype(s2_ref.dtype)
    s3 = stage(s2.astype(jnp.bfloat16), w3_ref, b3_ref)    # (M/64, c3)
    s3_ref[...] = s3.astype(s3_ref.dtype)


def _matmul_bias_kernel(x_ref, w_ref, b_ref, o_ref):
    # bf16 operands arrive pre-cast (producers emit bf16); f32 accumulation,
    # f32 bias epilogue (v5e has no bf16 VPU).
    y = jnp.dot(x_ref[...], w_ref[...], preferred_element_type=jnp.float32)
    o_ref[...] = (y + b_ref[...]).astype(o_ref.dtype)


def matmul_bias(x, w, b, out_dtype):
    """(M, K) @ (K, N) + b.  x/w are bf16, b is f32."""
    M, K = x.shape
    _, N = w.shape
    # 2 parallel steps only when there are enough rows (both v7x TCs busy on the
    # biggest matmul); otherwise one step (no per-step overhead on v5e/v6e).
    tm = M // 2 if (M >= 512 and (M // 2) % 8 == 0) else M
    return pl.pallas_call(
        _matmul_bias_kernel,
        out_shape=jax.ShapeDtypeStruct((M, N), out_dtype),
        grid=(M // tm,),
        in_specs=[
            pl.BlockSpec((tm, K), lambda i: (i, 0)),
            pl.BlockSpec((K, N), lambda i: (0, 0)),
            pl.BlockSpec((1, N), lambda i: (0, 0)),
        ],
        out_specs=pl.BlockSpec((tm, N), lambda i: (i, 0)),
        compiler_params=pltpu.CompilerParams(dimension_semantics=("parallel",)),
    )(x, w, b.reshape(1, N))


# ----------------------------------------------------------------------------
# Fused encoder wrapper (hierarchical row permutation done once in XLA on 4 KB)
# ----------------------------------------------------------------------------
def cdbn_encoder_fused(x, enc):
    """x: (B, H, W, 4) f32 NHWC.  Returns the 3 stage features in natural NHWC."""
    B, H, W, Cin = x.shape
    assert H % 8 == 0 and W % 8 == 0, "3 pooling stages need H, W divisible by 8"
    assert (B * H * W) % 512 == 0, "pool slabs must stay sublane (8-row) aligned"
    hA, wA = H // 8, W // 8
    M = B * H * W
    c1, c2, c3 = FILTERS

    # h = 8*hA + 4*hB + 2*hC + hD.  Row order (hD,wD, hC,wC, hB,wB, b,hA,wA):
    # bits pooled at stage k sit outermost among the bits still alive at stage k.
    xb = x.reshape(B, hA, 2, 2, 2, wA, 2, 2, 2, Cin)
    xp = jnp.transpose(xb, (4, 8, 3, 7, 2, 6, 0, 1, 5, 9)).reshape(M, Cin)
    xp = xp.astype(jnp.bfloat16)

    n1, n2, n3 = M // 4, M // 16, M // 64
    s1, s2, s3 = pl.pallas_call(
        _encoder_kernel,
        out_shape=(jax.ShapeDtypeStruct((n1, c1), jnp.bfloat16),
                   jax.ShapeDtypeStruct((n2, c2), jnp.float32),
                   jax.ShapeDtypeStruct((n3, c3), jnp.float32)),
        grid=(1,),
        in_specs=[
            pl.BlockSpec((M, Cin), lambda i: (0, 0)),
            pl.BlockSpec((Cin, c1), lambda i: (0, 0)),
            pl.BlockSpec((1, c1), lambda i: (0, 0)),
            pl.BlockSpec((c1, c2), lambda i: (0, 0)),
            pl.BlockSpec((1, c2), lambda i: (0, 0)),
            pl.BlockSpec((c2, c3), lambda i: (0, 0)),
            pl.BlockSpec((1, c3), lambda i: (0, 0)),
        ],
        out_specs=(pl.BlockSpec((n1, c1), lambda i: (0, 0)),
                   pl.BlockSpec((n2, c2), lambda i: (0, 0)),
                   pl.BlockSpec((n3, c3), lambda i: (0, 0))),
        compiler_params=pltpu.CompilerParams(dimension_semantics=("arbitrary",)),
    )(xp, enc["w1"], enc["b1"], enc["w2"], enc["b2"], enc["w3"], enc["b3"])

    # Un-permute each tiny stage output back to natural NHWC (<= 32 KB each).
    # s1 rows: (hC, wC, hB, wB, b, hA, wA)
    f0 = jnp.transpose(s1.reshape(2, 2, 2, 2, B, hA, wA, c1),
                       (4, 5, 2, 0, 6, 3, 1, 7)).reshape(B, H // 2, W // 2, c1)
    # s2 rows: (hB, wB, b, hA, wA)
    f1 = jnp.transpose(s2.reshape(2, 2, B, hA, wA, c2),
                       (2, 3, 0, 4, 1, 5)).reshape(B, H // 4, W // 4, c2)
    # s3 rows: (b, hA, wA)  (already natural)
    f2 = s3.reshape(B, H // 8, W // 8, c3)
    return f0, f1, f2


# ----------------------------------------------------------------------------
# Plain-JAX glue (tiny tensors only)
# ----------------------------------------------------------------------------
def batchnorm_gelu_rows(x, gamma, beta, eps=1e-5):
    # nn.BatchNorm2d in default training mode (batch statistics, biased variance)
    # followed by nn.GELU() (exact erf form), per channel over all pixels.
    # TODO(synk): kept in plain XLA - exact-erf GELU / global-batch reductions are
    # not guaranteed to lower in Mosaic, and the tensor is only ~128 KB.
    xf = x.astype(jnp.float32)
    mean = jnp.mean(xf, axis=0, keepdims=True)
    var = jnp.mean(jnp.square(xf - mean), axis=0, keepdims=True)
    y = (xf - mean) * jax.lax.rsqrt(var + eps) * gamma + beta
    return jax.nn.gelu(y, approximate=False).astype(jnp.bfloat16)


def bilinear_resize(x, out_h, out_w):
    # F.interpolate(mode="bilinear", align_corners=False) semantics, NHWC.
    # TODO(synk): gather-based resize of the tiny 4x4 / 2x2 features kept in XLA.
    B, H, W, C = x.shape

    def src(out, inp):
        idx = (jnp.arange(out, dtype=jnp.float32) + 0.5) * (inp / out) - 0.5
        idx = jnp.maximum(idx, 0.0)
        i0 = jnp.minimum(jnp.floor(idx).astype(jnp.int32), inp - 1)
        i1 = jnp.minimum(i0 + 1, inp - 1)
        return i0, i1, idx - i0.astype(jnp.float32)

    y0, y1, fy = src(out_h, H)
    x0, x1, fx = src(out_w, W)
    fx = fx[None, None, :, None]
    fy = fy[None, :, None, None]
    top = x[:, y0, :, :]
    bot = x[:, y1, :, :]
    top = top[:, :, x0, :] * (1.0 - fx) + top[:, :, x1, :] * fx
    bot = bot[:, :, x0, :] * (1.0 - fx) + bot[:, :, x1, :] * fx
    return top * (1.0 - fy) + bot * fy


# ----------------------------------------------------------------------------
# CDBNSegmentor forward
# ----------------------------------------------------------------------------
def cdbn_segmentor_forward(cube, plan, num_classes):
    x = jnp.squeeze(cube)                          # torch.squeeze(cube)
    if x.ndim == 3:                                # unbatched (C, H, W) after squeeze
        x = x[None]
    x = jnp.transpose(x, (0, 2, 3, 1))             # NCHW -> NHWC, once
    B = x.shape[0]

    f0, f1, f2 = cdbn_encoder_fused(x, plan["enc"])

    # resize every feature to mx_tile (feature 0's tile size), as in the reference
    mx = max(f0.shape[2], f1.shape[2], f2.shape[2])
    feats = []
    for ft in (f0, f1, f2):
        if ft.shape[1] != mx or ft.shape[2] != mx:
            ft = bilinear_resize(ft, mx, mx)
        feats.append(ft)
    f0, f1, f2 = feats
    M0 = B * mx * mx
    cT1 = FILTERS[0] * 2

    # fpn1 ConvT#1 (2x2, s2) as one matmul; output columns packed (dy1, dx1, co)
    t = matmul_bias(f0.reshape(M0, FILTERS[0]).astype(jnp.bfloat16),
                    plan["wt1"], plan["bt1"], jnp.bfloat16)          # (M0, 4*cT1)
    t = t.reshape(M0 * 4, cT1)                     # rows (b, i, j, dy1, dx1)
    t = batchnorm_gelu_rows(t, plan["bn_g"], plan["bn_b"])           # bf16

    # fpn1 ConvT#2 collapsed with the f0 rows of fusion@seg_head (precomputed).
    # p0 columns packed (dy2, dx2, c_pad); total bias already folded in.
    p0 = matmul_bias(t, plan["wc0"], plan["b_head"], jnp.float32)    # (4*M0, 4*ncp)

    # fpn2 ConvT collapsed with head (f1) + identity/x4-nearest head (f2), fused
    # into a single matmul at native 8x8 resolution; columns packed (dy1, dx1, c).
    x12 = jnp.concatenate([f1, f2], axis=-1).reshape(M0, FILTERS[1] + FILTERS[2])
    p12 = matmul_bias(x12.astype(jnp.bfloat16), plan["w12"],
                      plan["zeros_head"], jnp.float32)               # (M0, 4*ncp)

    ncp = plan["wc0"].shape[1] // 4
    nc = num_classes
    A = p0.reshape(B, mx, mx, 2, 2, 2, 2, ncp)     # b,i,j,dy1,dx1,dy2,dx2,c
    Bq = p12.reshape(B, mx, mx, 2, 2, ncp)[:, :, :, :, :, None, None, :]
    L = (A + Bq)[..., :nc]                         # nearest x2 of p12 == broadcast
    L = jnp.transpose(L, (0, 7, 1, 3, 5, 2, 4, 6))  # (b, c, i, dy1, dy2, j, dx1, dx2)
    return L.reshape(B, nc, 4 * mx, 4 * mx)        # NCHW logits, like PyTorch


# ----------------------------------------------------------------------------
# Deterministic parameter init + one-time (outside jit) weight preparation
# ----------------------------------------------------------------------------
def init_params(key, num_classes):
    keys = iter(jax.random.split(key, 32))

    def rnd(shape, scale=0.05):
        return scale * jax.random.normal(next(keys), shape, dtype=jnp.float32)

    f = FILTERS
    enc_io = [(4, f[0]), (f[0], f[1]), (f[1], f[2])]
    return {
        "enc": [{"w": rnd((ci, co)), "b": rnd((co,), 0.01)} for ci, co in enc_io],
        "fpn1": {
            "w1": rnd((f[0], f[0] * 2, 2, 2)),     # ConvT weight (Cin, Cout, kh, kw)
            "b1": rnd((f[0] * 2,), 0.01),
            "bn_g": jnp.ones((f[0] * 2,), jnp.float32),
            "bn_b": jnp.zeros((f[0] * 2,), jnp.float32),
            "w2": rnd((f[0] * 2, f[0] * 4, 2, 2)),
            "b2": rnd((f[0] * 4,), 0.01),
        },
        "fpn2": {"w": rnd((f[1], f[1] * 2, 2, 2)), "b": rnd((f[1] * 2,), 0.01)},
        "fusion": {"w": rnd((400, 900)), "b": rnd((900,), 0.01)},
        "seg": {"w": rnd((900, num_classes)), "b": rnd((num_classes,), 0.01)},
    }


def prepare_plan(params, num_classes):
    """All weight collapsing / packing / dtype casts, hoisted out of the jitted
    forward (runs once at parameter-load time)."""
    f = FILTERS
    nc, ncp = num_classes, 128                     # lane-dense padded logit channels

    # fusion (400->900) feeds seg_head (900->nc) with NO nonlinearity between:
    # collapse algebraically, then split rows by concat source [f0 | f1 | f2].
    wh = params["fusion"]["w"] @ params["seg"]["w"]                      # (400, nc)
    bh = params["fusion"]["b"] @ params["seg"]["w"] + params["seg"]["b"]
    c0, c1 = f[0] * 4, f[1] * 2
    wh0, wh1, wh2 = wh[:c0], wh[c0:c0 + c1], wh[c0 + c1:]

    p1 = params["fpn1"]
    # fpn1 ConvT#1 as a (Cin, 4*Cout) matmul, cols ordered (dy, dx, co)
    wt1 = jnp.transpose(p1["w1"], (0, 2, 3, 1)).reshape(f[0], 4 * f[0] * 2)
    bt1 = jnp.tile(p1["b1"], 4)

    # fpn1 ConvT#2 collapsed with wh0 -> (128, (dy2, dx2, c_pad))
    wc0 = jnp.einsum("ioyx,oc->iyxc", p1["w2"], wh0)
    wc0 = jnp.pad(wc0, ((0, 0), (0, 0), (0, 0), (0, ncp - nc))).reshape(f[0] * 2, 4 * ncp)

    # fpn2 ConvT collapsed with wh1; f2 head (identity + x4 nearest) broadcast
    # over (dy, dx); both share the same input rows -> one stacked weight.
    wc1 = jnp.einsum("ioyx,oc->iyxc", params["fpn2"]["w"], wh1)
    wc1 = jnp.pad(wc1, ((0, 0), (0, 0), (0, 0), (0, ncp - nc))).reshape(f[1], 4 * ncp)
    wh2p = jnp.pad(wh2, ((0, 0), (0, ncp - nc)))
    wc2 = jnp.broadcast_to(wh2p[:, None, :], (f[2], 4, ncp)).reshape(f[2], 4 * ncp)
    w12 = jnp.concatenate([wc1, wc2], axis=0)                            # (96, 4*ncp)

    # every remaining linear-path bias folded into one per-class constant
    b_total = p1["b2"] @ wh0 + params["fpn2"]["b"] @ wh1 + bh            # (nc,)
    b_head = jnp.tile(jnp.pad(b_total, (0, ncp - nc)), 4)                # (4*ncp,)

    bf = jnp.bfloat16
    e = params["enc"]
    return {
        "enc": {
            "w1": e[0]["w"].astype(bf), "b1": e[0]["b"].reshape(1, -1),
            "w2": e[1]["w"].astype(bf), "b2": e[1]["b"].reshape(1, -1),
            "w3": e[2]["w"].astype(bf), "b3": e[2]["b"].reshape(1, -1),
        },
        "wt1": wt1.astype(bf), "bt1": bt1,
        "bn_g": p1["bn_g"], "bn_b": p1["bn_b"],
        "wc0": wc0.astype(bf), "b_head": b_head,
        "w12": w12.astype(bf), "zeros_head": jnp.zeros((4 * ncp,), jnp.float32),
    }


if __name__ == "__main__":
    num_classes = 5
    key = jax.random.PRNGKey(0)
    pkey, xkey = jax.random.split(key)
    params = init_params(pkey, num_classes)
    plan = prepare_plan(params, num_classes)       # hoisted out of the jitted path

    # datacube: NCHW (B=2, C=4, H=16, W=16)
    cube = jax.random.normal(xkey, (2, 4, 16, 16), dtype=jnp.float32)

    fwd = jax.jit(cdbn_segmentor_forward, static_argnums=2)
    logits = jax.block_until_ready(fwd(cube, plan, num_classes))

    assert logits.shape == (2, num_classes, 32, 32), logits.shape
    assert bool(jnp.all(jnp.isfinite(logits)))
    print("KERNEL_OK")
</pallas_src>

<mosaic_0001>
module attributes {stable_mosaic.version = 11 : i64} {
  func.func @_encoder_kernel(%arg0: i32, %arg1: memref<512x4xbf16, #tpu.memory_space<vmem>>, %arg2: memref<4x64xbf16, #tpu.memory_space<vmem>>, %arg3: memref<1x64xf32, #tpu.memory_space<vmem>>, %arg4: memref<64x48xbf16, #tpu.memory_space<vmem>>, %arg5: memref<1x48xf32, #tpu.memory_space<vmem>>, %arg6: memref<48x48xbf16, #tpu.memory_space<vmem>>, %arg7: memref<1x48xf32, #tpu.memory_space<vmem>>, %arg8: memref<128x64xbf16, #tpu.memory_space<vmem>>, %arg9: memref<32x48xf32, #tpu.memory_space<vmem>>, %arg10: memref<8x48xf32, #tpu.memory_space<vmem>>) attributes {dimension_semantics = [#tpu.dimension_semantics<arbitrary>], iteration_bounds = array<i64: 1>, scalar_prefetch = 0 : i64, scratch_operands = 0 : i64, tpu.core_type = #tpu.core_type<tc>, window_params = [{pipeline_mode = #tpu.pipeline_mode<synchronous>, transform_indices = @transform_0, window_bounds = array<i64: 512, 4>}, {pipeline_mode = #tpu.pipeline_mode<synchronous>, transform_indices = @transform_1, window_bounds = array<i64: 4, 64>}, {pipeline_mode = #tpu.pipeline_mode<synchronous>, transform_indices = @transform_2, window_bounds = array<i64: 1, 64>}, {pipeline_mode = #tpu.pipeline_mode<synchronous>, transform_indices = @transform_3, window_bounds = array<i64: 64, 48>}, {pipeline_mode = #tpu.pipeline_mode<synchronous>, transform_indices = @transform_4, window_bounds = array<i64: 1, 48>}, {pipeline_mode = #tpu.pipeline_mode<synchronous>, transform_indices = @transform_5, window_bounds = array<i64: 48, 48>}, {pipeline_mode = #tpu.pipeline_mode<synchronous>, transform_indices = @transform_6, window_bounds = array<i64: 1, 48>}, {pipeline_mode = #tpu.pipeline_mode<synchronous>, transform_indices = @transform_7, window_bounds = array<i64: 128, 64>}, {pipeline_mode = #tpu.pipeline_mode<synchronous>, transform_indices = @transform_8, window_bounds = array<i64: 32, 48>}, {pipeline_mode = #tpu.pipeline_mode<synchronous>, transform_indices = @transform_9, window_bounds = array<i64: 8, 48>}]} {
    %c0 = arith.constant 0 : index
    %c0_0 = arith.constant 0 : index
    %0 = vector.load %arg1[%c0, %c0_0] : memref<512x4xbf16, #tpu.memory_space<vmem>>, vector<512x4xbf16>
    %c0_1 = arith.constant 0 : index
    %c0_2 = arith.constant 0 : index
    %1 = vector.load %arg2[%c0_1, %c0_2] : memref<4x64xbf16, #tpu.memory_space<vmem>>, vector<4x64xbf16>
    %cst = arith.constant dense<0.000000e+00> : vector<512x64xf32>
    %2 = tpu.matmul %0, %1, %cst {dimension_numbers = #tpu.dot_dimension_numbers<[1], [0], [0], [1], [0, 0, 1, 1], [], []>} : vector<512x4xbf16>, vector<4x64xbf16>, vector<512x64xf32> -> vector<512x64xf32>
    %3 = vector.extract_strided_slice %2 {offsets = [0, 0], sizes = [128, 64], strides = [1, 1]} : vector<512x64xf32> to vector<128x64xf32>
    %4 = vector.extract_strided_slice %2 {offsets = [128, 0], sizes = [128, 64], strides = [1, 1]} : vector<512x64xf32> to vector<128x64xf32>
    %5 = arith.maximumf %3, %4 : vector<128x64xf32>
    %6 = vector.extract_strided_slice %2 {offsets = [256, 0], sizes = [128, 64], strides = [1, 1]} : vector<512x64xf32> to vector<128x64xf32>
    %7 = vector.extract_strided_slice %2 {offsets = [384, 0], sizes = [128, 64], strides = [1, 1]} : vector<512x64xf32> to vector<128x64xf32>
    %8 = arith.maximumf %6, %7 : vector<128x64xf32>
    %9 = arith.maximumf %5, %8 : vector<128x64xf32>
    %c0_3 = arith.constant 0 : index
    %c0_4 = arith.constant 0 : index
    %10 = vector.load %arg3[%c0_3, %c0_4] : memref<1x64xf32, #tpu.memory_space<vmem>>, vector<1x64xf32>
    %11 = vector.broadcast %10 : vector<1x64xf32> to vector<128x64xf32>
    %12 = arith.addf %9, %11 : vector<128x64xf32>
    %cst_5 = arith.constant 0.000000e+00 : f32
    %13 = vector.broadcast %cst_5 : f32 to vector<128x64xf32>
    %14 = arith.subf %13, %12 : vector<128x64xf32>
    %15 = math.exp %14 : vector<128x64xf32>
    %cst_6 = arith.constant 1.000000e+00 : f32
    %16 = vector.broadcast %cst_6 : f32 to vector<128x64xf32>
    %17 = arith.addf %16, %15 : vector<128x64xf32>
    %cst_7 = arith.constant 1.000000e+00 : f32
    %18 = vector.broadcast %cst_7 : f32 to vector<128x64xf32>
    %19 = arith.divf %18, %17 : vector<128x64xf32>
    %20 = arith.truncf %19 : vector<128x64xf32> to vector<128x64xbf16>
    %c0_8 = arith.constant 0 : index
    %c0_9 = arith.constant 0 : index
    %21 = vector.load %arg8[%c0_8, %c0_9] : memref<128x64xbf16, #tpu.memory_space<vmem>>, vector<128x64xbf16>
    tpu.vector_store %arg8[%c0_8, %c0_9], %20 {strides = array<i32>} : memref<128x64xbf16, #tpu.memory_space<vmem>>, vector<128x64xbf16>,
    %22 = arith.truncf %19 : vector<128x64xf32> to vector<128x64xbf16>
    %c0_10 = arith.constant 0 : index
    %c0_11 = arith.constant 0 : index
    %23 = vector.load %arg4[%c0_10, %c0_11] : memref<64x48xbf16, #tpu.memory_space<vmem>>, vector<64x48xbf16>
    %cst_12 = arith.constant dense<0.000000e+00> : vector<128x48xf32>
    %24 = tpu.matmul %22, %23, %cst_12 {dimension_numbers = #tpu.dot_dimension_numbers<[1], [0], [0], [1], [0, 0, 1, 1], [], []>} : vector<128x64xbf16>, vector<64x48xbf16>, vector<128x48xf32> -> vector<128x48xf32>
    %25 = vector.extract_strided_slice %24 {offsets = [0, 0], sizes = [32, 48], strides = [1, 1]} : vector<128x48xf32> to vector<32x48xf32>
    %26 = vector.extract_strided_slice %24 {offsets = [32, 0], sizes = [32, 48], strides = [1, 1]} : vector<128x48xf32> to vector<32x48xf32>
    %27 = arith.maximumf %25, %26 : vector<32x48xf32>
    %28 = vector.extract_strided_slice %24 {offsets = [64, 0], sizes = [32, 48], strides = [1, 1]} : vector<128x48xf32> to vector<32x48xf32>
    %29 = vector.extract_strided_slice %24 {offsets = [96, 0], sizes = [32, 48], strides = [1, 1]} : vector<128x48xf32> to vector<32x48xf32>
    %30 = arith.maximumf %28, %29 : vector<32x48xf32>
    %31 = arith.maximumf %27, %30 : vector<32x48xf32>
    %c0_13 = arith.constant 0 : index
    %c0_14 = arith.constant 0 : index
    %32 = vector.load %arg5[%c0_13, %c0_14] : memref<1x48xf32, #tpu.memory_space<vmem>>, vector<1x48xf32>
    %33 = vector.broadcast %32 : vector<1x48xf32> to vector<32x48xf32>
    %34 = arith.addf %31, %33 : vector<32x48xf32>
    %cst_15 = arith.constant 0.000000e+00 : f32
    %35 = vector.broadcast %cst_15 : f32 to vector<32x48xf32>
    %36 = arith.subf %35, %34 : vector<32x48xf32>
    %37 = math.exp %36 : vector<32x48xf32>
    %cst_16 = arith.constant 1.000000e+00 : f32
    %38 = vector.broadcast %cst_16 : f32 to vector<32x48xf32>
    %39 = arith.addf %38, %37 : vector<32x48xf32>
    %cst_17 = arith.constant 1.000000e+00 : f32
    %40 = vector.broadcast %cst_17 : f32 to vector<32x48xf32>
    %41 = arith.divf %40, %39 : vector<32x48xf32>
    %c0_18 = arith.constant 0 : index
    %c0_19 = arith.constant 0 : index
    %42 = vector.load %arg9[%c0_18, %c0_19] : memref<32x48xf32, #tpu.memory_space<vmem>>, vector<32x48xf32>
    tpu.vector_store %arg9[%c0_18, %c0_19], %41 {strides = array<i32>} : memref<32x48xf32, #tpu.memory_space<vmem>>, vector<32x48xf32>,
    %43 = arith.truncf %41 : vector<32x48xf32> to vector<32x48xbf16>
    %c0_20 = arith.constant 0 : index
    %c0_21 = arith.constant 0 : index
    %44 = vector.load %arg6[%c0_20, %c0_21] : memref<48x48xbf16, #tpu.memory_space<vmem>>, vector<48x48xbf16>
    %cst_22 = arith.constant dense<0.000000e+00> : vector<32x48xf32>
    %45 = tpu.matmul %43, %44, %cst_22 {dimension_numbers = #tpu.dot_dimension_numbers<[1], [0], [0], [1], [0, 0, 1, 1], [], []>} : vector<32x48xbf16>, vector<48x48xbf16>, vector<32x48xf32> -> vector<32x48xf32>
    %46 = vector.extract_strided_slice %45 {offsets = [0, 0], sizes = [8, 48], strides = [1, 1]} : vector<32x48xf32> to vector<8x48xf32>
    %47 = vector.extract_strided_slice %45 {offsets = [8, 0], sizes = [8, 48], strides = [1, 1]} : vector<32x48xf32> to vector<8x48xf32>
    %48 = arith.maximumf %46, %47 : vector<8x48xf32>
    %49 = vector.extract_strided_slice %45 {offsets = [16, 0], sizes = [8, 48], strides = [1, 1]} : vector<32x48xf32> to vector<8x48xf32>
    %50 = vector.extract_strided_slice %45 {offsets = [24, 0], sizes = [8, 48], strides = [1, 1]} : vector<32x48xf32> to vector<8x48xf32>
    %51 = arith.maximumf %49, %50 : vector<8x48xf32>
    %52 = arith.maximumf %48, %51 : vector<8x48xf32>
    %c0_23 = arith.constant 0 : index
    %c0_24 = arith.constant 0 : index
    %53 = vector.load %arg7[%c0_23, %c0_24] : memref<1x48xf32, #tpu.memory_space<vmem>>, vector<1x48xf32>
    %54 = vector.broadcast %53 : vector<1x48xf32> to vector<8x48xf32>
    %55 = arith.addf %52, %54 : vector<8x48xf32>
    %cst_25 = arith.constant 0.000000e+00 : f32
    %56 = vector.broadcast %cst_25 : f32 to vector<8x48xf32>
    %57 = arith.subf %56, %55 : vector<8x48xf32>
    %58 = math.exp %57 : vector<8x48xf32>
    %cst_26 = arith.constant 1.000000e+00 : f32
    %59 = vector.broadcast %cst_26 : f32 to vector<8x48xf32>
    %60 = arith.addf %59, %58 : vector<8x48xf32>
    %cst_27 = arith.constant 1.000000e+00 : f32
    %61 = vector.broadcast %cst_27 : f32 to vector<8x48xf32>
    %62 = arith.divf %61, %60 : vector<8x48xf32>
    %c0_28 = arith.constant 0 : index
    %c0_29 = arith.constant 0 : index
    %63 = vector.load %arg10[%c0_28, %c0_29] : memref<8x48xf32, #tpu.memory_space<vmem>>, vector<8x48xf32>
    tpu.vector_store %arg10[%c0_28, %c0_29], %62 {strides = array<i32>} : memref<8x48xf32, #tpu.memory_space<vmem>>, vector<8x48xf32>,
    return
  }
  func.func @transform_0(%arg0: i32) -> (i32, i32) {
    %c0_i32 = arith.constant 0 : i32
    %c0_i32_0 = arith.constant 0 : i32
    %c0_i32_1 = arith.constant 0 : i32
    return %c0_i32, %c0_i32_0 : i32, i32
  }
  func.func @transform_1(%arg0: i32) -> (i32, i32) {
    %c0_i32 = arith.constant 0 : i32
    %c0_i32_0 = arith.constant 0 : i32
    %c0_i32_1 = arith.constant 0 : i32
    return %c0_i32, %c0_i32_0 : i32, i32
  }
  func.func @transform_2(%arg0: i32) -> (i32, i32) {
    %c0_i32 = arith.constant 0 : i32
    %c0_i32_0 = arith.constant 0 : i32
    %c0_i32_1 = arith.constant 0 : i32
    return %c0_i32, %c0_i32_0 : i32, i32
  }
  func.func @transform_3(%arg0: i32) -> (i32, i32) {
    %c0_i32 = arith.constant 0 : i32
    %c0_i32_0 = arith.constant 0 : i32
    %c0_i32_1 = arith.constant 0 : i32
    return %c0_i32, %c0_i32_0 : i32, i32
  }
  func.func @transform_4(%arg0: i32) -> (i32, i32) {
    %c0_i32 = arith.constant 0 : i32
    %c0_i32_0 = arith.constant 0 : i32
    %c0_i32_1 = arith.constant 0 : i32
    return %c0_i32, %c0_i32_0 : i32, i32
  }
  func.func @transform_5(%arg0: i32) -> (i32, i32) {
    %c0_i32 = arith.constant 0 : i32
    %c0_i32_0 = arith.constant 0 : i32
    %c0_i32_1 = arith.constant 0 : i32
    return %c0_i32, %c0_i32_0 : i32, i32
  }
  func.func @transform_6(%arg0: i32) -> (i32, i32) {
    %c0_i32 = arith.constant 0 : i32
    %c0_i32_0 = arith.constant 0 : i32
    %c0_i32_1 = arith.constant 0 : i32
    return %c0_i32, %c0_i32_0 : i32, i32
  }
  func.func @transform_7(%arg0: i32) -> (i32, i32) {
    %c0_i32 = arith.constant 0 : i32
    %c0_i32_0 = arith.constant 0 : i32
    %c0_i32_1 = arith.constant 0 : i32
    return %c0_i32, %c0_i32_0 : i32, i32
  }
  func.func @transform_8(%arg0: i32) -> (i32, i32) {
    %c0_i32 = arith.constant 0 : i32
    %c0_i32_0 = arith.constant 0 : i32
    %c0_i32_1 = arith.constant 0 : i32
    return %c0_i32, %c0_i32_0 : i32, i32
  }
  func.func @transform_9(%arg0: i32) -> (i32, i32) {
    %c0_i32 = arith.constant 0 : i32
    %c0_i32_0 = arith.constant 0 : i32
    %c0_i32_1 = arith.constant 0 : i32
    return %c0_i32, %c0_i32_0 : i32, i32
  }
}

module attributes {stable_mosaic.version = 11 : i64} {
  func.func @_matmul_bias_kernel(%arg0: i32, %arg1: memref<128x64xbf16, #tpu.memory_space<vmem>>, %arg2: memref<64x512xbf16, #tpu.memory_space<vmem>>, %arg3: memref<1x512xf32, #tpu.memory_space<vmem>>, %arg4: memref<128x512xbf16, #tpu.memory_space<vmem>>) attributes {dimension_semantics = [#tpu.dimension_semantics<parallel>], iteration_bounds = array<i64: 1>, scalar_prefetch = 0 : i64, scratch_operands = 0 : i64, tpu.core_type = #tpu.core_type<tc>, window_params = [{transform_indices = @transform_0, window_bounds = array<i64: 128, 64>}, {pipeline_mode = #tpu.pipeline_mode<synchronous>, transform_indices = @transform_1, window_bounds = array<i64: 64, 512>}, {pipeline_mode = #tpu.pipeline_mode<synchronous>, transform_indices = @transform_2, window_bounds = array<i64: 1, 512>}, {transform_indices = @transform_3, window_bounds = array<i64: 128, 512>}]} {
    %c0 = arith.constant 0 : index
    %c0_0 = arith.constant 0 : index
    %0 = vector.load %arg1[%c0, %c0_0] : memref<128x64xbf16, #tpu.memory_space<vmem>>, vector<128x64xbf16>
    %c0_1 = arith.constant 0 : index
    %c0_2 = arith.constant 0 : index
    %1 = vector.load %arg2[%c0_1, %c0_2] : memref<64x512xbf16, #tpu.memory_space<vmem>>, vector<64x512xbf16>
    %cst = arith.constant dense<0.000000e+00> : vector<128x512xf32>
    %2 = tpu.matmul %0, %1, %cst {dimension_numbers = #tpu.dot_dimension_numbers<[1], [0], [0], [1], [0, 0, 1, 1], [], []>} : vector<128x64xbf16>, vector<64x512xbf16>, vector<128x512xf32> -> vector<128x512xf32>
    %c0_3 = arith.constant 0 : index
    %c0_4 = arith.constant 0 : index
    %3 = vector.load %arg3[%c0_3, %c0_4] : memref<1x512xf32, #tpu.memory_space<vmem>>, vector<1x512xf32>
    %4 = vector.broadcast %3 : vector<1x512xf32> to vector<128x512xf32>
    %5 = arith.addf %2, %4 : vector<128x512xf32>
    %6 = arith.truncf %5 : vector<128x512xf32> to vector<128x512xbf16>
    %c0_5 = arith.constant 0 : index
    %c0_6 = arith.constant 0 : index
    %7 = vector.load %arg4[%c0_5, %c0_6] : memref<128x512xbf16, #tpu.memory_space<vmem>>, vector<128x512xbf16>
    tpu.vector_store %arg4[%c0_5, %c0_6], %6 {strides = array<i32>} : memref<128x512xbf16, #tpu.memory_space<vmem>>, vector<128x512xbf16>,
    return
  }
  func.func @transform_0(%arg0: i32) -> (i32, i32) {
    %c0_i32 = arith.constant 0 : i32
    %c0_i32_0 = arith.constant 0 : i32
    return %arg0, %c0_i32 : i32, i32
  }
  func.func @transform_1(%arg0: i32) -> (i32, i32) {
    %c0_i32 = arith.constant 0 : i32
    %c0_i32_0 = arith.constant 0 : i32
    %c0_i32_1 = arith.constant 0 : i32
    return %c0_i32, %c0_i32_0 : i32, i32
  }
  func.func @transform_2(%arg0: i32) -> (i32, i32) {
    %c0_i32 = arith.constant 0 : i32
    %c0_i32_0 = arith.constant 0 : i32
    %c0_i32_1 = arith.constant 0 : i32
    return %c0_i32, %c0_i32_0 : i32, i32
  }
  func.func @transform_3(%arg0: i32) -> (i32, i32) {
    %c0_i32 = arith.constant 0 : i32
    %c0_i32_0 = arith.constant 0 : i32
    return %arg0, %c0_i32 : i32, i32
  }
}

module attributes {stable_mosaic.version = 11 : i64} {
  func.func @_matmul_bias_kernel(%arg0: i32, %arg1: memref<128x96xbf16, #tpu.memory_space<vmem>>, %arg2: memref<96x512xbf16, #tpu.memory_space<vmem>>, %arg3: memref<1x512xf32, #tpu.memory_space<vmem>>, %arg4: memref<128x512xf32, #tpu.memory_space<vmem>>) attributes {dimension_semantics = [#tpu.dimension_semantics<parallel>], iteration_bounds = array<i64: 1>, scalar_prefetch = 0 : i64, scratch_operands = 0 : i64, tpu.core_type = #tpu.core_type<tc>, window_params = [{transform_indices = @transform_0, window_bounds = array<i64: 128, 96>}, {pipeline_mode = #tpu.pipeline_mode<synchronous>, transform_indices = @transform_1, window_bounds = array<i64: 96, 512>}, {pipeline_mode = #tpu.pipeline_mode<synchronous>, transform_indices = @transform_2, window_bounds = array<i64: 1, 512>}, {transform_indices = @transform_3, window_bounds = array<i64: 128, 512>}]} {
    %c0 = arith.constant 0 : index
    %c0_0 = arith.constant 0 : index
    %0 = vector.load %arg1[%c0, %c0_0] : memref<128x96xbf16, #tpu.memory_space<vmem>>, vector<128x96xbf16>
    %c0_1 = arith.constant 0 : index
    %c0_2 = arith.constant 0 : index
    %1 = vector.load %arg2[%c0_1, %c0_2] : memref<96x512xbf16, #tpu.memory_space<vmem>>, vector<96x512xbf16>
    %cst = arith.constant dense<0.000000e+00> : vector<128x512xf32>
    %2 = tpu.matmul %0, %1, %cst {dimension_numbers = #tpu.dot_dimension_numbers<[1], [0], [0], [1], [0, 0, 1, 1], [], []>} : vector<128x96xbf16>, vector<96x512xbf16>, vector<128x512xf32> -> vector<128x512xf32>
    %c0_3 = arith.constant 0 : index
    %c0_4 = arith.constant 0 : index
    %3 = vector.load %arg3[%c0_3, %c0_4] : memref<1x512xf32, #tpu.memory_space<vmem>>, vector<1x512xf32>
    %4 = vector.broadcast %3 : vector<1x512xf32> to vector<128x512xf32>
    %5 = arith.addf %2, %4 : vector<128x512xf32>
    %c0_5 = arith.constant 0 : index
    %c0_6 = arith.constant 0 : index
    %6 = vector.load %arg4[%c0_5, %c0_6] : memref<128x512xf32, #tpu.memory_space<vmem>>, vector<128x512xf32>
    tpu.vector_store %arg4[%c0_5, %c0_6], %5 {strides = array<i32>} : memref<128x512xf32, #tpu.memory_space<vmem>>, vector<128x512xf32>,
    return
  }
  func.func @transform_0(%arg0: i32) -> (i32, i32) {
    %c0_i32 = arith.constant 0 : i32
    %c0_i32_0 = arith.constant 0 : i32
    return %arg0, %c0_i32 : i32, i32
  }
  func.func @transform_1(%arg0: i32) -> (i32, i32) {
    %c0_i32 = arith.constant 0 : i32
    %c0_i32_0 = arith.constant 0 : i32
    %c0_i32_1 = arith.constant 0 : i32
    return %c0_i32, %c0_i32_0 : i32, i32
  }
  func.func @transform_2(%arg0: i32) -> (i32, i32) {
    %c0_i32 = arith.constant 0 : i32
    %c0_i32_0 = arith.constant 0 : i32
    %c0_i32_1 = arith.constant 0 : i32
    return %c0_i32, %c0_i32_0 : i32, i32
  }
  func.func @transform_3(%arg0: i32) -> (i32, i32) {
    %c0_i32 = arith.constant 0 : i32
    %c0_i32_0 = arith.constant 0 : i32
    return %arg0, %c0_i32 : i32, i32
  }
}

module attributes {stable_mosaic.version = 11 : i64} {
  func.func @_matmul_bias_kernel(%arg0: i32, %arg1: memref<256x128xbf16, #tpu.memory_space<vmem>>, %arg2: memref<128x512xbf16, #tpu.memory_space<vmem>>, %arg3: memref<1x512xf32, #tpu.memory_space<vmem>>, %arg4: memref<256x512xf32, #tpu.memory_space<vmem>>) attributes {dimension_semantics = [#tpu.dimension_semantics<parallel>], iteration_bounds = array<i64: 2>, scalar_prefetch = 0 : i64, scratch_operands = 0 : i64, tpu.core_type = #tpu.core_type<tc>, window_params = [{transform_indices = @transform_0, window_bounds = array<i64: 256, 128>}, {pipeline_mode = #tpu.pipeline_mode<synchronous>, transform_indices = @transform_1, window_bounds = array<i64: 128, 512>}, {pipeline_mode = #tpu.pipeline_mode<synchronous>, transform_indices = @transform_2, window_bounds = array<i64: 1, 512>}, {transform_indices = @transform_3, window_bounds = array<i64: 256, 512>}]} {
    %c0 = arith.constant 0 : index
    %c0_0 = arith.constant 0 : index
    %0 = vector.load %arg1[%c0, %c0_0] : memref<256x128xbf16, #tpu.memory_space<vmem>>, vector<256x128xbf16>
    %c0_1 = arith.constant 0 : index
    %c0_2 = arith.constant 0 : index
    %1 = vector.load %arg2[%c0_1, %c0_2] : memref<128x512xbf16, #tpu.memory_space<vmem>>, vector<128x512xbf16>
    %cst = arith.constant dense<0.000000e+00> : vector<256x512xf32>
    %2 = tpu.matmul %0, %1, %cst {dimension_numbers = #tpu.dot_dimension_numbers<[1], [0], [0], [1], [0, 0, 1, 1], [], []>} : vector<256x128xbf16>, vector<128x512xbf16>, vector<256x512xf32> -> vector<256x512xf32>
    %c0_3 = arith.constant 0 : index
    %c0_4 = arith.constant 0 : index
    %3 = vector.load %arg3[%c0_3, %c0_4] : memref<1x512xf32, #tpu.memory_space<vmem>>, vector<1x512xf32>
    %4 = vector.broadcast %3 : vector<1x512xf32> to vector<256x512xf32>
    %5 = arith.addf %2, %4 : vector<256x512xf32>
    %c0_5 = arith.constant 0 : index
    %c0_6 = arith.constant 0 : index
    %6 = vector.load %arg4[%c0_5, %c0_6] : memref<256x512xf32, #tpu.memory_space<vmem>>, vector<256x512xf32>
    tpu.vector_store %arg4[%c0_5, %c0_6], %5 {strides = array<i32>} : memref<256x512xf32, #tpu.memory_space<vmem>>, vector<256x512xf32>,
    return
  }
  func.func @transform_0(%arg0: i32) -> (i32, i32) {
    %c0_i32 = arith.constant 0 : i32
    %c0_i32_0 = arith.constant 0 : i32
    return %arg0, %c0_i32 : i32, i32
  }
  func.func @transform_1(%arg0: i32) -> (i32, i32) {
    %c0_i32 = arith.constant 0 : i32
    %c0_i32_0 = arith.constant 0 : i32
    %c0_i32_1 = arith.constant 0 : i32
    return %c0_i32, %c0_i32_0 : i32, i32
  }
  func.func @transform_2(%arg0: i32) -> (i32, i32) {
    %c0_i32 = arith.constant 0 : i32
    %c0_i32_0 = arith.constant 0 : i32
    %c0_i32_1 = arith.constant 0 : i32
    return %c0_i32, %c0_i32_0 : i32, i32
  }
  func.func @transform_3(%arg0: i32) -> (i32, i32) {
    %c0_i32 = arith.constant 0 : i32
    %c0_i32_0 = arith.constant 0 : i32
    return %arg0, %c0_i32 : i32, i32
  }
}

</mosaic_0001>

<llo_original>
// kernel: cdbn_segmentor_forward.4
$region0: #{cdbn_segmentor_forward.4}
  #allocation0 [shape = 'u32[]', space=smem, size = 0x4, offset = 0x4, fixed_abs, tag = 'smem constant byte address 0x4 - core index']
  #allocation1 [shape = 'u32[72,128]{1,0:T(1,128)}', space=vmem, size = 0x9000, scoped, tag = 'internal scratch']
  %s0 = inlined_call_operand.vmem [shape: bf16[512,4], index: 0, kind: input, shape index: {}]
  %s1 = inlined_call_operand.vmem [shape: bf16[4,64], index: 1, kind: input, shape index: {}]
  %s2 = inlined_call_operand.vmem [shape: f32[1,64], index: 2, kind: input, shape index: {}]
  %s3 = inlined_call_operand.vmem [shape: bf16[64,48], index: 3, kind: input, shape index: {}]
  %s4 = inlined_call_operand.vmem [shape: f32[1,48], index: 4, kind: input, shape index: {}]
  %s5 = inlined_call_operand.vmem [shape: bf16[48,48], index: 5, kind: input, shape index: {}]
  %s6 = inlined_call_operand.vmem [shape: f32[1,48], index: 6, kind: input, shape index: {}]
  %s7 = inlined_call_operand.vmem [shape: bf16[128,64], index: 7, kind: output, shape index: {0}]
  %s8 = inlined_call_operand.vmem [shape: f32[32,48], index: 8, kind: output, shape index: {1}]
  %s9 = inlined_call_operand.vmem [shape: f32[8,48], index: 9, kind: output, shape index: {2}]
  %10 = xla_tuple %s7, %s8, %s9
  %s11 = sld [smem:[#allocation0]]
  $region54: #{cdbn_segmentor_forward.4} parent=0
    _
  %s13 = ssub.s32 1, %s11
  %s14 = scalar_select 0, %s13, %s11
  // Predicated region
  $region2: #{cdbn_segmentor_forward.4} parent=0 // pred_check
    _
  $region3: #{cdbn_segmentor_forward.4} parent=0 // pred_check_branch
    %16 = sbr.rel (0) target = $region5
  $region4: #{cdbn_segmentor_forward.4} parent=0 // pred_region
    _
  $region5: #{cdbn_segmentor_forward.4} parent=0 // pred_fallthru
    _
  // Predicated region
  $region6: #{cdbn_segmentor_forward.4} parent=0 // pred_check
    _
  $region7: #{cdbn_segmentor_forward.4} parent=0 // pred_check_branch
    %18 = sbr.rel (0) target = $region9
  $region8: #{cdbn_segmentor_forward.4} parent=0 // pred_region
    _
  $region9: #{cdbn_segmentor_forward.4} parent=0 // pred_fallthru
    _
  // Predicated region
  $region10: #{cdbn_segmentor_forward.4} parent=0 // pred_check
    _
  $region11: #{cdbn_segmentor_forward.4} parent=0 // pred_check_branch
    %20 = sbr.rel (0) target = $region13
  $region12: #{cdbn_segmentor_forward.4} parent=0 // pred_region
    _
  $region13: #{cdbn_segmentor_forward.4} parent=0 // pred_fallthru
    _
  // Predicated region
  $region14: #{cdbn_segmentor_forward.4} parent=0 // pred_check
    _
  $region15: #{cdbn_segmentor_forward.4} parent=0 // pred_check_branch
    %22 = sbr.rel (0) target = $region17
  $region16: #{cdbn_segmentor_forward.4} parent=0 // pred_region
    _
  $region17: #{cdbn_segmentor_forward.4} parent=0 // pred_fallthru
    _
  // Predicated region
  $region18: #{cdbn_segmentor_forward.4} parent=0 // pred_check
    _
  $region19: #{cdbn_segmentor_forward.4} parent=0 // pred_check_branch
    %24 = sbr.rel (0) target = $region21
  $region20: #{cdbn_segmentor_forward.4} parent=0 // pred_region
    _
  $region21: #{cdbn_segmentor_forward.4} parent=0 // pred_fallthru
    _
  // Predicated region
  $region22: #{cdbn_segmentor_forward.4} parent=0 // pred_check
    _
  $region23: #{cdbn_segmentor_forward.4} parent=0 // pred_check_branch
    %26 = sbr.rel (0) target = $region25
  $region24: #{cdbn_segmentor_forward.4} parent=0 // pred_region
    _
  $region25: #{cdbn_segmentor_forward.4} parent=0 // pred_fallthru
    _
  // Predicated region
  $region26: #{cdbn_segmentor_forward.4} parent=0 // pred_check
    _
  $region27: #{cdbn_segmentor_forward.4} parent=0 // pred_check_branch
    %28 = sbr.rel (0) target = $region29
  $region28: #{cdbn_segmentor_forward.4} parent=0 // pred_region
    _
  $region29: #{cdbn_segmentor_forward.4} parent=0 // pred_fallthru
    _
  %v30 = vld [vmem:[%s0] sm:$0xf]
  %v31 = vld [vmem:[%s0 + $0x4] sm:$0xf]
  %v32 = vld [vmem:[%s0 + $0x8] sm:$0xf]
  %v33 = vld [vmem:[%s0 + $0xc] sm:$0xf]
  %v34 = vld [vmem:[%s0 + $0x10] sm:$0xf]
  %v35 = vld [vmem:[%s0 + $0x14] sm:$0xf]
  %v36 = vld [vmem:[%s0 + $0x18] sm:$0xf]
  %v37 = vld [vmem:[%s0 + $0x1c] sm:$0xf]
  %v38 = vld [vmem:[%s0 + $0x20] sm:$0xf]
  %v39 = vld [vmem:[%s0 + $0x24] sm:$0xf]
  %v40 = vld [vmem:[%s0 + $0x28] sm:$0xf]
  %v41 = vld [vmem:[%s0 + $0x2c] sm:$0xf]
  %v42 = vld [vmem:[%s0 + $0x30] sm:$0xf]
  %v43 = vld [vmem:[%s0 + $0x34] sm:$0xf]
  %v44 = vld [vmem:[%s0 + $0x38] sm:$0xf]
  %v45 = vld [vmem:[%s0 + $0x3c] sm:$0xf]
  %v46 = vld [vmem:[%s0 + $0x40] sm:$0xf]
  %v47 = vld [vmem:[%s0 + $0x44] sm:$0xf]
  %v48 = vld [vmem:[%s0 + $0x48] sm:$0xf]
  %v49 = vld [vmem:[%s0 + $0x4c] sm:$0xf]
  %v50 = vld [vmem:[%s0 + $0x50] sm:$0xf]
  %v51 = vld [vmem:[%s0 + $0x54] sm:$0xf]
  %v52 = vld [vmem:[%s0 + $0x58] sm:$0xf]
  %v53 = vld [vmem:[%s0 + $0x5c] sm:$0xf]
  %v54 = vld [vmem:[%s0 + $0x60] sm:$0xf]
  %v55 = vld [vmem:[%s0 + $0x64] sm:$0xf]
  %v56 = vld [vmem:[%s0 + $0x68] sm:$0xf]
  %v57 = vld [vmem:[%s0 + $0x6c] sm:$0xf]
  %v58 = vld [vmem:[%s0 + $0x70] sm:$0xf]
  %v59 = vld [vmem:[%s0 + $0x74] sm:$0xf]
  %v60 = vld [vmem:[%s0 + $0x78] sm:$0xf]
  %v61 = vld [vmem:[%s0 + $0x7c] sm:$0xf]
  %v62 = vld [vmem:[%s0 + $0x80] sm:$0xf]
  %v63 = vld [vmem:[%s0 + $0x84] sm:$0xf]
  %v64 = vld [vmem:[%s0 + $0x88] sm:$0xf]
  %v65 = vld [vmem:[%s0 + $0x8c] sm:$0xf]
  %v66 = vld [vmem:[%s0 + $0x90] sm:$0xf]
  %v67 = vld [vmem:[%s0 + $0x94] sm:$0xf]
  %v68 = vld [vmem:[%s0 + $0x98] sm:$0xf]
  %v69 = vld [vmem:[%s0 + $0x9c] sm:$0xf]
  %v70 = vld [vmem:[%s0 + $0xa0] sm:$0xf]
  %v71 = vld [vmem:[%s0 + $0xa4] sm:$0xf]
  %v72 = vld [vmem:[%s0 + $0xa8] sm:$0xf]
  %v73 = vld [vmem:[%s0 + $0xac] sm:$0xf]
  %v74 = vld [vmem:[%s0 + $0xb0] sm:$0xf]
  %v75 = vld [vmem:[%s0 + $0xb4] sm:$0xf]
  %v76 = vld [vmem:[%s0 + $0xb8] sm:$0xf]
  %v77 = vld [vmem:[%s0 + $0xbc] sm:$0xf]
  %v78 = vld [vmem:[%s0 + $0xc0] sm:$0xf]
  %v79 = vld [vmem:[%s0 + $0xc4] sm:$0xf]
  %v80 = vld [vmem:[%s0 + $0xc8] sm:$0xf]
  %v81 = vld [vmem:[%s0 + $0xcc] sm:$0xf]
  %v82 = vld [vmem:[%s0 + $0xd0] sm:$0xf]
  %v83 = vld [vmem:[%s0 + $0xd4] sm:$0xf]
  %v84 = vld [vmem:[%s0 + $0xd8] sm:$0xf]
  %v85 = vld [vmem:[%s0 + $0xdc] sm:$0xf]
  %v86 = vld [vmem:[%s0 + $0xe0] sm:$0xf]
  %v87 = vld [vmem:[%s0 + $0xe4] sm:$0xf]
  %v88 = vld [vmem:[%s0 + $0xe8] sm:$0xf]
  %v89 = vld [vmem:[%s0 + $0xec] sm:$0xf]
  %v90 = vld [vmem:[%s0 + $0xf0] sm:$0xf]
  %v91 = vld [vmem:[%s0 + $0xf4] sm:$0xf]
  %v92 = vld [vmem:[%s0 + $0xf8] sm:$0xf]
  %v93 = vld [vmem:[%s0 + $0xfc] sm:$0xf]
  %v94 = vld [vmem:[%s1] sm:$0x3]
  %v159 = vunpack.c.l.b16 %v30
  %v160 = vunpack.c.l.b16 %v31
  %v161 = vunpack.c.l.b16 %v32
  %v162 = vunpack.c.l.b16 %v33
  %v163 = vunpack.c.l.b16 %v34
  %v164 = vunpack.c.l.b16 %v35
  %v165 = vunpack.c.l.b16 %v36
  %v166 = vunpack.c.l.b16 %v37
  %v167 = vunpack.c.l.b16 %v38
  %v168 = vunpack.c.l.b16 %v39
  %v169 = vunpack.c.l.b16 %v40
  %v170 = vunpack.c.l.b16 %v41
  %v171 = vunpack.c.l.b16 %v42
  %v172 = vunpack.c.l.b16 %v43
  %v173 = vunpack.c.l.b16 %v44
  %v174 = vunpack.c.l.b16 %v45
  %v175 = vunpack.c.l.b16 %v46
  %v176 = vunpack.c.l.b16 %v47
  %v177 = vunpack.c.l.b16 %v48
  %v178 = vunpack.c.l.b16 %v49
  %v179 = vunpack.c.l.b16 %v50
  %v180 = vunpack.c.l.b16 %v51
  %v181 = vunpack.c.l.b16 %v52
  %v182 = vunpack.c.l.b16 %v53
  %v183 = vunpack.c.l.b16 %v54
  %v184 = vunpack.c.l.b16 %v55
  %v185 = vunpack.c.l.b16 %v56
  %v186 = vunpack.c.l.b16 %v57
  %v187 = vunpack.c.l.b16 %v58
  %v188 = vunpack.c.l.b16 %v59
  %v189 = vunpack.c.l.b16 %v60
  %v190 = vunpack.c.l.b16 %v61
  %v191 = vunpack.c.l.b16 %v62
  %v192 = vunpack.c.l.b16 %v63
  %v193 = vunpack.c.l.b16 %v64
  %v194 = vunpack.c.l.b16 %v65
  %v195 = vunpack.c.l.b16 %v66
  %v196 = vunpack.c.l.b16 %v67
  %v197 = vunpack.c.l.b16 %v68
  %v198 = vunpack.c.l.b16 %v69
  %v199 = vunpack.c.l.b16 %v70
  %v200 = vunpack.c.l.b16 %v71
  %v201 = vunpack.c.l.b16 %v72
  %v202 = vunpack.c.l.b16 %v73
  %v203 = vunpack.c.l.b16 %v74
  %v204 = vunpack.c.l.b16 %v75
  %v205 = vunpack.c.l.b16 %v76
  %v206 = vunpack.c.l.b16 %v77
  %v207 = vunpack.c.l.b16 %v78
  %v208 = vunpack.c.l.b16 %v79
  %v209 = vunpack.c.l.b16 %v80
  %v210 = vunpack.c.l.b16 %v81
  %v211 = vunpack.c.l.b16 %v82
  %v212 = vunpack.c.l.b16 %v83
  %v213 = vunpack.c.l.b16 %v84
  %v214 = vunpack.c.l.b16 %v85
  %v215 = vunpack.c.l.b16 %v86
  %v216 = vunpack.c.l.b16 %v87
  %v217 = vunpack.c.l.b16 %v88
  %v218 = vunpack.c.l.b16 %v89
  %v219 = vunpack.c.l.b16 %v90
  %v220 = vunpack.c.l.b16 %v91
  %v221 = vunpack.c.l.b16 %v92
  %v222 = vunpack.c.l.b16 %v93
  %v223 = vpack.c.b16 %v160, %v159
  %v224 = vpack.c.b16 %v162, %v161
  %v225 = vpack.c.b16 %v164, %v163
  %v226 = vpack.c.b16 %v166, %v165
  %v227 = vpack.c.b16 %v168, %v167
  %v228 = vpack.c.b16 %v170, %v169
  %v229 = vpack.c.b16 %v172, %v171
  %v230 = vpack.c.b16 %v174, %v173
  %v231 = vpack.c.b16 %v176, %v175
  %v232 = vpack.c.b16 %v178, %v177
  %v233 = vpack.c.b16 %v180, %v179
  %v234 = vpack.c.b16 %v182, %v181
  %v235 = vpack.c.b16 %v184, %v183
  %v236 = vpack.c.b16 %v186, %v185
  %v237 = vpack.c.b16 %v188, %v187
  %v238 = vpack.c.b16 %v190, %v189
  %v239 = vpack.c.b16 %v192, %v191
  %v240 = vpack.c.b16 %v194, %v193
  %v241 = vpack.c.b16 %v196, %v195
  %v242 = vpack.c.b16 %v198, %v197
  %v243 = vpack.c.b16 %v200, %v199
  %v244 = vpack.c.b16 %v202, %v201
  %v245 = vpack.c.b16 %v204, %v203
  %v246 = vpack.c.b16 %v206, %v205
  %v247 = vpack.c.b16 %v208, %v207
  %v248 = vpack.c.b16 %v210, %v209
  %v249 = vpack.c.b16 %v212, %v211
  %v250 = vpack.c.b16 %v214, %v213
  %v251 = vpack.c.b16 %v216, %v215
  %v252 = vpack.c.b16 %v218, %v217
  %v253 = vpack.c.b16 %v220, %v219
  %v254 = vpack.c.b16 %v222, %v221
  %vm255 = vcmask 31744
  %v257 = vsel %vm255, %v223, 0
  %v260 = vsel %vm255, %v224, 0
  %v263 = vsel %vm255, %v225, 0
  %v266 = vsel %vm255, %v226, 0
  %v269 = vsel %vm255, %v227, 0
  %v272 = vsel %vm255, %v228, 0
  %v275 = vsel %vm255, %v229, 0
  %v278 = vsel %vm255, %v230, 0
  %v281 = vsel %vm255, %v231, 0
  %v284 = vsel %vm255, %v232, 0
  %v287 = vsel %vm255, %v233, 0
  %v290 = vsel %vm255, %v234, 0
  %v293 = vsel %vm255, %v235, 0
  %v296 = vsel %vm255, %v236, 0
  %v299 = vsel %vm255, %v237, 0
  %v302 = vsel %vm255, %v238, 0
  %v305 = vsel %vm255, %v239, 0
  %v308 = vsel %vm255, %v240, 0
  %v311 = vsel %vm255, %v241, 0
  %v314 = vsel %vm255, %v242, 0
  %v317 = vsel %vm255, %v243, 0
  %v320 = vsel %vm255, %v244, 0
  %v323 = vsel %vm255, %v245, 0
  %v326 = vsel %vm255, %v246, 0
  %v329 = vsel %vm255, %v247, 0
  %v332 = vsel %vm255, %v248, 0
  %v335 = vsel %vm255, %v249, 0
  %v338 = vsel %vm255, %v250, 0
  %v341 = vsel %vm255, %v251, 0
  %v344 = vsel %vm255, %v252, 0
  %v347 = vsel %vm255, %v253, 0
  %v350 = vsel %vm255, %v254, 0
  %vm352 = vcmask 1041408
  %v354 = vsel %vm352, %v94, 0
  %356 = vmatpush.bf16.msra.mxu0 0
  %357 = vmatpush.bf16.msra.mxu0 0
  %358 = vmatpush.bf16.msra.mxu0 0
  %359 = vmatpush.bf16.msra.mxu0 0
  %360 = vmatpush.bf16.msra.mxu0 0
  %361 = vmatpush.bf16.msra.mxu0 0
  %362 = vmatpush.bf16.msra.mxu0 0
  %363 = vmatpush.bf16.msra.mxu0 %v354
  %364 = vmatmul.bf16.gmra.mxu0 %v257
  %v365 = vpop.f32.mrf.mxu0
  %v366 = vadd.f32 0.0, %v365
  %v367 = vpop.f32.mrf.mxu0
  %v368 = vadd.f32 0.0, %v367
  %369 = vmatmul.bf16.gmra.mxu0 %v260
  %v370 = vpop.f32.mrf.mxu0
  %v371 = vadd.f32 0.0, %v370
  %v372 = vpop.f32.mrf.mxu0
  %v373 = vadd.f32 0.0, %v372
  %374 = vmatmul.bf16.gmra.mxu0 %v263
  %v375 = vpop.f32.mrf.mxu0
  %v376 = vadd.f32 0.0, %v375
  %v377 = vpop.f32.mrf.mxu0
  %v378 = vadd.f32 0.0, %v377
  %379 = vmatmul.bf16.gmra.mxu0 %v266
  %v380 = vpop.f32.mrf.mxu0
  %v381 = vadd.f32 0.0, %v380
  %v382 = vpop.f32.mrf.mxu0
  %v383 = vadd.f32 0.0, %v382
  %384 = vmatmul.bf16.gmra.mxu0 %v269
  %v385 = vpop.f32.mrf.mxu0
  %v386 = vadd.f32 0.0, %v385
  %v387 = vpop.f32.mrf.mxu0
  %v388 = vadd.f32 0.0, %v387
  %389 = vmatmul.bf16.gmra.mxu0 %v272
  %v390 = vpop.f32.mrf.mxu0
  %v391 = vadd.f32 0.0, %v390
  %v392 = vpop.f32.mrf.mxu0
  %v393 = vadd.f32 0.0, %v392
  %394 = vmatmul.bf16.gmra.mxu0 %v275
  %v395 = vpop.f32.mrf.mxu0
  %v396 = vadd.f32 0.0, %v395
  %v397 = vpop.f32.mrf.mxu0
  %v398 = vadd.f32 0.0, %v397
  %399 = vmatmul.bf16.gmra.mxu0 %v278
  %v400 = vpop.f32.mrf.mxu0
  %v401 = vadd.f32 0.0, %v400
  %v402 = vpop.f32.mrf.mxu0
  %v403 = vadd.f32 0.0, %v402
  %404 = vmatmul.bf16.gmra.mxu0 %v281
  %v405 = vpop.f32.mrf.mxu0
  %v406 = vadd.f32 0.0, %v405
  %v407 = vpop.f32.mrf.mxu0
  %v408 = vadd.f32 0.0, %v407
  %409 = vmatmul.bf16.gmra.mxu0 %v284
  %v410 = vpop.f32.mrf.mxu0
  %v411 = vadd.f32 0.0, %v410
  %v412 = vpop.f32.mrf.mxu0
  %v413 = vadd.f32 0.0, %v412
  %414 = vmatmul.bf16.gmra.mxu0 %v287
  %v415 = vpop.f32.mrf.mxu0
  %v416 = vadd.f32 0.0, %v415
  %v417 = vpop.f32.mrf.mxu0
  %v418 = vadd.f32 0.0, %v417
  %419 = vmatmul.bf16.gmra.mxu0 %v290
  %v420 = vpop.f32.mrf.mxu0
  %v421 = vadd.f32 0.0, %v420
  %v422 = vpop.f32.mrf.mxu0
  %v423 = vadd.f32 0.0, %v422
  %424 = vmatmul.bf16.gmra.mxu0 %v293
  %v425 = vpop.f32.mrf.mxu0
  %v426 = vadd.f32 0.0, %v425
  %v427 = vpop.f32.mrf.mxu0
  %v428 = vadd.f32 0.0, %v427
  %429 = vmatmul.bf16.gmra.mxu0 %v296
  %v430 = vpop.f32.mrf.mxu0
  %v431 = vadd.f32 0.0, %v430
  %v432 = vpop.f32.mrf.mxu0
  %v433 = vadd.f32 0.0, %v432
  %434 = vmatmul.bf16.gmra.mxu0 %v299
  %v435 = vpop.f32.mrf.mxu0
  %v436 = vadd.f32 0.0, %v435
  %v437 = vpop.f32.mrf.mxu0
  %v438 = vadd.f32 0.0, %v437
  %439 = vmatmul.bf16.gmra.mxu0 %v302
  %v440 = vpop.f32.mrf.mxu0
  %v441 = vadd.f32 0.0, %v440
  %v442 = vpop.f32.mrf.mxu0
  %v443 = vadd.f32 0.0, %v442
  %444 = vmatmul.bf16.gmra.mxu0 %v305
  %v445 = vpop.f32.mrf.mxu0
  %v446 = vadd.f32 0.0, %v445
  %v447 = vpop.f32.mrf.mxu0
  %v448 = vadd.f32 0.0, %v447
  %449 = vmatmul.bf16.gmra.mxu0 %v308
  %v450 = vpop.f32.mrf.mxu0
  %v451 = vadd.f32 0.0, %v450
  %v452 = vpop.f32.mrf.mxu0
  %v453 = vadd.f32 0.0, %v452
  %454 = vmatmul.bf16.gmra.mxu0 %v311
  %v455 = vpop.f32.mrf.mxu0
  %v456 = vadd.f32 0.0, %v455
  %v457 = vpop.f32.mrf.mxu0
  %v458 = vadd.f32 0.0, %v457
  %459 = vmatmul.bf16.gmra.mxu0 %v314
  %v460 = vpop.f32.mrf.mxu0
  %v461 = vadd.f32 0.0, %v460
  %v462 = vpop.f32.mrf.mxu0
  %v463 = vadd.f32 0.0, %v462
  %464 = vmatmul.bf16.gmra.mxu0 %v317
  %v465 = vpop.f32.mrf.mxu0
  %v466 = vadd.f32 0.0, %v465
  %v467 = vpop.f32.mrf.mxu0
  %v468 = vadd.f32 0.0, %v467
  %469 = vmatmul.bf16.gmra.mxu0 %v320
  %v470 = vpop.f32.mrf.mxu0
  %v471 = vadd.f32 0.0, %v470
  %v472 = vpop.f32.mrf.mxu0
  %v473 = vadd.f32 0.0, %v472
  %474 = vmatmul.bf16.gmra.mxu0 %v323
  %v475 = vpop.f32.mrf.mxu0
  %v476 = vadd.f32 0.0, %v475
  %v477 = vpop.f32.mrf.mxu0
  %v478 = vadd.f32 0.0, %v477
  %479 = vmatmul.bf16.gmra.mxu0 %v326
  %v480 = vpop.f32.mrf.mxu0
  %v481 = vadd.f32 0.0, %v480
  %v482 = vpop.f32.mrf.mxu0
  %v483 = vadd.f32 0.0, %v482
  %484 = vmatmul.bf16.gmra.mxu0 %v329
  %v485 = vpop.f32.mrf.mxu0
  %v486 = vadd.f32 0.0, %v485
  %v487 = vpop.f32.mrf.mxu0
  %v488 = vadd.f32 0.0, %v487
  %489 = vmatmul.bf16.gmra.mxu0 %v332
  %v490 = vpop.f32.mrf.mxu0
  %v491 = vadd.f32 0.0, %v490
  %v492 = vpop.f32.mrf.mxu0
  %v493 = vadd.f32 0.0, %v492
  %494 = vmatmul.bf16.gmra.mxu0 %v335
  %v495 = vpop.f32.mrf.mxu0
  %v496 = vadd.f32 0.0, %v495
  %v497 = vpop.f32.mrf.mxu0
  %v498 = vadd.f32 0.0, %v497
  %499 = vmatmul.bf16.gmra.mxu0 %v338
  %v500 = vpop.f32.mrf.mxu0
  %v501 = vadd.f32 0.0, %v500
  %v502 = vpop.f32.mrf.mxu0
  %v503 = vadd.f32 0.0, %v502
  %504 = vmatmul.bf16.gmra.mxu0 %v341
  %v505 = vpop.f32.mrf.mxu0
  %v506 = vadd.f32 0.0, %v505
  %v507 = vpop.f32.mrf.mxu0
  %v508 = vadd.f32 0.0, %v507
  %509 = vmatmul.bf16.gmra.mxu0 %v344
  %v510 = vpop.f32.mrf.mxu0
  %v511 = vadd.f32 0.0, %v510
  %v512 = vpop.f32.mrf.mxu0
  %v513 = vadd.f32 0.0, %v512
  %514 = vmatmul.bf16.gmra.mxu0 %v347
  %v515 = vpop.f32.mrf.mxu0
  %v516 = vadd.f32 0.0, %v515
  %v517 = vpop.f32.mrf.mxu0
  %v518 = vadd.f32 0.0, %v517
  %519 = vmatmul.bf16.gmra.mxu0 %v350
  %v520 = vpop.f32.mrf.mxu0
  %v521 = vadd.f32 0.0, %v520
  %v522 = vpop.f32.mrf.mxu0
  %v523 = vadd.f32 0.0, %v522
  %524 = vdwg.mxu0
  %v525 = vmax.f32 %v366, %v406
  %v526 = vmax.f32 %v368, %v408
  %v527 = vmax.f32 %v371, %v411
  %v528 = vmax.f32 %v373, %v413
  %v529 = vmax.f32 %v376, %v416
  %v530 = vmax.f32 %v378, %v418
  %v531 = vmax.f32 %v381, %v421
  %v532 = vmax.f32 %v383, %v423
  %v533 = vmax.f32 %v386, %v426
  %v534 = vmax.f32 %v388, %v428
  %v535 = vmax.f32 %v391, %v431
  %v536 = vmax.f32 %v393, %v433
  %v537 = vmax.f32 %v396, %v436
  %v538 = vmax.f32 %v398, %v438
  %v539 = vmax.f32 %v401, %v441
  %v540 = vmax.f32 %v403, %v443
  %v541 = vmax.f32 %v446, %v486
  %v542 = vmax.f32 %v448, %v488
  %v543 = vmax.f32 %v451, %v491
  %v544 = vmax.f32 %v453, %v493
  %v545 = vmax.f32 %v456, %v496
  %v546 = vmax.f32 %v458, %v498
  %v547 = vmax.f32 %v461, %v501
  %v548 = vmax.f32 %v463, %v503
  %v549 = vmax.f32 %v466, %v506
  %v550 = vmax.f32 %v468, %v508
  %v551 = vmax.f32 %v471, %v511
  %v552 = vmax.f32 %v473, %v513
  %v553 = vmax.f32 %v476, %v516
  %v554 = vmax.f32 %v478, %v518
  %v555 = vmax.f32 %v481, %v521
  %v556 = vmax.f32 %v483, %v523
  %v557 = vmax.f32 %v525, %v541
  %v558 = vmax.f32 %v526, %v542
  %v559 = vmax.f32 %v527, %v543
  %v560 = vmax.f32 %v528, %v544
  %v561 = vmax.f32 %v529, %v545
  %v562 = vmax.f32 %v530, %v546
  %v563 = vmax.f32 %v531, %v547
  %v564 = vmax.f32 %v532, %v548
  %v565 = vmax.f32 %v533, %v549
  %v566 = vmax.f32 %v534, %v550
  %v567 = vmax.f32 %v535, %v551
  %v568 = vmax.f32 %v536, %v552
  %v569 = vmax.f32 %v537, %v553
  %v570 = vmax.f32 %v538, %v554
  %v571 = vmax.f32 %v539, %v555
  %v572 = vmax.f32 %v540, %v556
  %v573 = vld [vmem:[%s2] sm:$0x1]
  %v575 = vperm.slane %v573, 0
  %v577 = vadd.f32 %v557, %v575
  %v578 = vadd.f32 %v558, %v575
  %v579 = vadd.f32 %v559, %v575
  %v580 = vadd.f32 %v560, %v575
  %v581 = vadd.f32 %v561, %v575
  %v582 = vadd.f32 %v562, %v575
  %v583 = vadd.f32 %v563, %v575
  %v584 = vadd.f32 %v564, %v575
  %v585 = vadd.f32 %v565, %v575
  %v586 = vadd.f32 %v566, %v575
  %v587 = vadd.f32 %v567, %v575
  %v588 = vadd.f32 %v568, %v575
  %v589 = vadd.f32 %v569, %v575
  %v590 = vadd.f32 %v570, %v575
  %v591 = vadd.f32 %v571, %v575
  %v592 = vadd.f32 %v572, %v575
  %v593 = vsub.f32 0.0, %v577
  %v594 = vsub.f32 0.0, %v578
  %v595 = vsub.f32 0.0, %v579
  %v596 = vsub.f32 0.0, %v580
  %v597 = vsub.f32 0.0, %v581
  %v598 = vsub.f32 0.0, %v582
  %v599 = vsub.f32 0.0, %v583
  %v600 = vsub.f32 0.0, %v584
  %v601 = vsub.f32 0.0, %v585
  %v602 = vsub.f32 0.0, %v586
  %v603 = vsub.f32 0.0, %v587
  %v604 = vsub.f32 0.0, %v588
  %v605 = vsub.f32 0.0, %v589
  %v606 = vsub.f32 0.0, %v590
  %v607 = vsub.f32 0.0, %v591
  %v608 = vsub.f32 0.0, %v592
  %v609 = vmul.f32 %v593, 1.442695
  %v610 = vpow.pop %v609
  %v611 = vmul.f32 %v594, 1.442695
  %v612 = vpow.pop %v611
  %v613 = vmul.f32 %v595, 1.442695
  %v614 = vpow.pop %v613
  %v615 = vmul.f32 %v596, 1.442695
  %v616 = vpow.pop %v615
  %v617 = vmul.f32 %v597, 1.442695
  %v618 = vpow.pop %v617
  %v619 = vmul.f32 %v598, 1.442695
  %v620 = vpow.pop %v619
  %v621 = vmul.f32 %v599, 1.442695
  %v622 = vpow.pop %v621
  %v623 = vmul.f32 %v600, 1.442695
  %v624 = vpow.pop %v623
  %v625 = vmul.f32 %v601, 1.442695
  %v626 = vpow.pop %v625
  %v627 = vmul.f32 %v602, 1.442695
  %v628 = vpow.pop %v627
  %v629 = vmul.f32 %v603, 1.442695
  %v630 = vpow.pop %v629
  %v631 = vmul.f32 %v604, 1.442695
  %v632 = vpow.pop %v631
  %v633 = vmul.f32 %v605, 1.442695
  %v634 = vpow.pop %v633
  %v635 = vmul.f32 %v606, 1.442695
  %v636 = vpow.pop %v635
  %v637 = vmul.f32 %v607, 1.442695
  %v638 = vpow.pop %v637
  %v639 = vmul.f32 %v608, 1.442695
  %v640 = vpow.pop %v639
  %v641 = vadd.f32 %v610, 1.0
  %v642 = vadd.f32 %v612, 1.0
  %v643 = vadd.f32 %v614, 1.0
  %v644 = vadd.f32 %v616, 1.0
  %v645 = vadd.f32 %v618, 1.0
  %v646 = vadd.f32 %v620, 1.0
  %v647 = vadd.f32 %v622, 1.0
  %v648 = vadd.f32 %v624, 1.0
  %v649 = vadd.f32 %v626, 1.0
  %v650 = vadd.f32 %v628, 1.0
  %v651 = vadd.f32 %v630, 1.0
  %v652 = vadd.f32 %v632, 1.0
  %v653 = vadd.f32 %v634, 1.0
  %v654 = vadd.f32 %v636, 1.0
  %v655 = vadd.f32 %v638, 1.0
  %v656 = vadd.f32 %v640, 1.0
  %v657 = vrcp.pop %v641
  %v658 = vmul.f32 %v641, %v657
  %v659 = vsub.f32 1.0, %v658
  %v660 = vmul.f32 %v657, %v659
  %v661 = vadd.f32 %v657, %v660
  %vm662 = vweird.f32 %v641
  %vm663 = vweird.f32 %v657
  %vm664 = vmor %vm662, %vm663
  %v665 = vsel %vm664, %v657, %v661
  %v666 = vand.u32 2147483647, %v641
  %vm667 = vcmp.eq.f32.partialorder %v666, 8.507059e+37
  %v668 = vand.u32 %v641, 2147483648
  %v669 = vor.u32 1.1754944e-38, %v668
  %v670 = vsel %vm667, %v669, %v665
  %v671 = vmul.f32 1.0, %v670
  %v672 = vrcp.pop %v642
  %v673 = vmul.f32 %v642, %v672
  %v674 = vsub.f32 1.0, %v673
  %v675 = vmul.f32 %v672, %v674
  %v676 = vadd.f32 %v672, %v675
  %vm677 = vweird.f32 %v642
  %vm678 = vweird.f32 %v672
  %vm679 = vmor %vm677, %vm678
  %v680 = vsel %vm679, %v672, %v676
  %v681 = vand.u32 2147483647, %v642
  %vm682 = vcmp.eq.f32.partialorder %v681, 8.507059e+37
  %v683 = vand.u32 %v642, 2147483648
  %v684 = vor.u32 1.1754944e-38, %v683
  %v685 = vsel %vm682, %v684, %v680
  %v686 = vmul.f32 1.0, %v685
  %v687 = vrcp.pop %v643
  %v688 = vmul.f32 %v643, %v687
  %v689 = vsub.f32 1.0, %v688
  %v690 = vmul.f32 %v687, %v689
  %v691 = vadd.f32 %v687, %v690
  %vm692 = vweird.f32 %v643
  %vm693 = vweird.f32 %v687
  %vm694 = vmor %vm692, %vm693
  %v695 = vsel %vm694, %v687, %v691
  %v696 = vand.u32 2147483647, %v643
  %vm697 = vcmp.eq.f32.partialorder %v696, 8.507059e+37
  %v698 = vand.u32 %v643, 2147483648
  %v699 = vor.u32 1.1754944e-38, %v698
  %v700 = vsel %vm697, %v699, %v695
  %v701 = vmul.f32 1.0, %v700
  %v702 = vrcp.pop %v644
  %v703 = vmul.f32 %v644, %v702
  %v704 = vsub.f32 1.0, %v703
  %v705 = vmul.f32 %v702, %v704
  %v706 = vadd.f32 %v702, %v705
  %vm707 = vweird.f32 %v644
  %vm708 = vweird.f32 %v702
  %vm709 = vmor %vm707, %vm708
  %v710 = vsel %vm709, %v702, %v706
  %v711 = vand.u32 2147483647, %v644
  %vm712 = vcmp.eq.f32.partialorder %v711, 8.507059e+37
  %v713 = vand.u32 %v644, 2147483648
  %v714 = vor.u32 1.1754944e-38, %v713
  %v715 = vsel %vm712, %v714, %v710
  %v716 = vmul.f32 1.0, %v715
  %v717 = vrcp.pop %v645
  %v718 = vmul.f32 %v645, %v717
  %v719 = vsub.f32 1.0, %v718
  %v720 = vmul.f32 %v717, %v719
  %v721 = vadd.f32 %v717, %v720
  %vm722 = vweird.f32 %v645
  %vm723 = vweird.f32 %v717
  %vm724 = vmor %vm722, %vm723
  %v725 = vsel %vm724, %v717, %v721
  %v726 = vand.u32 2147483647, %v645
  %vm727 = vcmp.eq.f32.partialorder %v726, 8.507059e+37
  %v728 = vand.u32 %v645, 2147483648
  %v729 = vor.u32 1.1754944e-38, %v728
  %v730 = vsel %vm727, %v729, %v725
  %v731 = vmul.f32 1.0, %v730
  %v732 = vrcp.pop %v646
  %v733 = vmul.f32 %v646, %v732
  %v734 = vsub.f32 1.0, %v733
  %v735 = vmul.f32 %v732, %v734
  %v736 = vadd.f32 %v732, %v735
  %vm737 = vweird.f32 %v646
  %vm738 = vweird.f32 %v732
  %vm739 = vmor %vm737, %vm738
  %v740 = vsel %vm739, %v732, %v736
  %v741 = vand.u32 2147483647, %v646
  %vm742 = vcmp.eq.f32.partialorder %v741, 8.507059e+37
  %v743 = vand.u32 %v646, 2147483648
  %v744 = vor.u32 1.1754944e-38, %v743
  %v745 = vsel %vm742, %v744, %v740
  %v746 = vmul.f32 1.0, %v745
  %v747 = vrcp.pop %v647
  %v748 = vmul.f32 %v647, %v747
  %v749 = vsub.f32 1.0, %v748
  %v750 = vmul.f32 %v747, %v749
  %v751 = vadd.f32 %v747, %v750
  %vm752 = vweird.f32 %v647
  %vm753 = vweird.f32 %v747
  %vm754 = vmor %vm752, %vm753
  %v755 = vsel %vm754, %v747, %v751
  %v756 = vand.u32 2147483647, %v647
  %vm757 = vcmp.eq.f32.partialorder %v756, 8.507059e+37
  %v758 = vand.u32 %v647, 2147483648
  %v759 = vor.u32 1.1754944e-38, %v758
  %v760 = vsel %vm757, %v759, %v755
  %v761 = vmul.f32 1.0, %v760
  %v762 = vrcp.pop %v648
  %v763 = vmul.f32 %v648, %v762
  %v764 = vsub.f32 1.0, %v763
  %v765 = vmul.f32 %v762, %v764
  %v766 = vadd.f32 %v762, %v765
  %vm767 = vweird.f32 %v648
  %vm768 = vweird.f32 %v762
  %vm769 = vmor %vm767, %vm768
  %v770 = vsel %vm769, %v762, %v766
  %v771 = vand.u32 2147483647, %v648
  %vm772 = vcmp.eq.f32.partialorder %v771, 8.507059e+37
  %v773 = vand.u32 %v648, 2147483648
  %v774 = vor.u32 1.1754944e-38, %v773
  %v775 = vsel %vm772, %v774, %v770
  %v776 = vmul.f32 1.0, %v775
  %v777 = vrcp.pop %v649
  %v778 = vmul.f32 %v649, %v777
  %v779 = vsub.f32 1.0, %v778
  %v780 = vmul.f32 %v777, %v779
  %v781 = vadd.f32 %v777, %v780
  %vm782 = vweird.f32 %v649
  %vm783 = vweird.f32 %v777
  %vm784 = vmor %vm782, %vm783
  %v785 = vsel %vm784, %v777, %v781
  %v786 = vand.u32 2147483647, %v649
  %vm787 = vcmp.eq.f32.partialorder %v786, 8.507059e+37
  %v788 = vand.u32 %v649, 2147483648
  %v789 = vor.u32 1.1754944e-38, %v788
  %v790 = vsel %vm787, %v789, %v785
  %v791 = vmul.f32 1.0, %v790
  %v792 = vrcp.pop %v650
  %v793 = vmul.f32 %v650, %v792
  %v794 = vsub.f32 1.0, %v793
  %v795 = vmul.f32 %v792, %v794
  %v796 = vadd.f32 %v792, %v795
  %vm797 = vweird.f32 %v650
  %vm798 = vweird.f32 %v792
  %vm799 = vmor %vm797, %vm798
  %v800 = vsel %vm799, %v792, %v796
  %v801 = vand.u32 2147483647, %v650
  %vm802 = vcmp.eq.f32.partialorder %v801, 8.507059e+37
  %v803 = vand.u32 %v650, 2147483648
  %v804 = vor.u32 1.1754944e-38, %v803
  %v805 = vsel %vm802, %v804, %v800
  %v806 = vmul.f32 1.0, %v805
  %v807 = vrcp.pop %v651
  %v808 = vmul.f32 %v651, %v807
  %v809 = vsub.f32 1.0, %v808
  %v810 = vmul.f32 %v807, %v809
  %v811 = vadd.f32 %v807, %v810
  %vm812 = vweird.f32 %v651
  %vm813 = vweird.f32 %v807
  %vm814 = vmor %vm812, %vm813
  %v815 = vsel %vm814, %v807, %v811
  %v816 = vand.u32 2147483647, %v651
  %vm817 = vcmp.eq.f32.partialorder %v816, 8.507059e+37
  %v818 = vand.u32 %v651, 2147483648
  %v819 = vor.u32 1.1754944e-38, %v818
  %v820 = vsel %vm817, %v819, %v815
  %v821 = vmul.f32 1.0, %v820
  %v822 = vrcp.pop %v652
  %v823 = vmul.f32 %v652, %v822
  %v824 = vsub.f32 1.0, %v823
  %v825 = vmul.f32 %v822, %v824
  %v826 = vadd.f32 %v822, %v825
  %vm827 = vweird.f32 %v652
  %vm828 = vweird.f32 %v822
  %vm829 = vmor %vm827, %vm828
  %v830 = vsel %vm829, %v822, %v826
  %v831 = vand.u32 2147483647, %v652
  %vm832 = vcmp.eq.f32.partialorder %v831, 8.507059e+37
  %v833 = vand.u32 %v652, 2147483648
  %v834 = vor.u32 1.1754944e-38, %v833
  %v835 = vsel %vm832, %v834, %v830
  %v836 = vmul.f32 1.0, %v835
  %v837 = vrcp.pop %v653
  %v838 = vmul.f32 %v653, %v837
  %v839 = vsub.f32 1.0, %v838
  %v840 = vmul.f32 %v837, %v839
  %v841 = vadd.f32 %v837, %v840
  %vm842 = vweird.f32 %v653
  %vm843 = vweird.f32 %v837
  %vm844 = vmor %vm842, %vm843
  %v845 = vsel %vm844, %v837, %v841
  %v846 = vand.u32 2147483647, %v653
  %vm847 = vcmp.eq.f32.partialorder %v846, 8.507059e+37
  %v848 = vand.u32 %v653, 2147483648
  %v849 = vor.u32 1.1754944e-38, %v848
  %v850 = vsel %vm847, %v849, %v845
  %v851 = vmul.f32 1.0, %v850
  %v852 = vrcp.pop %v654
  %v853 = vmul.f32 %v654, %v852
  %v854 = vsub.f32 1.0, %v853
  %v855 = vmul.f32 %v852, %v854
  %v856 = vadd.f32 %v852, %v855
  %vm857 = vweird.f32 %v654
  %vm858 = vweird.f32 %v852
  %vm859 = vmor %vm857, %vm858
  %v860 = vsel %vm859, %v852, %v856
  %v861 = vand.u32 2147483647, %v654
  %vm862 = vcmp.eq.f32.partialorder %v861, 8.507059e+37
  %v863 = vand.u32 %v654, 2147483648
  %v864 = vor.u32 1.1754944e-38, %v863
  %v865 = vsel %vm862, %v864, %v860
  %v866 = vmul.f32 1.0, %v865
  %v867 = vrcp.pop %v655
  %v868 = vmul.f32 %v655, %v867
  %v869 = vsub.f32 1.0, %v868
  %v870 = vmul.f32 %v867, %v869
  %v871 = vadd.f32 %v867, %v870
  %vm872 = vweird.f32 %v655
  %vm873 = vweird.f32 %v867
  %vm874 = vmor %vm872, %vm873
  %v875 = vsel %vm874, %v867, %v871
  %v876 = vand.u32 2147483647, %v655
  %vm877 = vcmp.eq.f32.partialorder %v876, 8.507059e+37
  %v878 = vand.u32 %v655, 2147483648
  %v879 = vor.u32 1.1754944e-38, %v878
  %v880 = vsel %vm877, %v879, %v875
  %v881 = vmul.f32 1.0, %v880
  %v882 = vrcp.pop %v656
  %v883 = vmul.f32 %v656, %v882
  %v884 = vsub.f32 1.0, %v883
  %v885 = vmul.f32 %v882, %v884
  %v886 = vadd.f32 %v882, %v885
  %vm887 = vweird.f32 %v656
  %vm888 = vweird.f32 %v882
  %vm889 = vmor %vm887, %vm888
  %v890 = vsel %vm889, %v882, %v886
  %v891 = vand.u32 2147483647, %v656
  %vm892 = vcmp.eq.f32.partialorder %v891, 8.507059e+37
  %v893 = vand.u32 %v656, 2147483648
  %v894 = vor.u32 1.1754944e-38, %v893
  %v895 = vsel %vm892, %v894, %v890
  %v896 = vmul.f32 1.0, %v895
  %v897 = vpack.c.bf16 %v671, %v671
  %v898 = vpack.c.bf16 %v686, %v686
  %v899 = vpack.c.bf16 %v701, %v701
  %v900 = vpack.c.bf16 %v716, %v716
  %v901 = vpack.c.bf16 %v731, %v731
  %v902 = vpack.c.bf16 %v746, %v746
  %v903 = vpack.c.bf16 %v761, %v761
  %v904 = vpack.c.bf16 %v776, %v776
  %v905 = vpack.c.bf16 %v791, %v791
  %v906 = vpack.c.bf16 %v806, %v806
  %v907 = vpack.c.bf16 %v821, %v821
  %v908 = vpack.c.bf16 %v836, %v836
  %v909 = vpack.c.bf16 %v851, %v851
  %v910 = vpack.c.bf16 %v866, %v866
  %v911 = vpack.c.bf16 %v881, %v881
  %v912 = vpack.c.bf16 %v896, %v896
  %vm913 = vcmask 519168
  %914 = vst.msk [vmem:[%s7] sm:$0xf] %vm913, %v897
  %915 = vst.msk [vmem:[%s7 + $0x4] sm:$0xf] %vm913, %v898
  %916 = vst.msk [vmem:[%s7 + $0x8] sm:$0xf] %vm913, %v899
  %917 = vst.msk [vmem:[%s7 + $0xc] sm:$0xf] %vm913, %v900
  %918 = vst.msk [vmem:[%s7 + $0x10] sm:$0xf] %vm913, %v901
  %919 = vst.msk [vmem:[%s7 + $0x14] sm:$0xf] %vm913, %v902
  %920 = vst.msk [vmem:[%s7 + $0x18] sm:$0xf] %vm913, %v903
  %921 = vst.msk [vmem:[%s7 + $0x1c] sm:$0xf] %vm913, %v904
  %922 = vst.msk [vmem:[%s7 + $0x20] sm:$0xf] %vm913, %v905
  %923 = vst.msk [vmem:[%s7 + $0x24] sm:$0xf] %vm913, %v906
  %924 = vst.msk [vmem:[%s7 + $0x28] sm:$0xf] %vm913, %v907
  %925 = vst.msk [vmem:[%s7 + $0x2c] sm:$0xf] %vm913, %v908
  %926 = vst.msk [vmem:[%s7 + $0x30] sm:$0xf] %vm913, %v909
  %927 = vst.msk [vmem:[%s7 + $0x34] sm:$0xf] %vm913, %v910
  %928 = vst.msk [vmem:[%s7 + $0x38] sm:$0xf] %vm913, %v911
  %929 = vst.msk [vmem:[%s7 + $0x3c] sm:$0xf] %vm913, %v912
  %v930 = vld [vmem:[%s3] sm:$0xf]
  %v931 = vld [vmem:[%s3 + $0x4] sm:$0xf]
  %v932 = vld [vmem:[%s3 + $0x8] sm:$0xf]
  %v933 = vld [vmem:[%s3 + $0xc] sm:$0xf]
  %v934 = vld [vmem:[%s3 + $0x10] sm:$0xf]
  %v935 = vld [vmem:[%s3 + $0x14] sm:$0xf]
  %v936 = vld [vmem:[%s3 + $0x18] sm:$0xf]
  %v937 = vld [vmem:[%s3 + $0x1c] sm:$0xf]
  %v954 = vunpack.c.l.b16 %v897
  %v955 = vunpack.c.l.b16 %v898
  %v956 = vunpack.c.l.b16 %v899
  %v957 = vunpack.c.l.b16 %v900
  %v958 = vunpack.c.l.b16 %v901
  %v959 = vunpack.c.l.b16 %v902
  %v960 = vunpack.c.l.b16 %v903
  %v961 = vunpack.c.l.b16 %v904
  %v962 = vunpack.c.l.b16 %v905
  %v963 = vunpack.c.l.b16 %v906
  %v964 = vunpack.c.l.b16 %v907
  %v965 = vunpack.c.l.b16 %v908
  %v966 = vunpack.c.l.b16 %v909
  %v967 = vunpack.c.l.b16 %v910
  %v968 = vunpack.c.l.b16 %v911
  %v969 = vunpack.c.l.b16 %v912
  %v970 = vpack.c.b16 %v955, %v954
  %v971 = vpack.c.b16 %v957, %v956
  %v972 = vpack.c.b16 %v959, %v958
  %v973 = vpack.c.b16 %v961, %v960
  %v974 = vpack.c.b16 %v963, %v962
  %v975 = vpack.c.b16 %v965, %v964
  %v976 = vpack.c.b16 %v967, %v966
  %v977 = vpack.c.b16 %v969, %v968
  %v986 = vunpack.c.l.b16 %v930
  %v987 = vunpack.c.l.b16 %v931
  %v988 = vunpack.c.l.b16 %v932
  %v989 = vunpack.c.l.b16 %v933
  %v990 = vunpack.c.l.b16 %v934
  %v991 = vunpack.c.l.b16 %v935
  %v992 = vunpack.c.l.b16 %v936
  %v993 = vunpack.c.l.b16 %v937
  %v994 = vpack.c.b16 %v987, %v986
  %v995 = vpack.c.b16 %v989, %v988
  %v996 = vpack.c.b16 %v991, %v990
  %v997 = vpack.c.b16 %v993, %v992
  %vm1002 = vcmask 523264
  %v1004 = vsel %vm1002, %v970, 0
  %v1007 = vsel %vm1002, %v971, 0
  %v1010 = vsel %vm1002, %v972, 0
  %v1013 = vsel %vm1002, %v973, 0
  %v1016 = vsel %vm1002, %v974, 0
  %v1019 = vsel %vm1002, %v975, 0
  %v1022 = vsel %vm1002, %v976, 0
  %v1025 = vsel %vm1002, %v977, 0
  %1027 = vmatpush.bf16.msra.mxu0 0
  %1028 = vmatpush.bf16.msra.mxu0 0
  %1029 = vmatpush.bf16.msra.mxu0 0
  %1030 = vmatpush.bf16.msra.mxu0 0
  %1031 = vmatpush.bf16.msra.mxu0 %v997
  %1032 = vmatpush.bf16.msra.mxu0 %v996
  %1033 = vmatpush.bf16.msra.mxu0 %v995
  %1034 = vmatpush.bf16.msra.mxu0 %v994
  %1035 = vmatmul.bf16.gmra.mxu0 %v1004
  %v1036 = vpop.f32.mrf.mxu0
  %v1037 = vadd.f32 0.0, %v1036
  %v1038 = vpop.f32.mrf.mxu0
  %v1039 = vadd.f32 0.0, %v1038
  %1040 = vmatmul.bf16.gmra.mxu0 %v1007
  %v1041 = vpop.f32.mrf.mxu0
  %v1042 = vadd.f32 0.0, %v1041
  %v1043 = vpop.f32.mrf.mxu0
  %v1044 = vadd.f32 0.0, %v1043
  %1045 = vmatmul.bf16.gmra.mxu0 %v1010
  %v1046 = vpop.f32.mrf.mxu0
  %v1047 = vadd.f32 0.0, %v1046
  %v1048 = vpop.f32.mrf.mxu0
  %v1049 = vadd.f32 0.0, %v1048
  %1050 = vmatmul.bf16.gmra.mxu0 %v1013
  %v1051 = vpop.f32.mrf.mxu0
  %v1052 = vadd.f32 0.0, %v1051
  %v1053 = vpop.f32.mrf.mxu0
  %v1054 = vadd.f32 0.0, %v1053
  %1055 = vmatmul.bf16.gmra.mxu0 %v1016
  %v1056 = vpop.f32.mrf.mxu0
  %v1057 = vadd.f32 0.0, %v1056
  %v1058 = vpop.f32.mrf.mxu0
  %v1059 = vadd.f32 0.0, %v1058
  %1060 = vmatmul.bf16.gmra.mxu0 %v1019
  %v1061 = vpop.f32.mrf.mxu0
  %v1062 = vadd.f32 0.0, %v1061
  %v1063 = vpop.f32.mrf.mxu0
  %v1064 = vadd.f32 0.0, %v1063
  %1065 = vmatmul.bf16.gmra.mxu0 %v1022
  %v1066 = vpop.f32.mrf.mxu0
  %v1067 = vadd.f32 0.0, %v1066
  %v1068 = vpop.f32.mrf.mxu0
  %v1069 = vadd.f32 0.0, %v1068
  %1070 = vmatmul.bf16.gmra.mxu0 %v1025
  %v1071 = vpop.f32.mrf.mxu0
  %v1072 = vadd.f32 0.0, %v1071
  %v1073 = vpop.f32.mrf.mxu0
  %v1074 = vadd.f32 0.0, %v1073
  %1075 = vdwg.mxu0
  %v1076 = vmax.f32 %v1037, %v1047
  %v1077 = vmax.f32 %v1039, %v1049
  %v1078 = vmax.f32 %v1042, %v1052
  %v1079 = vmax.f32 %v1044, %v1054
  %v1080 = vmax.f32 %v1057, %v1067
  %v1081 = vmax.f32 %v1059, %v1069
  %v1082 = vmax.f32 %v1062, %v1072
  %v1083 = vmax.f32 %v1064, %v1074
  %v1084 = vmax.f32 %v1076, %v1080
  %v1085 = vmax.f32 %v1077, %v1081
  %v1086 = vmax.f32 %v1078, %v1082
  %v1087 = vmax.f32 %v1079, %v1083
  %v1088 = vld [vmem:[%s4] sm:$0x1]
  %v1090 = vperm.slane %v1088, 0
  %v1092 = vadd.f32 %v1084, %v1090
  %v1093 = vadd.f32 %v1085, %v1090
  %v1094 = vadd.f32 %v1086, %v1090
  %v1095 = vadd.f32 %v1087, %v1090
  %v1096 = vsub.f32 0.0, %v1092
  %v1097 = vsub.f32 0.0, %v1093
  %v1098 = vsub.f32 0.0, %v1094
  %v1099 = vsub.f32 0.0, %v1095
  %v1100 = vmul.f32 %v1096, 1.442695
  %v1101 = vpow.pop %v1100
  %v1102 = vmul.f32 %v1097, 1.442695
  %v1103 = vpow.pop %v1102
  %v1104 = vmul.f32 %v1098, 1.442695
  %v1105 = vpow.pop %v1104
  %v1106 = vmul.f32 %v1099, 1.442695
  %v1107 = vpow.pop %v1106
  %v1108 = vadd.f32 %v1101, 1.0
  %v1109 = vadd.f32 %v1103, 1.0
  %v1110 = vadd.f32 %v1105, 1.0
  %v1111 = vadd.f32 %v1107, 1.0
  %v1112 = vrcp.pop %v1108
  %v1113 = vmul.f32 %v1108, %v1112
  %v1114 = vsub.f32 1.0, %v1113
  %v1115 = vmul.f32 %v1112, %v1114
  %v1116 = vadd.f32 %v1112, %v1115
  %vm1117 = vweird.f32 %v1108
  %vm1118 = vweird.f32 %v1112
  %vm1119 = vmor %vm1117, %vm1118
  %v1120 = vsel %vm1119, %v1112, %v1116
  %v1121 = vand.u32 2147483647, %v1108
  %vm1122 = vcmp.eq.f32.partialorder %v1121, 8.507059e+37
  %v1123 = vand.u32 %v1108, 2147483648
  %v1124 = vor.u32 1.1754944e-38, %v1123
  %v1125 = vsel %vm1122, %v1124, %v1120
  %v1126 = vmul.f32 1.0, %v1125
  %v1127 = vrcp.pop %v1109
  %v1128 = vmul.f32 %v1109, %v1127
  %v1129 = vsub.f32 1.0, %v1128
  %v1130 = vmul.f32 %v1127, %v1129
  %v1131 = vadd.f32 %v1127, %v1130
  %vm1132 = vweird.f32 %v1109
  %vm1133 = vweird.f32 %v1127
  %vm1134 = vmor %vm1132, %vm1133
  %v1135 = vsel %vm1134, %v1127, %v1131
  %v1136 = vand.u32 2147483647, %v1109
  %vm1137 = vcmp.eq.f32.partialorder %v1136, 8.507059e+37
  %v1138 = vand.u32 %v1109, 2147483648
  %v1139 = vor.u32 1.1754944e-38, %v1138
  %v1140 = vsel %vm1137, %v1139, %v1135
  %v1141 = vmul.f32 1.0, %v1140
  %v1142 = vrcp.pop %v1110
  %v1143 = vmul.f32 %v1110, %v1142
  %v1144 = vsub.f32 1.0, %v1143
  %v1145 = vmul.f32 %v1142, %v1144
  %v1146 = vadd.f32 %v1142, %v1145
  %vm1147 = vweird.f32 %v1110
  %vm1148 = vweird.f32 %v1142
  %vm1149 = vmor %vm1147, %vm1148
  %v1150 = vsel %vm1149, %v1142, %v1146
  %v1151 = vand.u32 2147483647, %v1110
  %vm1152 = vcmp.eq.f32.partialorder %v1151, 8.507059e+37
  %v1153 = vand.u32 %v1110, 2147483648
  %v1154 = vor.u32 1.1754944e-38, %v1153
  %v1155 = vsel %vm1152, %v1154, %v1150
  %v1156 = vmul.f32 1.0, %v1155
  %v1157 = vrcp.pop %v1111
  %v1158 = vmul.f32 %v1111, %v1157
  %v1159 = vsub.f32 1.0, %v1158
  %v1160 = vmul.f32 %v1157, %v1159
  %v1161 = vadd.f32 %v1157, %v1160
  %vm1162 = vweird.f32 %v1111
  %vm1163 = vweird.f32 %v1157
  %vm1164 = vmor %vm1162, %vm1163
  %v1165 = vsel %vm1164, %v1157, %v1161
  %v1166 = vand.u32 2147483647, %v1111
  %vm1167 = vcmp.eq.f32.partialorder %v1166, 8.507059e+37
  %v1168 = vand.u32 %v1111, 2147483648
  %v1169 = vor.u32 1.1754944e-38, %v1168
  %v1170 = vsel %vm1167, %v1169, %v1165
  %v1171 = vmul.f32 1.0, %v1170
  %vm1172 = vcmask 392192
  %1173 = vst.msk [vmem:[%s8] sm:$0xff] %vm1172, %v1126
  %1174 = vst.msk [vmem:[%s8 + $0x8] sm:$0xff] %vm1172, %v1141
  %1175 = vst.msk [vmem:[%s8 + $0x10] sm:$0xff] %vm1172, %v1156
  %1176 = vst.msk [vmem:[%s8 + $0x18] sm:$0xff] %vm1172, %v1171
  %v1177 = vpack.c.bf16 %v1141, %v1126
  %v1178 = vpack.c.bf16 %v1171, %v1156
  %v1179 = vld [vmem:[%s5] sm:$0xf]
  %v1180 = vld [vmem:[%s5 + $0x4] sm:$0xf]
  %v1181 = vld [vmem:[%s5 + $0x8] sm:$0xf]
  %v1182 = vld [vmem:[%s5 + $0xc] sm:$0xf]
  %v1183 = vld [vmem:[%s5 + $0x10] sm:$0xf]
  %v1184 = vld [vmem:[%s5 + $0x14] sm:$0xf]
  %v1191 = vunpack.c.l.b16 %v1179
  %v1192 = vunpack.c.l.b16 %v1180
  %v1193 = vunpack.c.l.b16 %v1181
  %v1194 = vunpack.c.l.b16 %v1182
  %v1195 = vunpack.c.l.b16 %v1183
  %v1196 = vunpack.c.l.b16 %v1184
  %v1197 = vpack.c.b16 %v1192, %v1191
  %v1198 = vpack.c.b16 %v1194, %v1193
  %v1199 = vpack.c.b16 %v1196, %v1195
  %v1204 = vsel %vm1172, %v1177, 0
  %v1207 = vsel %vm1172, %v1178, 0
  %1209 = vmatpush.bf16.msra.mxu0 0
  %1210 = vmatpush.bf16.msra.mxu0 0
  %1211 = vmatpush.bf16.msra.mxu0 0
  %1212 = vmatpush.bf16.msra.mxu0 0
  %1213 = vmatpush.bf16.msra.mxu0 0
  %1214 = vmatpush.bf16.msra.mxu0 %v1199
  %1215 = vmatpush.bf16.msra.mxu0 %v1198
  %1216 = vmatpush.bf16.msra.mxu0 %v1197
  %1217 = vmatmul.bf16.gmra.mxu0 %v1204
  %v1218 = vpop.f32.mrf.mxu0
  %v1219 = vadd.f32 0.0, %v1218
  %v1220 = vpop.f32.mrf.mxu0
  %v1221 = vadd.f32 0.0, %v1220
  %1222 = vmatmul.bf16.gmra.mxu0 %v1207
  %v1223 = vpop.f32.mrf.mxu0
  %v1224 = vadd.f32 0.0, %v1223
  %v1225 = vpop.f32.mrf.mxu0
  %v1226 = vadd.f32 0.0, %v1225
  %1227 = vdwg.mxu0
  %v1228 = vmax.f32 %v1219, %v1221
  %v1229 = vmax.f32 %v1224, %v1226
  %v1230 = vmax.f32 %v1228, %v1229
  %v1231 = vld [vmem:[%s6] sm:$0x1]
  %v1233 = vperm.slane %v1231, 0
  %v1235 = vadd.f32 %v1230, %v1233
  %v1236 = vsub.f32 0.0, %v1235
  %v1237 = vmul.f32 %v1236, 1.442695
  %v1238 = vpow.pop %v1237
  %v1239 = vadd.f32 %v1238, 1.0
  %v1240 = vrcp.pop %v1239
  %v1241 = vmul.f32 %v1239, %v1240
  %v1242 = vsub.f32 1.0, %v1241
  %v1243 = vmul.f32 %v1240, %v1242
  %v1244 = vadd.f32 %v1240, %v1243
  %vm1245 = vweird.f32 %v1239
  %vm1246 = vweird.f32 %v1240
  %vm1247 = vmor %vm1245, %vm1246
  %v1248 = vsel %vm1247, %v1240, %v1244
  %v1249 = vand.u32 2147483647, %v1239
  %vm1250 = vcmp.eq.f32.partialorder %v1249, 8.507059e+37
  %v1251 = vand.u32 %v1239, 2147483648
  %v1252 = vor.u32 1.1754944e-38, %v1251
  %v1253 = vsel %vm1250, %v1252, %v1248
  %v1254 = vmul.f32 1.0, %v1253
  %1255 = vst.msk [vmem:[%s9] sm:$0xff] %vm1172, %v1254
  // Predicated region
  $region30: #{cdbn_segmentor_forward.4} parent=0 // pred_check
    _
  $region31: #{cdbn_segmentor_forward.4} parent=0 // pred_check_branch
    %1257 = sbr.rel (0) target = $region33
  $region32: #{cdbn_segmentor_forward.4} parent=0 // pred_region
    _
  $region33: #{cdbn_segmentor_forward.4} parent=0 // pred_fallthru
    _
  // Predicated region
  $region34: #{cdbn_segmentor_forward.4} parent=0 // pred_check
    _
  $region35: #{cdbn_segmentor_forward.4} parent=0 // pred_check_branch
    %1259 = sbr.rel (0) target = $region37
  $region36: #{cdbn_segmentor_forward.4} parent=0 // pred_region
    _
  $region37: #{cdbn_segmentor_forward.4} parent=0 // pred_fallthru
    _
  // Predicated region
  $region38: #{cdbn_segmentor_forward.4} parent=0 // pred_check
    _
  $region39: #{cdbn_segmentor_forward.4} parent=0 // pred_check_branch
    %1261 = sbr.rel (0) target = $region41
  $region40: #{cdbn_segmentor_forward.4} parent=0 // pred_region
    _
  $region41: #{cdbn_segmentor_forward.4} parent=0 // pred_fallthru
    _
  // Predicated region
  $region42: #{cdbn_segmentor_forward.4} parent=0 // pred_check
    _
  $region43: #{cdbn_segmentor_forward.4} parent=0 // pred_check_branch
    %1263 = sbr.rel (0) target = $region45
  $region44: #{cdbn_segmentor_forward.4} parent=0 // pred_region
    _
  $region45: #{cdbn_segmentor_forward.4} parent=0 // pred_fallthru
    _
  // Predicated region
  $region46: #{cdbn_segmentor_forward.4} parent=0 // pred_check
    _
  $region47: #{cdbn_segmentor_forward.4} parent=0 // pred_check_branch
    %1265 = sbr.rel (0) target = $region49
  $region48: #{cdbn_segmentor_forward.4} parent=0 // pred_region
    _
  $region49: #{cdbn_segmentor_forward.4} parent=0 // pred_fallthru
    _
  // Predicated region
  $region50: #{cdbn_segmentor_forward.4} parent=0 // pred_check
    _
  $region51: #{cdbn_segmentor_forward.4} parent=0 // pred_check_branch
    %1267 = sbr.rel (0) target = $region53
  $region52: #{cdbn_segmentor_forward.4} parent=0 // pred_region
    _
  $region53: #{cdbn_segmentor_forward.4} parent=0 // pred_fallthru
    _

// kernel: cdbn_segmentor_forward.5
$region0: #{cdbn_segmentor_forward.5}
  #allocation0 [shape = 'u32[]', space=smem, size = 0x4, offset = 0x4, fixed_abs, tag = 'smem constant byte address 0x4 - core index']
  #allocation1 [shape = 'u32[72,128]{1,0:T(1,128)}', space=vmem, size = 0x9000, scoped, tag = 'internal scratch']
  %s0 = inlined_call_operand.vmem [shape: bf16[128,64], index: 0, kind: input, shape index: {}]
  %s1 = inlined_call_operand.vmem [shape: bf16[64,512], index: 1, kind: input, shape index: {}]
  %s2 = inlined_call_operand.vmem [shape: f32[1,512], index: 2, kind: input, shape index: {}]
  %s3 = inlined_call_operand.vmem [shape: bf16[128,512], index: 3, kind: output, shape index: {}]
  %s4 = sld [smem:[#allocation0]]
  $region22: #{cdbn_segmentor_forward.5} parent=0
    _
  %s6 = ssub.s32 1, %s4
  %s7 = scalar_select 0, %s6, %s4
  // Predicated region
  $region2: #{cdbn_segmentor_forward.5} parent=0 // pred_check
    _
  $region3: #{cdbn_segmentor_forward.5} parent=0 // pred_check_branch
    %9 = sbr.rel (0) target = $region5
  $region4: #{cdbn_segmentor_forward.5} parent=0 // pred_region
    _
  $region5: #{cdbn_segmentor_forward.5} parent=0 // pred_fallthru
    _
  // Predicated region
  $region6: #{cdbn_segmentor_forward.5} parent=0 // pred_check
    _
  $region7: #{cdbn_segmentor_forward.5} parent=0 // pred_check_branch
    %11 = sbr.rel (0) target = $region9
  $region8: #{cdbn_segmentor_forward.5} parent=0 // pred_region
    _
  $region9: #{cdbn_segmentor_forward.5} parent=0 // pred_fallthru
    _
  // Predicated region
  $region10: #{cdbn_segmentor_forward.5} parent=0 // pred_check
    _
  $region11: #{cdbn_segmentor_forward.5} parent=0 // pred_check_branch
    %13 = sbr.rel (0) target = $region13
  $region12: #{cdbn_segmentor_forward.5} parent=0 // pred_region
    _
  $region13: #{cdbn_segmentor_forward.5} parent=0 // pred_fallthru
    _
  %v15 = vld [vmem:[%s0] sm:$0xf]
  %v16 = vld [vmem:[%s0 + $0x4] sm:$0xf]
  %v17 = vld [vmem:[%s0 + $0x8] sm:$0xf]
  %v18 = vld [vmem:[%s0 + $0xc] sm:$0xf]
  %v19 = vld [vmem:[%s0 + $0x10] sm:$0xf]
  %v20 = vld [vmem:[%s0 + $0x14] sm:$0xf]
  %v21 = vld [vmem:[%s0 + $0x18] sm:$0xf]
  %v22 = vld [vmem:[%s0 + $0x1c] sm:$0xf]
  %v23 = vld [vmem:[%s0 + $0x20] sm:$0xf]
  %v24 = vld [vmem:[%s0 + $0x24] sm:$0xf]
  %v25 = vld [vmem:[%s0 + $0x28] sm:$0xf]
  %v26 = vld [vmem:[%s0 + $0x2c] sm:$0xf]
  %v27 = vld [vmem:[%s0 + $0x30] sm:$0xf]
  %v28 = vld [vmem:[%s0 + $0x34] sm:$0xf]
  %v29 = vld [vmem:[%s0 + $0x38] sm:$0xf]
  %v30 = vld [vmem:[%s0 + $0x3c] sm:$0xf]
  %v31 = vld [vmem:[%s1] sm:$0xff]
  %v32 = vld [vmem:[%s1 + $0x8] sm:$0xff]
  %v33 = vld [vmem:[%s1 + $0x10] sm:$0xff]
  %v34 = vld [vmem:[%s1 + $0x18] sm:$0xff]
  %v35 = vld [vmem:[%s1 + $0x20] sm:$0xff]
  %v36 = vld [vmem:[%s1 + $0x28] sm:$0xff]
  %v37 = vld [vmem:[%s1 + $0x30] sm:$0xff]
  %v38 = vld [vmem:[%s1 + $0x38] sm:$0xff]
  %v39 = vld [vmem:[%s1 + $0x40] sm:$0xff]
  %v40 = vld [vmem:[%s1 + $0x48] sm:$0xff]
  %v41 = vld [vmem:[%s1 + $0x50] sm:$0xff]
  %v42 = vld [vmem:[%s1 + $0x58] sm:$0xff]
  %v43 = vld [vmem:[%s1 + $0x60] sm:$0xff]
  %v44 = vld [vmem:[%s1 + $0x68] sm:$0xff]
  %v45 = vld [vmem:[%s1 + $0x70] sm:$0xff]
  %v46 = vld [vmem:[%s1 + $0x78] sm:$0xff]
  %v47 = vld [vmem:[%s2] sm:$0xf]
  %v49 = vperm.slane %v47, 0
  %v50 = vperm.slane %v47, 1
  %v51 = vperm.slane %v47, 2
  %v52 = vperm.slane %v47, 3
  %v73 = vunpack.c.l.b16 %v15
  %v74 = vunpack.c.l.b16 %v16
  %v75 = vunpack.c.l.b16 %v17
  %v76 = vunpack.c.l.b16 %v18
  %v77 = vunpack.c.l.b16 %v19
  %v78 = vunpack.c.l.b16 %v20
  %v79 = vunpack.c.l.b16 %v21
  %v80 = vunpack.c.l.b16 %v22
  %v81 = vunpack.c.l.b16 %v23
  %v82 = vunpack.c.l.b16 %v24
  %v83 = vunpack.c.l.b16 %v25
  %v84 = vunpack.c.l.b16 %v26
  %v85 = vunpack.c.l.b16 %v27
  %v86 = vunpack.c.l.b16 %v28
  %v87 = vunpack.c.l.b16 %v29
  %v88 = vunpack.c.l.b16 %v30
  %v89 = vpack.c.b16 %v74, %v73
  %v90 = vpack.c.b16 %v76, %v75
  %v91 = vpack.c.b16 %v78, %v77
  %v92 = vpack.c.b16 %v80, %v79
  %v93 = vpack.c.b16 %v82, %v81
  %v94 = vpack.c.b16 %v84, %v83
  %v95 = vpack.c.b16 %v86, %v85
  %v96 = vpack.c.b16 %v88, %v87
  %v113 = vunpack.c.l.b16 %v31
  %v114 = vunpack.c.h.b16 %v31
  %v115 = vunpack.c.l.b16 %v32
  %v116 = vunpack.c.h.b16 %v32
  %v117 = vunpack.c.l.b16 %v33
  %v118 = vunpack.c.h.b16 %v33
  %v119 = vunpack.c.l.b16 %v34
  %v120 = vunpack.c.h.b16 %v34
  %v121 = vunpack.c.l.b16 %v35
  %v122 = vunpack.c.h.b16 %v35
  %v123 = vunpack.c.l.b16 %v36
  %v124 = vunpack.c.h.b16 %v36
  %v125 = vunpack.c.l.b16 %v37
  %v126 = vunpack.c.h.b16 %v37
  %v127 = vunpack.c.l.b16 %v38
  %v128 = vunpack.c.h.b16 %v38
  %v129 = vunpack.c.l.b16 %v39
  %v130 = vunpack.c.h.b16 %v39
  %v131 = vunpack.c.l.b16 %v40
  %v132 = vunpack.c.h.b16 %v40
  %v133 = vunpack.c.l.b16 %v41
  %v134 = vunpack.c.h.b16 %v41
  %v135 = vunpack.c.l.b16 %v42
  %v136 = vunpack.c.h.b16 %v42
  %v137 = vunpack.c.l.b16 %v43
  %v138 = vunpack.c.h.b16 %v43
  %v139 = vunpack.c.l.b16 %v44
  %v140 = vunpack.c.h.b16 %v44
  %v141 = vunpack.c.l.b16 %v45
  %v142 = vunpack.c.h.b16 %v45
  %v143 = vunpack.c.l.b16 %v46
  %v144 = vunpack.c.h.b16 %v46
  %v145 = vpack.c.b16 %v117, %v113
  %v146 = vpack.c.b16 %v118, %v114
  %v147 = vpack.c.b16 %v119, %v115
  %v148 = vpack.c.b16 %v120, %v116
  %v149 = vpack.c.b16 %v125, %v121
  %v150 = vpack.c.b16 %v126, %v122
  %v151 = vpack.c.b16 %v127, %v123
  %v152 = vpack.c.b16 %v128, %v124
  %v153 = vpack.c.b16 %v133, %v129
  %v154 = vpack.c.b16 %v134, %v130
  %v155 = vpack.c.b16 %v135, %v131
  %v156 = vpack.c.b16 %v136, %v132
  %v157 = vpack.c.b16 %v141, %v137
  %v158 = vpack.c.b16 %v142, %v138
  %v159 = vpack.c.b16 %v143, %v139
  %v160 = vpack.c.b16 %v144, %v140
  %vm177 = vcmask 523264
  %v179 = vsel %vm177, %v89, 0
  %v182 = vsel %vm177, %v90, 0
  %v185 = vsel %vm177, %v91, 0
  %v188 = vsel %vm177, %v92, 0
  %v191 = vsel %vm177, %v93, 0
  %v194 = vsel %vm177, %v94, 0
  %v197 = vsel %vm177, %v95, 0
  %v200 = vsel %vm177, %v96, 0
  %202 = vmatpush.bf16.msra.mxu0 0
  %203 = vmatpush.bf16.msra.mxu0 0
  %204 = vmatpush.bf16.msra.mxu0 0
  %205 = vmatpush.bf16.msra.mxu0 0
  %206 = vmatpush.bf16.msra.mxu0 %v157
  %207 = vmatpush.bf16.msra.mxu0 %v153
  %208 = vmatpush.bf16.msra.mxu0 %v149
  %209 = vmatpush.bf16.msra.mxu0 %v145
  %210 = vmatmul.bf16.gmra.mxu0 %v179
  %v211 = vpop.f32.mrf.mxu0
  %v212 = vadd.f32 %v49, %v211
  %v213 = vpop.f32.mrf.mxu0
  %v214 = vadd.f32 %v49, %v213
  %215 = vmatmul.bf16.gmra.mxu0 %v182
  %v216 = vpop.f32.mrf.mxu0
  %v217 = vadd.f32 %v49, %v216
  %v218 = vpop.f32.mrf.mxu0
  %v219 = vadd.f32 %v49, %v218
  %220 = vmatmul.bf16.gmra.mxu0 %v185
  %v221 = vpop.f32.mrf.mxu0
  %v222 = vadd.f32 %v49, %v221
  %v223 = vpop.f32.mrf.mxu0
  %v224 = vadd.f32 %v49, %v223
  %225 = vmatmul.bf16.gmra.mxu0 %v188
  %v226 = vpop.f32.mrf.mxu0
  %v227 = vadd.f32 %v49, %v226
  %v228 = vpop.f32.mrf.mxu0
  %v229 = vadd.f32 %v49, %v228
  %230 = vmatmul.bf16.gmra.mxu0 %v191
  %v231 = vpop.f32.mrf.mxu0
  %v232 = vadd.f32 %v49, %v231
  %v233 = vpop.f32.mrf.mxu0
  %v234 = vadd.f32 %v49, %v233
  %235 = vmatmul.bf16.gmra.mxu0 %v194
  %v236 = vpop.f32.mrf.mxu0
  %v237 = vadd.f32 %v49, %v236
  %v238 = vpop.f32.mrf.mxu0
  %v239 = vadd.f32 %v49, %v238
  %240 = vmatmul.bf16.gmra.mxu0 %v197
  %v241 = vpop.f32.mrf.mxu0
  %v242 = vadd.f32 %v49, %v241
  %v243 = vpop.f32.mrf.mxu0
  %v244 = vadd.f32 %v49, %v243
  %245 = vmatmul.bf16.gmra.mxu0 %v200
  %v246 = vpop.f32.mrf.mxu0
  %v247 = vadd.f32 %v49, %v246
  %v248 = vpop.f32.mrf.mxu0
  %v249 = vadd.f32 %v49, %v248
  %250 = vdwg.mxu0
  %251 = vmatpush.bf16.msra.mxu0 0
  %252 = vmatpush.bf16.msra.mxu0 0
  %253 = vmatpush.bf16.msra.mxu0 0
  %254 = vmatpush.bf16.msra.mxu0 0
  %255 = vmatpush.bf16.msra.mxu0 %v158
  %256 = vmatpush.bf16.msra.mxu0 %v154
  %257 = vmatpush.bf16.msra.mxu0 %v150
  %258 = vmatpush.bf16.msra.mxu0 %v146
  %259 = vmatmul.bf16.gmra.mxu0 %v179
  %v260 = vpop.f32.mrf.mxu0
  %v261 = vadd.f32 %v50, %v260
  %v262 = vpop.f32.mrf.mxu0
  %v263 = vadd.f32 %v50, %v262
  %264 = vmatmul.bf16.gmra.mxu0 %v182
  %v265 = vpop.f32.mrf.mxu0
  %v266 = vadd.f32 %v50, %v265
  %v267 = vpop.f32.mrf.mxu0
  %v268 = vadd.f32 %v50, %v267
  %269 = vmatmul.bf16.gmra.mxu0 %v185
  %v270 = vpop.f32.mrf.mxu0
  %v271 = vadd.f32 %v50, %v270
  %v272 = vpop.f32.mrf.mxu0
  %v273 = vadd.f32 %v50, %v272
  %274 = vmatmul.bf16.gmra.mxu0 %v188
  %v275 = vpop.f32.mrf.mxu0
  %v276 = vadd.f32 %v50, %v275
  %v277 = vpop.f32.mrf.mxu0
  %v278 = vadd.f32 %v50, %v277
  %279 = vmatmul.bf16.gmra.mxu0 %v191
  %v280 = vpop.f32.mrf.mxu0
  %v281 = vadd.f32 %v50, %v280
  %v282 = vpop.f32.mrf.mxu0
  %v283 = vadd.f32 %v50, %v282
  %284 = vmatmul.bf16.gmra.mxu0 %v194
  %v285 = vpop.f32.mrf.mxu0
  %v286 = vadd.f32 %v50, %v285
  %v287 = vpop.f32.mrf.mxu0
  %v288 = vadd.f32 %v50, %v287
  %289 = vmatmul.bf16.gmra.mxu0 %v197
  %v290 = vpop.f32.mrf.mxu0
  %v291 = vadd.f32 %v50, %v290
  %v292 = vpop.f32.mrf.mxu0
  %v293 = vadd.f32 %v50, %v292
  %294 = vmatmul.bf16.gmra.mxu0 %v200
  %v295 = vpop.f32.mrf.mxu0
  %v296 = vadd.f32 %v50, %v295
  %v297 = vpop.f32.mrf.mxu0
  %v298 = vadd.f32 %v50, %v297
  %299 = vdwg.mxu0
  %300 = vmatpush.bf16.msra.mxu0 0
  %301 = vmatpush.bf16.msra.mxu0 0
  %302 = vmatpush.bf16.msra.mxu0 0
  %303 = vmatpush.bf16.msra.mxu0 0
  %304 = vmatpush.bf16.msra.mxu0 %v159
  %305 = vmatpush.bf16.msra.mxu0 %v155
  %306 = vmatpush.bf16.msra.mxu0 %v151
  %307 = vmatpush.bf16.msra.mxu0 %v147
  %308 = vmatmul.bf16.gmra.mxu0 %v179
  %v309 = vpop.f32.mrf.mxu0
  %v310 = vadd.f32 %v51, %v309
  %v311 = vpop.f32.mrf.mxu0
  %v312 = vadd.f32 %v51, %v311
  %313 = vmatmul.bf16.gmra.mxu0 %v182
  %v314 = vpop.f32.mrf.mxu0
  %v315 = vadd.f32 %v51, %v314
  %v316 = vpop.f32.mrf.mxu0
  %v317 = vadd.f32 %v51, %v316
  %318 = vmatmul.bf16.gmra.mxu0 %v185
  %v319 = vpop.f32.mrf.mxu0
  %v320 = vadd.f32 %v51, %v319
  %v321 = vpop.f32.mrf.mxu0
  %v322 = vadd.f32 %v51, %v321
  %323 = vmatmul.bf16.gmra.mxu0 %v188
  %v324 = vpop.f32.mrf.mxu0
  %v325 = vadd.f32 %v51, %v324
  %v326 = vpop.f32.mrf.mxu0
  %v327 = vadd.f32 %v51, %v326
  %328 = vmatmul.bf16.gmra.mxu0 %v191
  %v329 = vpop.f32.mrf.mxu0
  %v330 = vadd.f32 %v51, %v329
  %v331 = vpop.f32.mrf.mxu0
  %v332 = vadd.f32 %v51, %v331
  %333 = vmatmul.bf16.gmra.mxu0 %v194
  %v334 = vpop.f32.mrf.mxu0
  %v335 = vadd.f32 %v51, %v334
  %v336 = vpop.f32.mrf.mxu0
  %v337 = vadd.f32 %v51, %v336
  %338 = vmatmul.bf16.gmra.mxu0 %v197
  %v339 = vpop.f32.mrf.mxu0
  %v340 = vadd.f32 %v51, %v339
  %v341 = vpop.f32.mrf.mxu0
  %v342 = vadd.f32 %v51, %v341
  %343 = vmatmul.bf16.gmra.mxu0 %v200
  %v344 = vpop.f32.mrf.mxu0
  %v345 = vadd.f32 %v51, %v344
  %v346 = vpop.f32.mrf.mxu0
  %v347 = vadd.f32 %v51, %v346
  %348 = vdwg.mxu0
  %349 = vmatpush.bf16.msra.mxu0 0
  %350 = vmatpush.bf16.msra.mxu0 0
  %351 = vmatpush.bf16.msra.mxu0 0
  %352 = vmatpush.bf16.msra.mxu0 0
  %353 = vmatpush.bf16.msra.mxu0 %v160
  %354 = vmatpush.bf16.msra.mxu0 %v156
  %355 = vmatpush.bf16.msra.mxu0 %v152
  %356 = vmatpush.bf16.msra.mxu0 %v148
  %357 = vmatmul.bf16.gmra.mxu0 %v179
  %v358 = vpop.f32.mrf.mxu0
  %v359 = vadd.f32 %v52, %v358
  %v360 = vpop.f32.mrf.mxu0
  %v361 = vadd.f32 %v52, %v360
  %362 = vmatmul.bf16.gmra.mxu0 %v182
  %v363 = vpop.f32.mrf.mxu0
  %v364 = vadd.f32 %v52, %v363
  %v365 = vpop.f32.mrf.mxu0
  %v366 = vadd.f32 %v52, %v365
  %367 = vmatmul.bf16.gmra.mxu0 %v185
  %v368 = vpop.f32.mrf.mxu0
  %v369 = vadd.f32 %v52, %v368
  %v370 = vpop.f32.mrf.mxu0
  %v371 = vadd.f32 %v52, %v370
  %372 = vmatmul.bf16.gmra.mxu0 %v188
  %v373 = vpop.f32.mrf.mxu0
  %v374 = vadd.f32 %v52, %v373
  %v375 = vpop.f32.mrf.mxu0
  %v376 = vadd.f32 %v52, %v375
  %377 = vmatmul.bf16.gmra.mxu0 %v191
  %v378 = vpop.f32.mrf.mxu0
  %v379 = vadd.f32 %v52, %v378
  %v380 = vpop.f32.mrf.mxu0
  %v381 = vadd.f32 %v52, %v380
  %382 = vmatmul.bf16.gmra.mxu0 %v194
  %v383 = vpop.f32.mrf.mxu0
  %v384 = vadd.f32 %v52, %v383
  %v385 = vpop.f32.mrf.mxu0
  %v386 = vadd.f32 %v52, %v385
  %387 = vmatmul.bf16.gmra.mxu0 %v197
  %v388 = vpop.f32.mrf.mxu0
  %v389 = vadd.f32 %v52, %v388
  %v390 = vpop.f32.mrf.mxu0
  %v391 = vadd.f32 %v52, %v390
  %392 = vmatmul.bf16.gmra.mxu0 %v200
  %v393 = vpop.f32.mrf.mxu0
  %v394 = vadd.f32 %v52, %v393
  %v395 = vpop.f32.mrf.mxu0
  %v396 = vadd.f32 %v52, %v395
  %397 = vdwg.mxu0
  %v398 = vpack.c.bf16 %v261, %v212
  %v399 = vpack.c.bf16 %v359, %v310
  %v400 = vpack.c.bf16 %v263, %v214
  %v401 = vpack.c.bf16 %v361, %v312
  %v402 = vpack.c.bf16 %v266, %v217
  %v403 = vpack.c.bf16 %v364, %v315
  %v404 = vpack.c.bf16 %v268, %v219
  %v405 = vpack.c.bf16 %v366, %v317
  %v406 = vpack.c.bf16 %v271, %v222
  %v407 = vpack.c.bf16 %v369, %v320
  %v408 = vpack.c.bf16 %v273, %v224
  %v409 = vpack.c.bf16 %v371, %v322
  %v410 = vpack.c.bf16 %v276, %v227
  %v411 = vpack.c.bf16 %v374, %v325
  %v412 = vpack.c.bf16 %v278, %v229
  %v413 = vpack.c.bf16 %v376, %v327
  %v414 = vpack.c.bf16 %v281, %v232
  %v415 = vpack.c.bf16 %v379, %v330
  %v416 = vpack.c.bf16 %v283, %v234
  %v417 = vpack.c.bf16 %v381, %v332
  %v418 = vpack.c.bf16 %v286, %v237
  %v419 = vpack.c.bf16 %v384, %v335
  %v420 = vpack.c.bf16 %v288, %v239
  %v421 = vpack.c.bf16 %v386, %v337
  %v422 = vpack.c.bf16 %v291, %v242
  %v423 = vpack.c.bf16 %v389, %v340
  %v424 = vpack.c.bf16 %v293, %v244
  %v425 = vpack.c.bf16 %v391, %v342
  %v426 = vpack.c.bf16 %v296, %v247
  %v427 = vpack.c.bf16 %v394, %v345
  %v428 = vpack.c.bf16 %v298, %v249
  %v429 = vpack.c.bf16 %v396, %v347
  %430 = vst [vmem:[%s3] sm:$0xff] %v398
  %431 = vst [vmem:[%s3 + $0x8] sm:$0xff] %v399
  %432 = vst [vmem:[%s3 + $0x10] sm:$0xff] %v400
  %433 = vst [vmem:[%s3 + $0x18] sm:$0xff] %v401
  %434 = vst [vmem:[%s3 + $0x20] sm:$0xff] %v402
  %435 = vst [vmem:[%s3 + $0x28] sm:$0xff] %v403
  %436 = vst [vmem:[%s3 + $0x30] sm:$0xff] %v404
  %437 = vst [vmem:[%s3 + $0x38] sm:$0xff] %v405
  %438 = vst [vmem:[%s3 + $0x40] sm:$0xff] %v406
  %439 = vst [vmem:[%s3 + $0x48] sm:$0xff] %v407
  %440 = vst [vmem:[%s3 + $0x50] sm:$0xff] %v408
  %441 = vst [vmem:[%s3 + $0x58] sm:$0xff] %v409
  %442 = vst [vmem:[%s3 + $0x60] sm:$0xff] %v410
  %443 = vst [vmem:[%s3 + $0x68] sm:$0xff] %v411
  %444 = vst [vmem:[%s3 + $0x70] sm:$0xff] %v412
  %445 = vst [vmem:[%s3 + $0x78] sm:$0xff] %v413
  %446 = vst [vmem:[%s3 + $0x80] sm:$0xff] %v414
  %447 = vst [vmem:[%s3 + $0x88] sm:$0xff] %v415
  %448 = vst [vmem:[%s3 + $0x90] sm:$0xff] %v416
  %449 = vst [vmem:[%s3 + $0x98] sm:$0xff] %v417
  %450 = vst [vmem:[%s3 + $0xa0] sm:$0xff] %v418
  %451 = vst [vmem:[%s3 + $0xa8] sm:$0xff] %v419
  %452 = vst [vmem:[%s3 + $0xb0] sm:$0xff] %v420
  %453 = vst [vmem:[%s3 + $0xb8] sm:$0xff] %v421
  %454 = vst [vmem:[%s3 + $0xc0] sm:$0xff] %v422
  %455 = vst [vmem:[%s3 + $0xc8] sm:$0xff] %v423
  %456 = vst [vmem:[%s3 + $0xd0] sm:$0xff] %v424
  %457 = vst [vmem:[%s3 + $0xd8] sm:$0xff] %v425
  %458 = vst [vmem:[%s3 + $0xe0] sm:$0xff] %v426
  %459 = vst [vmem:[%s3 + $0xe8] sm:$0xff] %v427
  %460 = vst [vmem:[%s3 + $0xf0] sm:$0xff] %v428
  %461 = vst [vmem:[%s3 + $0xf8] sm:$0xff] %v429
  // Predicated region
  $region14: #{cdbn_segmentor_forward.5} parent=0 // pred_check
    _
  $region15: #{cdbn_segmentor_forward.5} parent=0 // pred_check_branch
    %463 = sbr.rel (0) target = $region17
  $region16: #{cdbn_segmentor_forward.5} parent=0 // pred_region
    _
  $region17: #{cdbn_segmentor_forward.5} parent=0 // pred_fallthru
    _
  // Predicated region
  $region18: #{cdbn_segmentor_forward.5} parent=0 // pred_check
    _
  $region19: #{cdbn_segmentor_forward.5} parent=0 // pred_check_branch
    %465 = sbr.rel (0) target = $region21
  $region20: #{cdbn_segmentor_forward.5} parent=0 // pred_region
    _
  $region21: #{cdbn_segmentor_forward.5} parent=0 // pred_fallthru
    _

// kernel: cdbn_segmentor_forward.7
$region0: #{cdbn_segmentor_forward.7}
  #allocation0 [shape = 'u32[]', space=smem, size = 0x4, offset = 0x4, fixed_abs, tag = 'smem constant byte address 0x4 - core index']
  #allocation1 [shape = 'u32[72,128]{1,0:T(1,128)}', space=vmem, size = 0x9000, scoped, tag = 'internal scratch']
  %s0 = inlined_call_operand.vmem [shape: bf16[128,96], index: 0, kind: input, shape index: {}]
  %s1 = inlined_call_operand.vmem [shape: bf16[96,512], index: 1, kind: input, shape index: {}]
  %s2 = inlined_call_operand.vmem [shape: f32[1,512], index: 2, kind: input, shape index: {}]
  %s3 = inlined_call_operand.vmem [shape: f32[128,512], index: 3, kind: output, shape index: {}]
  %s4 = sld [smem:[#allocation0]]
  $region22: #{cdbn_segmentor_forward.7} parent=0
    _
  %s6 = ssub.s32 1, %s4
  %s7 = scalar_select 0, %s6, %s4
  // Predicated region
  $region2: #{cdbn_segmentor_forward.7} parent=0 // pred_check
    _
  $region3: #{cdbn_segmentor_forward.7} parent=0 // pred_check_branch
    %9 = sbr.rel (0) target = $region5
  $region4: #{cdbn_segmentor_forward.7} parent=0 // pred_region
    _
  $region5: #{cdbn_segmentor_forward.7} parent=0 // pred_fallthru
    _
  // Predicated region
  $region6: #{cdbn_segmentor_forward.7} parent=0 // pred_check
    _
  $region7: #{cdbn_segmentor_forward.7} parent=0 // pred_check_branch
    %11 = sbr.rel (0) target = $region9
  $region8: #{cdbn_segmentor_forward.7} parent=0 // pred_region
    _
  $region9: #{cdbn_segmentor_forward.7} parent=0 // pred_fallthru
    _
  // Predicated region
  $region10: #{cdbn_segmentor_forward.7} parent=0 // pred_check
    _
  $region11: #{cdbn_segmentor_forward.7} parent=0 // pred_check_branch
    %13 = sbr.rel (0) target = $region13
  $region12: #{cdbn_segmentor_forward.7} parent=0 // pred_region
    _
  $region13: #{cdbn_segmentor_forward.7} parent=0 // pred_fallthru
    _
  %v15 = vld [vmem:[%s0] sm:$0xf]
  %v16 = vld [vmem:[%s0 + $0x4] sm:$0xf]
  %v17 = vld [vmem:[%s0 + $0x8] sm:$0xf]
  %v18 = vld [vmem:[%s0 + $0xc] sm:$0xf]
  %v19 = vld [vmem:[%s0 + $0x10] sm:$0xf]
  %v20 = vld [vmem:[%s0 + $0x14] sm:$0xf]
  %v21 = vld [vmem:[%s0 + $0x18] sm:$0xf]
  %v22 = vld [vmem:[%s0 + $0x1c] sm:$0xf]
  %v23 = vld [vmem:[%s0 + $0x20] sm:$0xf]
  %v24 = vld [vmem:[%s0 + $0x24] sm:$0xf]
  %v25 = vld [vmem:[%s0 + $0x28] sm:$0xf]
  %v26 = vld [vmem:[%s0 + $0x2c] sm:$0xf]
  %v27 = vld [vmem:[%s0 + $0x30] sm:$0xf]
  %v28 = vld [vmem:[%s0 + $0x34] sm:$0xf]
  %v29 = vld [vmem:[%s0 + $0x38] sm:$0xf]
  %v30 = vld [vmem:[%s0 + $0x3c] sm:$0xf]
  %v31 = vld [vmem:[%s1] sm:$0xff]
  %v32 = vld [vmem:[%s1 + $0x8] sm:$0xff]
  %v33 = vld [vmem:[%s1 + $0x10] sm:$0xff]
  %v34 = vld [vmem:[%s1 + $0x18] sm:$0xff]
  %v35 = vld [vmem:[%s1 + $0x20] sm:$0xff]
  %v36 = vld [vmem:[%s1 + $0x28] sm:$0xff]
  %v37 = vld [vmem:[%s1 + $0x30] sm:$0xff]
  %v38 = vld [vmem:[%s1 + $0x38] sm:$0xff]
  %v39 = vld [vmem:[%s1 + $0x40] sm:$0xff]
  %v40 = vld [vmem:[%s1 + $0x48] sm:$0xff]
  %v41 = vld [vmem:[%s1 + $0x50] sm:$0xff]
  %v42 = vld [vmem:[%s1 + $0x58] sm:$0xff]
  %v43 = vld [vmem:[%s1 + $0x60] sm:$0xff]
  %v44 = vld [vmem:[%s1 + $0x68] sm:$0xff]
  %v45 = vld [vmem:[%s1 + $0x70] sm:$0xff]
  %v46 = vld [vmem:[%s1 + $0x78] sm:$0xff]
  %v47 = vld [vmem:[%s1 + $0x80] sm:$0xff]
  %v48 = vld [vmem:[%s1 + $0x88] sm:$0xff]
  %v49 = vld [vmem:[%s1 + $0x90] sm:$0xff]
  %v50 = vld [vmem:[%s1 + $0x98] sm:$0xff]
  %v51 = vld [vmem:[%s1 + $0xa0] sm:$0xff]
  %v52 = vld [vmem:[%s1 + $0xa8] sm:$0xff]
  %v53 = vld [vmem:[%s1 + $0xb0] sm:$0xff]
  %v54 = vld [vmem:[%s1 + $0xb8] sm:$0xff]
  %v55 = vld [vmem:[%s2] sm:$0xf]
  %v57 = vperm.slane %v55, 0
  %v58 = vperm.slane %v55, 1
  %v59 = vperm.slane %v55, 2
  %v60 = vperm.slane %v55, 3
  %v81 = vunpack.c.l.b16 %v15
  %v82 = vunpack.c.l.b16 %v16
  %v83 = vunpack.c.l.b16 %v17
  %v84 = vunpack.c.l.b16 %v18
  %v85 = vunpack.c.l.b16 %v19
  %v86 = vunpack.c.l.b16 %v20
  %v87 = vunpack.c.l.b16 %v21
  %v88 = vunpack.c.l.b16 %v22
  %v89 = vunpack.c.l.b16 %v23
  %v90 = vunpack.c.l.b16 %v24
  %v91 = vunpack.c.l.b16 %v25
  %v92 = vunpack.c.l.b16 %v26
  %v93 = vunpack.c.l.b16 %v27
  %v94 = vunpack.c.l.b16 %v28
  %v95 = vunpack.c.l.b16 %v29
  %v96 = vunpack.c.l.b16 %v30
  %v97 = vpack.c.b16 %v82, %v81
  %v98 = vpack.c.b16 %v84, %v83
  %v99 = vpack.c.b16 %v86, %v85
  %v100 = vpack.c.b16 %v88, %v87
  %v101 = vpack.c.b16 %v90, %v89
  %v102 = vpack.c.b16 %v92, %v91
  %v103 = vpack.c.b16 %v94, %v93
  %v104 = vpack.c.b16 %v96, %v95
  %v129 = vunpack.c.l.b16 %v31
  %v130 = vunpack.c.h.b16 %v31
  %v131 = vunpack.c.l.b16 %v32
  %v132 = vunpack.c.h.b16 %v32
  %v133 = vunpack.c.l.b16 %v33
  %v134 = vunpack.c.h.b16 %v33
  %v135 = vunpack.c.l.b16 %v34
  %v136 = vunpack.c.h.b16 %v34
  %v137 = vunpack.c.l.b16 %v35
  %v138 = vunpack.c.h.b16 %v35
  %v139 = vunpack.c.l.b16 %v36
  %v140 = vunpack.c.h.b16 %v36
  %v141 = vunpack.c.l.b16 %v37
  %v142 = vunpack.c.h.b16 %v37
  %v143 = vunpack.c.l.b16 %v38
  %v144 = vunpack.c.h.b16 %v38
  %v145 = vunpack.c.l.b16 %v39
  %v146 = vunpack.c.h.b16 %v39
  %v147 = vunpack.c.l.b16 %v40
  %v148 = vunpack.c.h.b16 %v40
  %v149 = vunpack.c.l.b16 %v41
  %v150 = vunpack.c.h.b16 %v41
  %v151 = vunpack.c.l.b16 %v42
  %v152 = vunpack.c.h.b16 %v42
  %v153 = vunpack.c.l.b16 %v43
  %v154 = vunpack.c.h.b16 %v43
  %v155 = vunpack.c.l.b16 %v44
  %v156 = vunpack.c.h.b16 %v44
  %v157 = vunpack.c.l.b16 %v45
  %v158 = vunpack.c.h.b16 %v45
  %v159 = vunpack.c.l.b16 %v46
  %v160 = vunpack.c.h.b16 %v46
  %v161 = vunpack.c.l.b16 %v47
  %v162 = vunpack.c.h.b16 %v47
  %v163 = vunpack.c.l.b16 %v48
  %v164 = vunpack.c.h.b16 %v48
  %v165 = vunpack.c.l.b16 %v49
  %v166 = vunpack.c.h.b16 %v49
  %v167 = vunpack.c.l.b16 %v50
  %v168 = vunpack.c.h.b16 %v50
  %v169 = vunpack.c.l.b16 %v51
  %v170 = vunpack.c.h.b16 %v51
  %v171 = vunpack.c.l.b16 %v52
  %v172 = vunpack.c.h.b16 %v52
  %v173 = vunpack.c.l.b16 %v53
  %v174 = vunpack.c.h.b16 %v53
  %v175 = vunpack.c.l.b16 %v54
  %v176 = vunpack.c.h.b16 %v54
  %v177 = vpack.c.b16 %v133, %v129
  %v178 = vpack.c.b16 %v134, %v130
  %v179 = vpack.c.b16 %v135, %v131
  %v180 = vpack.c.b16 %v136, %v132
  %v181 = vpack.c.b16 %v141, %v137
  %v182 = vpack.c.b16 %v142, %v138
  %v183 = vpack.c.b16 %v143, %v139
  %v184 = vpack.c.b16 %v144, %v140
  %v185 = vpack.c.b16 %v149, %v145
  %v186 = vpack.c.b16 %v150, %v146
  %v187 = vpack.c.b16 %v151, %v147
  %v188 = vpack.c.b16 %v152, %v148
  %v189 = vpack.c.b16 %v157, %v153
  %v190 = vpack.c.b16 %v158, %v154
  %v191 = vpack.c.b16 %v159, %v155
  %v192 = vpack.c.b16 %v160, %v156
  %v193 = vpack.c.b16 %v165, %v161
  %v194 = vpack.c.b16 %v166, %v162
  %v195 = vpack.c.b16 %v167, %v163
  %v196 = vpack.c.b16 %v168, %v164
  %v197 = vpack.c.b16 %v173, %v169
  %v198 = vpack.c.b16 %v174, %v170
  %v199 = vpack.c.b16 %v175, %v171
  %v200 = vpack.c.b16 %v176, %v172
  %vm225 = vcmask 785408
  %v227 = vsel %vm225, %v97, 0
  %v230 = vsel %vm225, %v98, 0
  %v233 = vsel %vm225, %v99, 0
  %v236 = vsel %vm225, %v100, 0
  %v239 = vsel %vm225, %v101, 0
  %v242 = vsel %vm225, %v102, 0
  %v245 = vsel %vm225, %v103, 0
  %v248 = vsel %vm225, %v104, 0
  %250 = vmatpush.bf16.msra.mxu0 0
  %251 = vmatpush.bf16.msra.mxu0 0
  %252 = vmatpush.bf16.msra.mxu0 %v197
  %253 = vmatpush.bf16.msra.mxu0 %v193
  %254 = vmatpush.bf16.msra.mxu0 %v189
  %255 = vmatpush.bf16.msra.mxu0 %v185
  %256 = vmatpush.bf16.msra.mxu0 %v181
  %257 = vmatpush.bf16.msra.mxu0 %v177
  %258 = vmatmul.bf16.gmra.mxu0 %v227
  %v259 = vpop.f32.mrf.mxu0
  %v260 = vadd.f32 %v57, %v259
  %v261 = vpop.f32.mrf.mxu0
  %v262 = vadd.f32 %v57, %v261
  %263 = vmatmul.bf16.gmra.mxu0 %v230
  %v264 = vpop.f32.mrf.mxu0
  %v265 = vadd.f32 %v57, %v264
  %v266 = vpop.f32.mrf.mxu0
  %v267 = vadd.f32 %v57, %v266
  %268 = vmatmul.bf16.gmra.mxu0 %v233
  %v269 = vpop.f32.mrf.mxu0
  %v270 = vadd.f32 %v57, %v269
  %v271 = vpop.f32.mrf.mxu0
  %v272 = vadd.f32 %v57, %v271
  %273 = vmatmul.bf16.gmra.mxu0 %v236
  %v274 = vpop.f32.mrf.mxu0
  %v275 = vadd.f32 %v57, %v274
  %v276 = vpop.f32.mrf.mxu0
  %v277 = vadd.f32 %v57, %v276
  %278 = vmatmul.bf16.gmra.mxu0 %v239
  %v279 = vpop.f32.mrf.mxu0
  %v280 = vadd.f32 %v57, %v279
  %v281 = vpop.f32.mrf.mxu0
  %v282 = vadd.f32 %v57, %v281
  %283 = vmatmul.bf16.gmra.mxu0 %v242
  %v284 = vpop.f32.mrf.mxu0
  %v285 = vadd.f32 %v57, %v284
  %v286 = vpop.f32.mrf.mxu0
  %v287 = vadd.f32 %v57, %v286
  %288 = vmatmul.bf16.gmra.mxu0 %v245
  %v289 = vpop.f32.mrf.mxu0
  %v290 = vadd.f32 %v57, %v289
  %v291 = vpop.f32.mrf.mxu0
  %v292 = vadd.f32 %v57, %v291
  %293 = vmatmul.bf16.gmra.mxu0 %v248
  %v294 = vpop.f32.mrf.mxu0
  %v295 = vadd.f32 %v57, %v294
  %v296 = vpop.f32.mrf.mxu0
  %v297 = vadd.f32 %v57, %v296
  %298 = vdwg.mxu0
  %299 = vmatpush.bf16.msra.mxu0 0
  %300 = vmatpush.bf16.msra.mxu0 0
  %301 = vmatpush.bf16.msra.mxu0 %v198
  %302 = vmatpush.bf16.msra.mxu0 %v194
  %303 = vmatpush.bf16.msra.mxu0 %v190
  %304 = vmatpush.bf16.msra.mxu0 %v186
  %305 = vmatpush.bf16.msra.mxu0 %v182
  %306 = vmatpush.bf16.msra.mxu0 %v178
  %307 = vmatmul.bf16.gmra.mxu0 %v227
  %v308 = vpop.f32.mrf.mxu0
  %v309 = vadd.f32 %v58, %v308
  %v310 = vpop.f32.mrf.mxu0
  %v311 = vadd.f32 %v58, %v310
  %312 = vmatmul.bf16.gmra.mxu0 %v230
  %v313 = vpop.f32.mrf.mxu0
  %v314 = vadd.f32 %v58, %v313
  %v315 = vpop.f32.mrf.mxu0
  %v316 = vadd.f32 %v58, %v315
  %317 = vmatmul.bf16.gmra.mxu0 %v233
  %v318 = vpop.f32.mrf.mxu0
  %v319 = vadd.f32 %v58, %v318
  %v320 = vpop.f32.mrf.mxu0
  %v321 = vadd.f32 %v58, %v320
  %322 = vmatmul.bf16.gmra.mxu0 %v236
  %v323 = vpop.f32.mrf.mxu0
  %v324 = vadd.f32 %v58, %v323
  %v325 = vpop.f32.mrf.mxu0
  %v326 = vadd.f32 %v58, %v325
  %327 = vmatmul.bf16.gmra.mxu0 %v239
  %v328 = vpop.f32.mrf.mxu0
  %v329 = vadd.f32 %v58, %v328
  %v330 = vpop.f32.mrf.mxu0
  %v331 = vadd.f32 %v58, %v330
  %332 = vmatmul.bf16.gmra.mxu0 %v242
  %v333 = vpop.f32.mrf.mxu0
  %v334 = vadd.f32 %v58, %v333
  %v335 = vpop.f32.mrf.mxu0
  %v336 = vadd.f32 %v58, %v335
  %337 = vmatmul.bf16.gmra.mxu0 %v245
  %v338 = vpop.f32.mrf.mxu0
  %v339 = vadd.f32 %v58, %v338
  %v340 = vpop.f32.mrf.mxu0
  %v341 = vadd.f32 %v58, %v340
  %342 = vmatmul.bf16.gmra.mxu0 %v248
  %v343 = vpop.f32.mrf.mxu0
  %v344 = vadd.f32 %v58, %v343
  %v345 = vpop.f32.mrf.mxu0
  %v346 = vadd.f32 %v58, %v345
  %347 = vdwg.mxu0
  %348 = vmatpush.bf16.msra.mxu0 0
  %349 = vmatpush.bf16.msra.mxu0 0
  %350 = vmatpush.bf16.msra.mxu0 %v199
  %351 = vmatpush.bf16.msra.mxu0 %v195
  %352 = vmatpush.bf16.msra.mxu0 %v191
  %353 = vmatpush.bf16.msra.mxu0 %v187
  %354 = vmatpush.bf16.msra.mxu0 %v183
  %355 = vmatpush.bf16.msra.mxu0 %v179
  %356 = vmatmul.bf16.gmra.mxu0 %v227
  %v357 = vpop.f32.mrf.mxu0
  %v358 = vadd.f32 %v59, %v357
  %v359 = vpop.f32.mrf.mxu0
  %v360 = vadd.f32 %v59, %v359
  %361 = vmatmul.bf16.gmra.mxu0 %v230
  %v362 = vpop.f32.mrf.mxu0
  %v363 = vadd.f32 %v59, %v362
  %v364 = vpop.f32.mrf.mxu0
  %v365 = vadd.f32 %v59, %v364
  %366 = vmatmul.bf16.gmra.mxu0 %v233
  %v367 = vpop.f32.mrf.mxu0
  %v368 = vadd.f32 %v59, %v367
  %v369 = vpop.f32.mrf.mxu0
  %v370 = vadd.f32 %v59, %v369
  %371 = vmatmul.bf16.gmra.mxu0 %v236
  %v372 = vpop.f32.mrf.mxu0
  %v373 = vadd.f32 %v59, %v372
  %v374 = vpop.f32.mrf.mxu0
  %v375 = vadd.f32 %v59, %v374
  %376 = vmatmul.bf16.gmra.mxu0 %v239
  %v377 = vpop.f32.mrf.mxu0
  %v378 = vadd.f32 %v59, %v377
  %v379 = vpop.f32.mrf.mxu0
  %v380 = vadd.f32 %v59, %v379
  %381 = vmatmul.bf16.gmra.mxu0 %v242
  %v382 = vpop.f32.mrf.mxu0
  %v383 = vadd.f32 %v59, %v382
  %v384 = vpop.f32.mrf.mxu0
  %v385 = vadd.f32 %v59, %v384
  %386 = vmatmul.bf16.gmra.mxu0 %v245
  %v387 = vpop.f32.mrf.mxu0
  %v388 = vadd.f32 %v59, %v387
  %v389 = vpop.f32.mrf.mxu0
  %v390 = vadd.f32 %v59, %v389
  %391 = vmatmul.bf16.gmra.mxu0 %v248
  %v392 = vpop.f32.mrf.mxu0
  %v393 = vadd.f32 %v59, %v392
  %v394 = vpop.f32.mrf.mxu0
  %v395 = vadd.f32 %v59, %v394
  %396 = vdwg.mxu0
  %397 = vmatpush.bf16.msra.mxu0 0
  %398 = vmatpush.bf16.msra.mxu0 0
  %399 = vmatpush.bf16.msra.mxu0 %v200
  %400 = vmatpush.bf16.msra.mxu0 %v196
  %401 = vmatpush.bf16.msra.mxu0 %v192
  %402 = vmatpush.bf16.msra.mxu0 %v188
  %403 = vmatpush.bf16.msra.mxu0 %v184
  %404 = vmatpush.bf16.msra.mxu0 %v180
  %405 = vmatmul.bf16.gmra.mxu0 %v227
  %v406 = vpop.f32.mrf.mxu0
  %v407 = vadd.f32 %v60, %v406
  %v408 = vpop.f32.mrf.mxu0
  %v409 = vadd.f32 %v60, %v408
  %410 = vmatmul.bf16.gmra.mxu0 %v230
  %v411 = vpop.f32.mrf.mxu0
  %v412 = vadd.f32 %v60, %v411
  %v413 = vpop.f32.mrf.mxu0
  %v414 = vadd.f32 %v60, %v413
  %415 = vmatmul.bf16.gmra.mxu0 %v233
  %v416 = vpop.f32.mrf.mxu0
  %v417 = vadd.f32 %v60, %v416
  %v418 = vpop.f32.mrf.mxu0
  %v419 = vadd.f32 %v60, %v418
  %420 = vmatmul.bf16.gmra.mxu0 %v236
  %v421 = vpop.f32.mrf.mxu0
  %v422 = vadd.f32 %v60, %v421
  %v423 = vpop.f32.mrf.mxu0
  %v424 = vadd.f32 %v60, %v423
  %425 = vmatmul.bf16.gmra.mxu0 %v239
  %v426 = vpop.f32.mrf.mxu0
  %v427 = vadd.f32 %v60, %v426
  %v428 = vpop.f32.mrf.mxu0
  %v429 = vadd.f32 %v60, %v428
  %430 = vmatmul.bf16.gmra.mxu0 %v242
  %v431 = vpop.f32.mrf.mxu0
  %v432 = vadd.f32 %v60, %v431
  %v433 = vpop.f32.mrf.mxu0
  %v434 = vadd.f32 %v60, %v433
  %435 = vmatmul.bf16.gmra.mxu0 %v245
  %v436 = vpop.f32.mrf.mxu0
  %v437 = vadd.f32 %v60, %v436
  %v438 = vpop.f32.mrf.mxu0
  %v439 = vadd.f32 %v60, %v438
  %440 = vmatmul.bf16.gmra.mxu0 %v248
  %v441 = vpop.f32.mrf.mxu0
  %v442 = vadd.f32 %v60, %v441
  %v443 = vpop.f32.mrf.mxu0
  %v444 = vadd.f32 %v60, %v443
  %445 = vdwg.mxu0
  %446 = vst [vmem:[%s3] sm:$0xff] %v260
  %447 = vst [vmem:[%s3 + $0x8] sm:$0xff] %v309
  %448 = vst [vmem:[%s3 + $0x10] sm:$0xff] %v358
  %449 = vst [vmem:[%s3 + $0x18] sm:$0xff] %v407
  %450 = vst [vmem:[%s3 + $0x20] sm:$0xff] %v262
  %451 = vst [vmem:[%s3 + $0x28] sm:$0xff] %v311
  %452 = vst [vmem:[%s3 + $0x30] sm:$0xff] %v360
  %453 = vst [vmem:[%s3 + $0x38] sm:$0xff] %v409
  %454 = vst [vmem:[%s3 + $0x40] sm:$0xff] %v265
  %455 = vst [vmem:[%s3 + $0x48] sm:$0xff] %v314
  %456 = vst [vmem:[%s3 + $0x50] sm:$0xff] %v363
  %457 = vst [vmem:[%s3 + $0x58] sm:$0xff] %v412
  %458 = vst [vmem:[%s3 + $0x60] sm:$0xff] %v267
  %459 = vst [vmem:[%s3 + $0x68] sm:$0xff] %v316
  %460 = vst [vmem:[%s3 + $0x70] sm:$0xff] %v365
  %461 = vst [vmem:[%s3 + $0x78] sm:$0xff] %v414
  %462 = vst [vmem:[%s3 + $0x80] sm:$0xff] %v270
  %463 = vst [vmem:[%s3 + $0x88] sm:$0xff] %v319
  %464 = vst [vmem:[%s3 + $0x90] sm:$0xff] %v368
  %465 = vst [vmem:[%s3 + $0x98] sm:$0xff] %v417
  %466 = vst [vmem:[%s3 + $0xa0] sm:$0xff] %v272
  %467 = vst [vmem:[%s3 + $0xa8] sm:$0xff] %v321
  %468 = vst [vmem:[%s3 + $0xb0] sm:$0xff] %v370
  %469 = vst [vmem:[%s3 + $0xb8] sm:$0xff] %v419
  %470 = vst [vmem:[%s3 + $0xc0] sm:$0xff] %v275
  %471 = vst [vmem:[%s3 + $0xc8] sm:$0xff] %v324
  %472 = vst [vmem:[%s3 + $0xd0] sm:$0xff] %v373
  %473 = vst [vmem:[%s3 + $0xd8] sm:$0xff] %v422
  %474 = vst [vmem:[%s3 + $0xe0] sm:$0xff] %v277
  %475 = vst [vmem:[%s3 + $0xe8] sm:$0xff] %v326
  %476 = vst [vmem:[%s3 + $0xf0] sm:$0xff] %v375
  %477 = vst [vmem:[%s3 + $0xf8] sm:$0xff] %v424
  %478 = vst [vmem:[%s3 + $0x100] sm:$0xff] %v280
  %479 = vst [vmem:[%s3 + $0x108] sm:$0xff] %v329
  %480 = vst [vmem:[%s3 + $0x110] sm:$0xff] %v378
  %481 = vst [vmem:[%s3 + $0x118] sm:$0xff] %v427
  %482 = vst [vmem:[%s3 + $0x120] sm:$0xff] %v282
  %483 = vst [vmem:[%s3 + $0x128] sm:$0xff] %v331
  %484 = vst [vmem:[%s3 + $0x130] sm:$0xff] %v380
  %485 = vst [vmem:[%s3 + $0x138] sm:$0xff] %v429
  %486 = vst [vmem:[%s3 + $0x140] sm:$0xff] %v285
  %487 = vst [vmem:[%s3 + $0x148] sm:$0xff] %v334
  %488 = vst [vmem:[%s3 + $0x150] sm:$0xff] %v383
  %489 = vst [vmem:[%s3 + $0x158] sm:$0xff] %v432
  %490 = vst [vmem:[%s3 + $0x160] sm:$0xff] %v287
  %491 = vst [vmem:[%s3 + $0x168] sm:$0xff] %v336
  %492 = vst [vmem:[%s3 + $0x170] sm:$0xff] %v385
  %493 = vst [vmem:[%s3 + $0x178] sm:$0xff] %v434
  %494 = vst [vmem:[%s3 + $0x180] sm:$0xff] %v290
  %495 = vst [vmem:[%s3 + $0x188] sm:$0xff] %v339
  %496 = vst [vmem:[%s3 + $0x190] sm:$0xff] %v388
  %497 = vst [vmem:[%s3 + $0x198] sm:$0xff] %v437
  %498 = vst [vmem:[%s3 + $0x1a0] sm:$0xff] %v292
  %499 = vst [vmem:[%s3 + $0x1a8] sm:$0xff] %v341
  %500 = vst [vmem:[%s3 + $0x1b0] sm:$0xff] %v390
  %501 = vst [vmem:[%s3 + $0x1b8] sm:$0xff] %v439
  %502 = vst [vmem:[%s3 + $0x1c0] sm:$0xff] %v295
  %503 = vst [vmem:[%s3 + $0x1c8] sm:$0xff] %v344
  %504 = vst [vmem:[%s3 + $0x1d0] sm:$0xff] %v393
  %505 = vst [vmem:[%s3 + $0x1d8] sm:$0xff] %v442
  %506 = vst [vmem:[%s3 + $0x1e0] sm:$0xff] %v297
  %507 = vst [vmem:[%s3 + $0x1e8] sm:$0xff] %v346
  %508 = vst [vmem:[%s3 + $0x1f0] sm:$0xff] %v395
  %509 = vst [vmem:[%s3 + $0x1f8] sm:$0xff] %v444
  // Predicated region
  $region14: #{cdbn_segmentor_forward.7} parent=0 // pred_check
    _
  $region15: #{cdbn_segmentor_forward.7} parent=0 // pred_check_branch
    %511 = sbr.rel (0) target = $region17
  $region16: #{cdbn_segmentor_forward.7} parent=0 // pred_region
    _
  $region17: #{cdbn_segmentor_forward.7} parent=0 // pred_fallthru
    _
  // Predicated region
  $region18: #{cdbn_segmentor_forward.7} parent=0 // pred_check
    _
  $region19: #{cdbn_segmentor_forward.7} parent=0 // pred_check_branch
    %513 = sbr.rel (0) target = $region21
  $region20: #{cdbn_segmentor_forward.7} parent=0 // pred_region
    _
  $region21: #{cdbn_segmentor_forward.7} parent=0 // pred_fallthru
    _

// kernel: cdbn_segmentor_forward.6
$region0: #{cdbn_segmentor_forward.6}
  #allocation0 [shape = 'u32[]', space=smem, size = 0x4, offset = 0x4, fixed_abs, tag = 'smem constant byte address 0x4 - core index']
  #allocation1 [shape = 'u32[72,128]{1,0:T(1,128)}', space=vmem, size = 0x9000, scoped, tag = 'internal scratch']
  %s0 = inlined_call_operand.vmem [shape: bf16[512,128], index: 0, kind: input, shape index: {}]
  %s1 = inlined_call_operand.vmem [shape: bf16[128,512], index: 1, kind: input, shape index: {}]
  %s2 = inlined_call_operand.vmem [shape: f32[1,512], index: 2, kind: input, shape index: {}]
  %s3 = inlined_call_operand.vmem [shape: f32[512,512], index: 3, kind: output, shape index: {}]
  %s4 = sld [smem:[#allocation0]]
  $region45: #{cdbn_segmentor_forward.6} parent=0
    _
  %s6 = ssub.s32 1, %s4
  %s7 = scalar_select 0, %s6, %s4
  loop: start=0, step=1, limit=4
  $region2: #{cdbn_segmentor_forward.6} parent=0 // loop_pre_header
    _
  $region3: #{cdbn_segmentor_forward.6} parent=0 // loop_header
    %s9 = sphi 0, %s13
    %p10 = scmp.ge.s32.totalorder %s9, 4
    %s19 = sphi 0, %s21
    %s22 = sphi 0, %s19
    %s23 = sphi 0, %s22
    %s39 = sphi 0, %s23
    %s43 = sphi 0, %s43
    %s45 = sphi 0, %s43
    %s46 = sphi 0, %s45
    %s60 = sphi 0, %s46
    %s64 = sphi 0, %s64
    %s66 = sphi 0, %s64
    %s67 = sphi 0, %s66
    %s81 = sphi 0, %s67
    %s87 = sphi 0, %s89
    %s90 = sphi 0, %s87
    %s91 = sphi 0, %s90
    %s107 = sphi 0, %s91
  $region4: #{cdbn_segmentor_forward.6} parent=0 // loop_header_branch
    %12 = sbr.rel (%p10) target = $region8
  $region5: #{cdbn_segmentor_forward.6} parent=0 // loop_body
    %s14 = ssub.s32 %s9, 1
    %s15 = ssub.s32 %s9, 2
    %s16 = sadd.s32 %s9, 1
    %s17 = ssub.s32 %s9, %s16
    %p18 = scmp.eq.s32.totalorder %s17, 0
    %s20 = sadd.s32 %s19, 1
    %s21 = scalar_select %p18, %s19, %s20
    %p24 = pneg %p18
    %p25 = scmp.eq.s32.totalorder %s9, 1
    %p26 = por %p24, %p25
    %p27 = scmp.ne.s32.totalorder %s19, %s22
    %p28 = scmp.eq.s32.totalorder %s9, 0
    %p29 = por %p27, %p28
    %p30 = scmp.ne.s32.totalorder %s19, %s22
    %p31 = scmp.eq.s32.totalorder %s14, 1
    %p32 = por %p30, %p31
    %p33 = scmp.ne.s32.totalorder %s22, %s23
    %p34 = scmp.eq.s32.totalorder %s14, 0
    %p35 = por %p33, %p34
    %p36 = scmp.ne.s32.totalorder %s22, %s23
    %p37 = scmp.eq.s32.totalorder %s15, 1
    %p38 = por %p36, %p37
    %p40 = scmp.ne.s32.totalorder %s23, %s39
    %p41 = scmp.eq.s32.totalorder %s15, 0
    %p42 = por %p40, %p41
    %s44 = sadd.s32 %s43, 1
    %p47 = scmp.eq.s32.totalorder %s9, 1
    %p48 = scmp.ne.s32.totalorder %s43, %s45
    %p49 = scmp.eq.s32.totalorder %s9, 0
    %p50 = por %p48, %p49
    %p51 = scmp.ne.s32.totalorder %s43, %s45
    %p52 = scmp.eq.s32.totalorder %s14, 1
    %p53 = por %p51, %p52
    %p54 = scmp.ne.s32.totalorder %s45, %s46
    %p55 = scmp.eq.s32.totalorder %s14, 0
    %p56 = por %p54, %p55
    %p57 = scmp.ne.s32.totalorder %s45, %s46
    %p58 = scmp.eq.s32.totalorder %s15, 1
    %p59 = por %p57, %p58
    %p61 = scmp.ne.s32.totalorder %s46, %s60
    %p62 = scmp.eq.s32.totalorder %s15, 0
    %p63 = por %p61, %p62
    %s65 = sadd.s32 %s64, 1
    %p68 = scmp.eq.s32.totalorder %s9, 1
    %p69 = scmp.ne.s32.totalorder %s64, %s66
    %p70 = scmp.eq.s32.totalorder %s9, 0
    %p71 = por %p69, %p70
    %p72 = scmp.ne.s32.totalorder %s64, %s66
    %p73 = scmp.eq.s32.totalorder %s14, 1
    %p74 = por %p72, %p73
    %p75 = scmp.ne.s32.totalorder %s66, %s67
    %p76 = scmp.eq.s32.totalorder %s14, 0
    %p77 = por %p75, %p76
    %p78 = scmp.ne.s32.totalorder %s66, %s67
    %p79 = scmp.eq.s32.totalorder %s15, 1
    %p80 = por %p78, %p79
    %p82 = scmp.ne.s32.totalorder %s67, %s81
    %p83 = scmp.eq.s32.totalorder %s15, 0
    %p84 = por %p82, %p83
    %s85 = ssub.s32 %s9, %s16
    %p86 = scmp.eq.s32.totalorder %s85, 0
    %s88 = sadd.s32 %s87, 1
    %s89 = scalar_select %p86, %s87, %s88
    %p92 = pneg %p86
    %p93 = scmp.eq.s32.totalorder %s9, 1
    %p94 = por %p92, %p93
    %p95 = scmp.ne.s32.totalorder %s87, %s90
    %p96 = scmp.eq.s32.totalorder %s9, 0
    %p97 = por %p95, %p96
    %p98 = scmp.ne.s32.totalorder %s87, %s90
    %p99 = scmp.eq.s32.totalorder %s14, 1
    %p100 = por %p98, %p99
    %p101 = scmp.ne.s32.totalorder %s90, %s91
    %p102 = scmp.eq.s32.totalorder %s14, 0
    %p103 = por %p101, %p102
    %p104 = scmp.ne.s32.totalorder %s90, %s91
    %p105 = scmp.eq.s32.totalorder %s15, 1
    %p106 = por %p104, %p105
    %p108 = scmp.ne.s32.totalorder %s91, %s107
    %p109 = scmp.eq.s32.totalorder %s15, 0
    %p110 = por %p108, %p109
    %p111 = scmp.le.s32.totalorder 1, %s9
    %p112 = scmp.lt.s32.totalorder %s9, 3
    %p113 = pnand %p111, %p112
    %p114 = pneg %p113
    // Predicated region
    $region9: #{cdbn_segmentor_forward.6} parent=5 // pred_check
      _
    $region10: #{cdbn_segmentor_forward.6} parent=5 // pred_check_branch
      %116 = sbr.rel (%p113) target = $region12
    $region11: #{cdbn_segmentor_forward.6} parent=5 // pred_region
      %s117 = ssub.s32 %s9, 1
      // Predicated region
      $region13: #{cdbn_segmentor_forward.6} parent=11 // pred_check
        %p118 = pneg %p56
      $region14: #{cdbn_segmentor_forward.6} parent=11 // pred_check_branch
        %120 = sbr.rel (%p118) target = $region16
      $region15: #{cdbn_segmentor_forward.6} parent=11 // pred_region
        _
      $region16: #{cdbn_segmentor_forward.6} parent=11 // pred_fallthru
        _
      // Predicated region
      $region17: #{cdbn_segmentor_forward.6} parent=11 // pred_check
        %p121 = pneg %p77
      $region18: #{cdbn_segmentor_forward.6} parent=11 // pred_check_branch
        %123 = sbr.rel (%p121) target = $region20
      $region19: #{cdbn_segmentor_forward.6} parent=11 // pred_region
        _
      $region20: #{cdbn_segmentor_forward.6} parent=11 // pred_fallthru
        _
    $region12: #{cdbn_segmentor_forward.6} parent=5 // pred_fallthru
      _
    %p124 = scmp.lt.s32.totalorder %s9, 2
    // Predicated region
    $region21: #{cdbn_segmentor_forward.6} parent=5 // pred_check
      %p125 = pneg %p124
    $region22: #{cdbn_segmentor_forward.6} parent=5 // pred_check_branch
      %127 = sbr.rel (%p125) target = $region24
    $region23: #{cdbn_segmentor_forward.6} parent=5 // pred_region
      // Predicated region
      $region25: #{cdbn_segmentor_forward.6} parent=23 // pred_check
        %p128 = pneg %p29
      $region26: #{cdbn_segmentor_forward.6} parent=23 // pred_check_branch
        %130 = sbr.rel (%p128) target = $region28
      $region27: #{cdbn_segmentor_forward.6} parent=23 // pred_region
        %s131 = smul.u32 32, %s9
        %p132 = scmp.lt.s32.totalorder %s131, 63
        %s133 = scalar_select %p132, %s131, 63
        %s134 = smul.addr %s133, 4
        %s135 = scalar_lea.vmem %s0, %s134
        %s136 = smul.u32 32, %s9
      $region28: #{cdbn_segmentor_forward.6} parent=23 // pred_fallthru
        _
    $region24: #{cdbn_segmentor_forward.6} parent=5 // pred_fallthru
      _
    %p137 = scmp.le.s32.totalorder 1, %s9
    %p138 = scmp.lt.s32.totalorder %s9, 3
    %p139 = pnand %p137, %p138
    %p140 = pneg %p139
    // Predicated region
    $region29: #{cdbn_segmentor_forward.6} parent=5 // pred_check
      _
    $region30: #{cdbn_segmentor_forward.6} parent=5 // pred_check_branch
      %142 = sbr.rel (%p139) target = $region32
    $region31: #{cdbn_segmentor_forward.6} parent=5 // pred_region
      %s143 = ssub.s32 %s9, 1
      %s144 = smul.u32 32, %s14
      %p145 = scmp.lt.s32.totalorder %s144, 63
      %s146 = scalar_select %p145, %s144, 63
      %s147 = smul.addr %s146, 4
      %s148 = scalar_lea.vmem %s0, %s147
      %p149 = pneg %p35
      %p150 = pneg %p32
      %p151 = pneg %p56
      %p152 = pneg %p53
      %p153 = pneg %p77
      %p154 = pneg %p74
      %p155 = pneg %p103
      %p156 = pneg %p100
      %s157 = smul.u32 32, %s14
      %p158 = scmp.lt.s32.totalorder %s157, 63
      %s159 = scalar_select %p158, %s157, 63
      %s160 = smul.addr %s159, 4
      %s161 = smul.addr %s160, 8
      %s162 = scalar_lea.vmem %s3, %s161
      %s163 = smul.u32 32, %s14
      %p164 = scmp.lt.s32.totalorder %s163, 63
      %s165 = scalar_select %p164, %s163, 63
      %s166 = smul.addr %s165, 4
      %s167 = scalar_lea.vmem %s0, %s166
      %s168 = smul.u32 32, %s14
      %s169 = smul.u32 32, %s14
      %p170 = scmp.lt.s32.totalorder %s169, 63
      %s171 = scalar_select %p170, %s169, 63
      %s172 = smul.addr %s171, 4
      %s173 = smul.addr %s172, 8
      %s174 = scalar_lea.vmem %s3, %s173
      %s175 = smul.u32 32, %s14
      %v176 = vld [vmem:[%s167] sm:$0xf]
      %v177 = vld [vmem:[%s167 + $0x4] sm:$0xf]
      %v178 = vld [vmem:[%s167 + $0x8] sm:$0xf]
      %v179 = vld [vmem:[%s167 + $0xc] sm:$0xf]
      %v180 = vld [vmem:[%s167 + $0x10] sm:$0xf]
      %v181 = vld [vmem:[%s167 + $0x14] sm:$0xf]
      %v182 = vld [vmem:[%s167 + $0x18] sm:$0xf]
      %v183 = vld [vmem:[%s167 + $0x1c] sm:$0xf]
      %v184 = vld [vmem:[%s167 + $0x20] sm:$0xf]
      %v185 = vld [vmem:[%s167 + $0x24] sm:$0xf]
      %v186 = vld [vmem:[%s167 + $0x28] sm:$0xf]
      %v187 = vld [vmem:[%s167 + $0x2c] sm:$0xf]
      %v188 = vld [vmem:[%s167 + $0x30] sm:$0xf]
      %v189 = vld [vmem:[%s167 + $0x34] sm:$0xf]
      %v190 = vld [vmem:[%s167 + $0x38] sm:$0xf]
      %v191 = vld [vmem:[%s167 + $0x3c] sm:$0xf]
      %v192 = vld [vmem:[%s167 + $0x40] sm:$0xf]
      %v193 = vld [vmem:[%s167 + $0x44] sm:$0xf]
      %v194 = vld [vmem:[%s167 + $0x48] sm:$0xf]
      %v195 = vld [vmem:[%s167 + $0x4c] sm:$0xf]
      %v196 = vld [vmem:[%s167 + $0x50] sm:$0xf]
      %v197 = vld [vmem:[%s167 + $0x54] sm:$0xf]
      %v198 = vld [vmem:[%s167 + $0x58] sm:$0xf]
      %v199 = vld [vmem:[%s167 + $0x5c] sm:$0xf]
      %v200 = vld [vmem:[%s167 + $0x60] sm:$0xf]
      %v201 = vld [vmem:[%s167 + $0x64] sm:$0xf]
      %v202 = vld [vmem:[%s167 + $0x68] sm:$0xf]
      %v203 = vld [vmem:[%s167 + $0x6c] sm:$0xf]
      %v204 = vld [vmem:[%s167 + $0x70] sm:$0xf]
      %v205 = vld [vmem:[%s167 + $0x74] sm:$0xf]
      %v206 = vld [vmem:[%s167 + $0x78] sm:$0xf]
      %v207 = vld [vmem:[%s167 + $0x7c] sm:$0xf]
      %v208 = vld [vmem:[%s1] sm:$0xff]
      %v209 = vld [vmem:[%s1 + $0x8] sm:$0xff]
      %v210 = vld [vmem:[%s1 + $0x10] sm:$0xff]
      %v211 = vld [vmem:[%s1 + $0x18] sm:$0xff]
      %v212 = vld [vmem:[%s1 + $0x20] sm:$0xff]
      %v213 = vld [vmem:[%s1 + $0x28] sm:$0xff]
      %v214 = vld [vmem:[%s1 + $0x30] sm:$0xff]
      %v215 = vld [vmem:[%s1 + $0x38] sm:$0xff]
      %v216 = vld [vmem:[%s1 + $0x40] sm:$0xff]
      %v217 = vld [vmem:[%s1 + $0x48] sm:$0xff]
      %v218 = vld [vmem:[%s1 + $0x50] sm:$0xff]
      %v219 = vld [vmem:[%s1 + $0x58] sm:$0xff]
      %v220 = vld [vmem:[%s1 + $0x60] sm:$0xff]
      %v221 = vld [vmem:[%s1 + $0x68] sm:$0xff]
      %v222 = vld [vmem:[%s1 + $0x70] sm:$0xff]
      %v223 = vld [vmem:[%s1 + $0x78] sm:$0xff]
      %v224 = vld [vmem:[%s1 + $0x80] sm:$0xff]
      %v225 = vld [vmem:[%s1 + $0x88] sm:$0xff]
      %v226 = vld [vmem:[%s1 + $0x90] sm:$0xff]
      %v227 = vld [vmem:[%s1 + $0x98] sm:$0xff]
      %v228 = vld [vmem:[%s1 + $0xa0] sm:$0xff]
      %v229 = vld [vmem:[%s1 + $0xa8] sm:$0xff]
      %v230 = vld [vmem:[%s1 + $0xb0] sm:$0xff]
      %v231 = vld [vmem:[%s1 + $0xb8] sm:$0xff]
      %v232 = vld [vmem:[%s1 + $0xc0] sm:$0xff]
      %v233 = vld [vmem:[%s1 + $0xc8] sm:$0xff]
      %v234 = vld [vmem:[%s1 + $0xd0] sm:$0xff]
      %v235 = vld [vmem:[%s1 + $0xd8] sm:$0xff]
      %v236 = vld [vmem:[%s1 + $0xe0] sm:$0xff]
      %v237 = vld [vmem:[%s1 + $0xe8] sm:$0xff]
      %v238 = vld [vmem:[%s1 + $0xf0] sm:$0xff]
      %v239 = vld [vmem:[%s1 + $0xf8] sm:$0xff]
      %v240 = vld [vmem:[%s2] sm:$0xf]
      %v242 = vperm.slane %v240, 0
      %v243 = vperm.slane %v240, 1
      %v244 = vperm.slane %v240, 2
      %v245 = vperm.slane %v240, 3
      %v282 = vunpack.c.l.b16 %v176
      %v283 = vunpack.c.l.b16 %v177
      %v284 = vunpack.c.l.b16 %v178
      %v285 = vunpack.c.l.b16 %v179
      %v286 = vunpack.c.l.b16 %v180
      %v287 = vunpack.c.l.b16 %v181
      %v288 = vunpack.c.l.b16 %v182
      %v289 = vunpack.c.l.b16 %v183
      %v290 = vunpack.c.l.b16 %v184
      %v291 = vunpack.c.l.b16 %v185
      %v292 = vunpack.c.l.b16 %v186
      %v293 = vunpack.c.l.b16 %v187
      %v294 = vunpack.c.l.b16 %v188
      %v295 = vunpack.c.l.b16 %v189
      %v296 = vunpack.c.l.b16 %v190
      %v297 = vunpack.c.l.b16 %v191
      %v298 = vunpack.c.l.b16 %v192
      %v299 = vunpack.c.l.b16 %v193
      %v300 = vunpack.c.l.b16 %v194
      %v301 = vunpack.c.l.b16 %v195
      %v302 = vunpack.c.l.b16 %v196
      %v303 = vunpack.c.l.b16 %v197
      %v304 = vunpack.c.l.b16 %v198
      %v305 = vunpack.c.l.b16 %v199
      %v306 = vunpack.c.l.b16 %v200
      %v307 = vunpack.c.l.b16 %v201
      %v308 = vunpack.c.l.b16 %v202
      %v309 = vunpack.c.l.b16 %v203
      %v310 = vunpack.c.l.b16 %v204
      %v311 = vunpack.c.l.b16 %v205
      %v312 = vunpack.c.l.b16 %v206
      %v313 = vunpack.c.l.b16 %v207
      %v314 = vpack.c.b16 %v283, %v282
      %v315 = vpack.c.b16 %v285, %v284
      %v316 = vpack.c.b16 %v287, %v286
      %v317 = vpack.c.b16 %v289, %v288
      %v318 = vpack.c.b16 %v291, %v290
      %v319 = vpack.c.b16 %v293, %v292
      %v320 = vpack.c.b16 %v295, %v294
      %v321 = vpack.c.b16 %v297, %v296
      %v322 = vpack.c.b16 %v299, %v298
      %v323 = vpack.c.b16 %v301, %v300
      %v324 = vpack.c.b16 %v303, %v302
      %v325 = vpack.c.b16 %v305, %v304
      %v326 = vpack.c.b16 %v307, %v306
      %v327 = vpack.c.b16 %v309, %v308
      %v328 = vpack.c.b16 %v311, %v310
      %v329 = vpack.c.b16 %v313, %v312
      %v378 = vunpack.c.l.b16 %v208
      %v379 = vunpack.c.h.b16 %v208
      %v380 = vunpack.c.l.b16 %v209
      %v381 = vunpack.c.h.b16 %v209
      %v382 = vunpack.c.l.b16 %v210
      %v383 = vunpack.c.h.b16 %v210
      %v384 = vunpack.c.l.b16 %v211
      %v385 = vunpack.c.h.b16 %v211
      %v386 = vunpack.c.l.b16 %v212
      %v387 = vunpack.c.h.b16 %v212
      %v388 = vunpack.c.l.b16 %v213
      %v389 = vunpack.c.h.b16 %v213
      %v390 = vunpack.c.l.b16 %v214
      %v391 = vunpack.c.h.b16 %v214
      %v392 = vunpack.c.l.b16 %v215
      %v393 = vunpack.c.h.b16 %v215
      %v394 = vunpack.c.l.b16 %v216
      %v395 = vunpack.c.h.b16 %v216
      %v396 = vunpack.c.l.b16 %v217
      %v397 = vunpack.c.h.b16 %v217
      %v398 = vunpack.c.l.b16 %v218
      %v399 = vunpack.c.h.b16 %v218
      %v400 = vunpack.c.l.b16 %v219
      %v401 = vunpack.c.h.b16 %v219
      %v402 = vunpack.c.l.b16 %v220
      %v403 = vunpack.c.h.b16 %v220
      %v404 = vunpack.c.l.b16 %v221
      %v405 = vunpack.c.h.b16 %v221
      %v406 = vunpack.c.l.b16 %v222
      %v407 = vunpack.c.h.b16 %v222
      %v408 = vunpack.c.l.b16 %v223
      %v409 = vunpack.c.h.b16 %v223
      %v410 = vunpack.c.l.b16 %v224
      %v411 = vunpack.c.h.b16 %v224
      %v412 = vunpack.c.l.b16 %v225
      %v413 = vunpack.c.h.b16 %v225
      %v414 = vunpack.c.l.b16 %v226
      %v415 = vunpack.c.h.b16 %v226
      %v416 = vunpack.c.l.b16 %v227
      %v417 = vunpack.c.h.b16 %v227
      %v418 = vunpack.c.l.b16 %v228
      %v419 = vunpack.c.h.b16 %v228
      %v420 = vunpack.c.l.b16 %v229
      %v421 = vunpack.c.h.b16 %v229
      %v422 = vunpack.c.l.b16 %v230
      %v423 = vunpack.c.h.b16 %v230
      %v424 = vunpack.c.l.b16 %v231
      %v425 = vunpack.c.h.b16 %v231
      %v426 = vunpack.c.l.b16 %v232
      %v427 = vunpack.c.h.b16 %v232
      %v428 = vunpack.c.l.b16 %v233
      %v429 = vunpack.c.h.b16 %v233
      %v430 = vunpack.c.l.b16 %v234
      %v431 = vunpack.c.h.b16 %v234
      %v432 = vunpack.c.l.b16 %v235
      %v433 = vunpack.c.h.b16 %v235
      %v434 = vunpack.c.l.b16 %v236
      %v435 = vunpack.c.h.b16 %v236
      %v436 = vunpack.c.l.b16 %v237
      %v437 = vunpack.c.h.b16 %v237
      %v438 = vunpack.c.l.b16 %v238
      %v439 = vunpack.c.h.b16 %v238
      %v440 = vunpack.c.l.b16 %v239
      %v441 = vunpack.c.h.b16 %v239
      %v442 = vpack.c.b16 %v382, %v378
      %v443 = vpack.c.b16 %v383, %v379
      %v444 = vpack.c.b16 %v384, %v380
      %v445 = vpack.c.b16 %v385, %v381
      %v446 = vpack.c.b16 %v390, %v386
      %v447 = vpack.c.b16 %v391, %v387
      %v448 = vpack.c.b16 %v392, %v388
      %v449 = vpack.c.b16 %v393, %v389
      %v450 = vpack.c.b16 %v398, %v394
      %v451 = vpack.c.b16 %v399, %v395
      %v452 = vpack.c.b16 %v400, %v396
      %v453 = vpack.c.b16 %v401, %v397
      %v454 = vpack.c.b16 %v406, %v402
      %v455 = vpack.c.b16 %v407, %v403
      %v456 = vpack.c.b16 %v408, %v404
      %v457 = vpack.c.b16 %v409, %v405
      %v458 = vpack.c.b16 %v414, %v410
      %v459 = vpack.c.b16 %v415, %v411
      %v460 = vpack.c.b16 %v416, %v412
      %v461 = vpack.c.b16 %v417, %v413
      %v462 = vpack.c.b16 %v422, %v418
      %v463 = vpack.c.b16 %v423, %v419
      %v464 = vpack.c.b16 %v424, %v420
      %v465 = vpack.c.b16 %v425, %v421
      %v466 = vpack.c.b16 %v430, %v426
      %v467 = vpack.c.b16 %v431, %v427
      %v468 = vpack.c.b16 %v432, %v428
      %v469 = vpack.c.b16 %v433, %v429
      %v470 = vpack.c.b16 %v438, %v434
      %v471 = vpack.c.b16 %v439, %v435
      %v472 = vpack.c.b16 %v440, %v436
      %v473 = vpack.c.b16 %v441, %v437
      %506 = vmatpush.bf16.msra.mxu0 %v470
      %507 = vmatpush.bf16.msra.mxu0 %v466
      %508 = vmatpush.bf16.msra.mxu0 %v462
      %509 = vmatpush.bf16.msra.mxu0 %v458
      %510 = vmatpush.bf16.msra.mxu0 %v454
      %511 = vmatpush.bf16.msra.mxu0 %v450
      %512 = vmatpush.bf16.msra.mxu0 %v446
      %513 = vmatpush.bf16.msra.mxu0 %v442
      %514 = vmatmul.bf16.gmra.mxu0 %v314
      %v515 = vpop.f32.mrf.mxu0
      %v516 = vadd.f32 %v242, %v515
      %v517 = vpop.f32.mrf.mxu0
      %v518 = vadd.f32 %v242, %v517
      %519 = vmatmul.bf16.gmra.mxu0 %v315
      %v520 = vpop.f32.mrf.mxu0
      %v521 = vadd.f32 %v242, %v520
      %v522 = vpop.f32.mrf.mxu0
      %v523 = vadd.f32 %v242, %v522
      %524 = vmatmul.bf16.gmra.mxu0 %v316
      %v525 = vpop.f32.mrf.mxu0
      %v526 = vadd.f32 %v242, %v525
      %v527 = vpop.f32.mrf.mxu0
      %v528 = vadd.f32 %v242, %v527
      %529 = vmatmul.bf16.gmra.mxu0 %v317
      %v530 = vpop.f32.mrf.mxu0
      %v531 = vadd.f32 %v242, %v530
      %v532 = vpop.f32.mrf.mxu0
      %v533 = vadd.f32 %v242, %v532
      %534 = vmatmul.bf16.gmra.mxu0 %v318
      %v535 = vpop.f32.mrf.mxu0
      %v536 = vadd.f32 %v242, %v535
      %v537 = vpop.f32.mrf.mxu0
      %v538 = vadd.f32 %v242, %v537
      %539 = vmatmul.bf16.gmra.mxu0 %v319
      %v540 = vpop.f32.mrf.mxu0
      %v541 = vadd.f32 %v242, %v540
      %v542 = vpop.f32.mrf.mxu0
      %v543 = vadd.f32 %v242, %v542
      %544 = vmatmul.bf16.gmra.mxu0 %v320
      %v545 = vpop.f32.mrf.mxu0
      %v546 = vadd.f32 %v242, %v545
      %v547 = vpop.f32.mrf.mxu0
      %v548 = vadd.f32 %v242, %v547
      %549 = vmatmul.bf16.gmra.mxu0 %v321
      %v550 = vpop.f32.mrf.mxu0
      %v551 = vadd.f32 %v242, %v550
      %v552 = vpop.f32.mrf.mxu0
      %v553 = vadd.f32 %v242, %v552
      %554 = vmatmul.bf16.gmra.mxu0 %v322
      %v555 = vpop.f32.mrf.mxu0
      %v556 = vadd.f32 %v242, %v555
      %v557 = vpop.f32.mrf.mxu0
      %v558 = vadd.f32 %v242, %v557
      %559 = vmatmul.bf16.gmra.mxu0 %v323
      %v560 = vpop.f32.mrf.mxu0
      %v561 = vadd.f32 %v242, %v560
      %v562 = vpop.f32.mrf.mxu0
      %v563 = vadd.f32 %v242, %v562
      %564 = vmatmul.bf16.gmra.mxu0 %v324
      %v565 = vpop.f32.mrf.mxu0
      %v566 = vadd.f32 %v242, %v565
      %v567 = vpop.f32.mrf.mxu0
      %v568 = vadd.f32 %v242, %v567
      %569 = vmatmul.bf16.gmra.mxu0 %v325
      %v570 = vpop.f32.mrf.mxu0
      %v571 = vadd.f32 %v242, %v570
      %v572 = vpop.f32.mrf.mxu0
      %v573 = vadd.f32 %v242, %v572
      %574 = vmatmul.bf16.gmra.mxu0 %v326
      %v575 = vpop.f32.mrf.mxu0
      %v576 = vadd.f32 %v242, %v575
      %v577 = vpop.f32.mrf.mxu0
      %v578 = vadd.f32 %v242, %v577
      %579 = vmatmul.bf16.gmra.mxu0 %v327
      %v580 = vpop.f32.mrf.mxu0
      %v581 = vadd.f32 %v242, %v580
      %v582 = vpop.f32.mrf.mxu0
      %v583 = vadd.f32 %v242, %v582
      %584 = vmatmul.bf16.gmra.mxu0 %v328
      %v585 = vpop.f32.mrf.mxu0
      %v586 = vadd.f32 %v242, %v585
      %v587 = vpop.f32.mrf.mxu0
      %v588 = vadd.f32 %v242, %v587
      %589 = vmatmul.bf16.gmra.mxu0 %v329
      %v590 = vpop.f32.mrf.mxu0
      %v591 = vadd.f32 %v242, %v590
      %v592 = vpop.f32.mrf.mxu0
      %v593 = vadd.f32 %v242, %v592
      %594 = vdwg.mxu0
      %595 = vmatpush.bf16.msra.mxu0 %v471
      %596 = vmatpush.bf16.msra.mxu0 %v467
      %597 = vmatpush.bf16.msra.mxu0 %v463
      %598 = vmatpush.bf16.msra.mxu0 %v459
      %599 = vmatpush.bf16.msra.mxu0 %v455
      %600 = vmatpush.bf16.msra.mxu0 %v451
      %601 = vmatpush.bf16.msra.mxu0 %v447
      %602 = vmatpush.bf16.msra.mxu0 %v443
      %603 = vmatmul.bf16.gmra.mxu0 %v314
      %v604 = vpop.f32.mrf.mxu0
      %v605 = vadd.f32 %v243, %v604
      %v606 = vpop.f32.mrf.mxu0
      %v607 = vadd.f32 %v243, %v606
      %608 = vmatmul.bf16.gmra.mxu0 %v315
      %v609 = vpop.f32.mrf.mxu0
      %v610 = vadd.f32 %v243, %v609
      %v611 = vpop.f32.mrf.mxu0
      %v612 = vadd.f32 %v243, %v611
      %613 = vmatmul.bf16.gmra.mxu0 %v316
      %v614 = vpop.f32.mrf.mxu0
      %v615 = vadd.f32 %v243, %v614
      %v616 = vpop.f32.mrf.mxu0
      %v617 = vadd.f32 %v243, %v616
      %618 = vmatmul.bf16.gmra.mxu0 %v317
      %v619 = vpop.f32.mrf.mxu0
      %v620 = vadd.f32 %v243, %v619
      %v621 = vpop.f32.mrf.mxu0
      %v622 = vadd.f32 %v243, %v621
      %623 = vmatmul.bf16.gmra.mxu0 %v318
      %v624 = vpop.f32.mrf.mxu0
      %v625 = vadd.f32 %v243, %v624
      %v626 = vpop.f32.mrf.mxu0
      %v627 = vadd.f32 %v243, %v626
      %628 = vmatmul.bf16.gmra.mxu0 %v319
      %v629 = vpop.f32.mrf.mxu0
      %v630 = vadd.f32 %v243, %v629
      %v631 = vpop.f32.mrf.mxu0
      %v632 = vadd.f32 %v243, %v631
      %633 = vmatmul.bf16.gmra.mxu0 %v320
      %v634 = vpop.f32.mrf.mxu0
      %v635 = vadd.f32 %v243, %v634
      %v636 = vpop.f32.mrf.mxu0
      %v637 = vadd.f32 %v243, %v636
      %638 = vmatmul.bf16.gmra.mxu0 %v321
      %v639 = vpop.f32.mrf.mxu0
      %v640 = vadd.f32 %v243, %v639
      %v641 = vpop.f32.mrf.mxu0
      %v642 = vadd.f32 %v243, %v641
      %643 = vmatmul.bf16.gmra.mxu0 %v322
      %v644 = vpop.f32.mrf.mxu0
      %v645 = vadd.f32 %v243, %v644
      %v646 = vpop.f32.mrf.mxu0
      %v647 = vadd.f32 %v243, %v646
      %648 = vmatmul.bf16.gmra.mxu0 %v323
      %v649 = vpop.f32.mrf.mxu0
      %v650 = vadd.f32 %v243, %v649
      %v651 = vpop.f32.mrf.mxu0
      %v652 = vadd.f32 %v243, %v651
      %653 = vmatmul.bf16.gmra.mxu0 %v324
      %v654 = vpop.f32.mrf.mxu0
      %v655 = vadd.f32 %v243, %v654
      %v656 = vpop.f32.mrf.mxu0
      %v657 = vadd.f32 %v243, %v656
      %658 = vmatmul.bf16.gmra.mxu0 %v325
      %v659 = vpop.f32.mrf.mxu0
      %v660 = vadd.f32 %v243, %v659
      %v661 = vpop.f32.mrf.mxu0
      %v662 = vadd.f32 %v243, %v661
      %663 = vmatmul.bf16.gmra.mxu0 %v326
      %v664 = vpop.f32.mrf.mxu0
      %v665 = vadd.f32 %v243, %v664
      %v666 = vpop.f32.mrf.mxu0
      %v667 = vadd.f32 %v243, %v666
      %668 = vmatmul.bf16.gmra.mxu0 %v327
      %v669 = vpop.f32.mrf.mxu0
      %v670 = vadd.f32 %v243, %v669
      %v671 = vpop.f32.mrf.mxu0
      %v672 = vadd.f32 %v243, %v671
      %673 = vmatmul.bf16.gmra.mxu0 %v328
      %v674 = vpop.f32.mrf.mxu0
      %v675 = vadd.f32 %v243, %v674
      %v676 = vpop.f32.mrf.mxu0
      %v677 = vadd.f32 %v243, %v676
      %678 = vmatmul.bf16.gmra.mxu0 %v329
      %v679 = vpop.f32.mrf.mxu0
      %v680 = vadd.f32 %v243, %v679
      %v681 = vpop.f32.mrf.mxu0
      %v682 = vadd.f32 %v243, %v681
      %683 = vdwg.mxu0
      %684 = vmatpush.bf16.msra.mxu0 %v472
      %685 = vmatpush.bf16.msra.mxu0 %v468
      %686 = vmatpush.bf16.msra.mxu0 %v464
      %687 = vmatpush.bf16.msra.mxu0 %v460
      %688 = vmatpush.bf16.msra.mxu0 %v456
      %689 = vmatpush.bf16.msra.mxu0 %v452
      %690 = vmatpush.bf16.msra.mxu0 %v448
      %691 = vmatpush.bf16.msra.mxu0 %v444
      %692 = vmatmul.bf16.gmra.mxu0 %v314
      %v693 = vpop.f32.mrf.mxu0
      %v694 = vadd.f32 %v244, %v693
      %v695 = vpop.f32.mrf.mxu0
      %v696 = vadd.f32 %v244, %v695
      %697 = vmatmul.bf16.gmra.mxu0 %v315
      %v698 = vpop.f32.mrf.mxu0
      %v699 = vadd.f32 %v244, %v698
      %v700 = vpop.f32.mrf.mxu0
      %v701 = vadd.f32 %v244, %v700
      %702 = vmatmul.bf16.gmra.mxu0 %v316
      %v703 = vpop.f32.mrf.mxu0
      %v704 = vadd.f32 %v244, %v703
      %v705 = vpop.f32.mrf.mxu0
      %v706 = vadd.f32 %v244, %v705
      %707 = vmatmul.bf16.gmra.mxu0 %v317
      %v708 = vpop.f32.mrf.mxu0
      %v709 = vadd.f32 %v244, %v708
      %v710 = vpop.f32.mrf.mxu0
      %v711 = vadd.f32 %v244, %v710
      %712 = vmatmul.bf16.gmra.mxu0 %v318
      %v713 = vpop.f32.mrf.mxu0
      %v714 = vadd.f32 %v244, %v713
      %v715 = vpop.f32.mrf.mxu0
      %v716 = vadd.f32 %v244, %v715
      %717 = vmatmul.bf16.gmra.mxu0 %v319
      %v718 = vpop.f32.mrf.mxu0
      %v719 = vadd.f32 %v244, %v718
      %v720 = vpop.f32.mrf.mxu0
      %v721 = vadd.f32 %v244, %v720
      %722 = vmatmul.bf16.gmra.mxu0 %v320
      %v723 = vpop.f32.mrf.mxu0
      %v724 = vadd.f32 %v244, %v723
      %v725 = vpop.f32.mrf.mxu0
      %v726 = vadd.f32 %v244, %v725
      %727 = vmatmul.bf16.gmra.mxu0 %v321
      %v728 = vpop.f32.mrf.mxu0
      %v729 = vadd.f32 %v244, %v728
      %v730 = vpop.f32.mrf.mxu0
      %v731 = vadd.f32 %v244, %v730
      %732 = vmatmul.bf16.gmra.mxu0 %v322
      %v733 = vpop.f32.mrf.mxu0
      %v734 = vadd.f32 %v244, %v733
      %v735 = vpop.f32.mrf.mxu0
      %v736 = vadd.f32 %v244, %v735
      %737 = vmatmul.bf16.gmra.mxu0 %v323
      %v738 = vpop.f32.mrf.mxu0
      %v739 = vadd.f32 %v244, %v738
      %v740 = vpop.f32.mrf.mxu0
      %v741 = vadd.f32 %v244, %v740
      %742 = vmatmul.bf16.gmra.mxu0 %v324
      %v743 = vpop.f32.mrf.mxu0
      %v744 = vadd.f32 %v244, %v743
      %v745 = vpop.f32.mrf.mxu0
      %v746 = vadd.f32 %v244, %v745
      %747 = vmatmul.bf16.gmra.mxu0 %v325
      %v748 = vpop.f32.mrf.mxu0
      %v749 = vadd.f32 %v244, %v748
      %v750 = vpop.f32.mrf.mxu0
      %v751 = vadd.f32 %v244, %v750
      %752 = vmatmul.bf16.gmra.mxu0 %v326
      %v753 = vpop.f32.mrf.mxu0
      %v754 = vadd.f32 %v244, %v753
      %v755 = vpop.f32.mrf.mxu0
      %v756 = vadd.f32 %v244, %v755
      %757 = vmatmul.bf16.gmra.mxu0 %v327
      %v758 = vpop.f32.mrf.mxu0
      %v759 = vadd.f32 %v244, %v758
      %v760 = vpop.f32.mrf.mxu0
      %v761 = vadd.f32 %v244, %v760
      %762 = vmatmul.bf16.gmra.mxu0 %v328
      %v763 = vpop.f32.mrf.mxu0
      %v764 = vadd.f32 %v244, %v763
      %v765 = vpop.f32.mrf.mxu0
      %v766 = vadd.f32 %v244, %v765
      %767 = vmatmul.bf16.gmra.mxu0 %v329
      %v768 = vpop.f32.mrf.mxu0
      %v769 = vadd.f32 %v244, %v768
      %v770 = vpop.f32.mrf.mxu0
      %v771 = vadd.f32 %v244, %v770
      %772 = vdwg.mxu0
      %773 = vmatpush.bf16.msra.mxu0 %v473
      %774 = vmatpush.bf16.msra.mxu0 %v469
      %775 = vmatpush.bf16.msra.mxu0 %v465
      %776 = vmatpush.bf16.msra.mxu0 %v461
      %777 = vmatpush.bf16.msra.mxu0 %v457
      %778 = vmatpush.bf16.msra.mxu0 %v453
      %779 = vmatpush.bf16.msra.mxu0 %v449
      %780 = vmatpush.bf16.msra.mxu0 %v445
      %781 = vmatmul.bf16.gmra.mxu0 %v314
      %v782 = vpop.f32.mrf.mxu0
      %v783 = vadd.f32 %v245, %v782
      %v784 = vpop.f32.mrf.mxu0
      %v785 = vadd.f32 %v245, %v784
      %786 = vmatmul.bf16.gmra.mxu0 %v315
      %v787 = vpop.f32.mrf.mxu0
      %v788 = vadd.f32 %v245, %v787
      %v789 = vpop.f32.mrf.mxu0
      %v790 = vadd.f32 %v245, %v789
      %791 = vmatmul.bf16.gmra.mxu0 %v316
      %v792 = vpop.f32.mrf.mxu0
      %v793 = vadd.f32 %v245, %v792
      %v794 = vpop.f32.mrf.mxu0
      %v795 = vadd.f32 %v245, %v794
      %796 = vmatmul.bf16.gmra.mxu0 %v317
      %v797 = vpop.f32.mrf.mxu0
      %v798 = vadd.f32 %v245, %v797
      %v799 = vpop.f32.mrf.mxu0
      %v800 = vadd.f32 %v245, %v799
      %801 = vmatmul.bf16.gmra.mxu0 %v318
      %v802 = vpop.f32.mrf.mxu0
      %v803 = vadd.f32 %v245, %v802
      %v804 = vpop.f32.mrf.mxu0
      %v805 = vadd.f32 %v245, %v804
      %806 = vmatmul.bf16.gmra.mxu0 %v319
      %v807 = vpop.f32.mrf.mxu0
      %v808 = vadd.f32 %v245, %v807
      %v809 = vpop.f32.mrf.mxu0
      %v810 = vadd.f32 %v245, %v809
      %811 = vmatmul.bf16.gmra.mxu0 %v320
      %v812 = vpop.f32.mrf.mxu0
      %v813 = vadd.f32 %v245, %v812
      %v814 = vpop.f32.mrf.mxu0
      %v815 = vadd.f32 %v245, %v814
      %816 = vmatmul.bf16.gmra.mxu0 %v321
      %v817 = vpop.f32.mrf.mxu0
      %v818 = vadd.f32 %v245, %v817
      %v819 = vpop.f32.mrf.mxu0
      %v820 = vadd.f32 %v245, %v819
      %821 = vmatmul.bf16.gmra.mxu0 %v322
      %v822 = vpop.f32.mrf.mxu0
      %v823 = vadd.f32 %v245, %v822
      %v824 = vpop.f32.mrf.mxu0
      %v825 = vadd.f32 %v245, %v824
      %826 = vmatmul.bf16.gmra.mxu0 %v323
      %v827 = vpop.f32.mrf.mxu0
      %v828 = vadd.f32 %v245, %v827
      %v829 = vpop.f32.mrf.mxu0
      %v830 = vadd.f32 %v245, %v829
      %831 = vmatmul.bf16.gmra.mxu0 %v324
      %v832 = vpop.f32.mrf.mxu0
      %v833 = vadd.f32 %v245, %v832
      %v834 = vpop.f32.mrf.mxu0
      %v835 = vadd.f32 %v245, %v834
      %836 = vmatmul.bf16.gmra.mxu0 %v325
      %v837 = vpop.f32.mrf.mxu0
      %v838 = vadd.f32 %v245, %v837
      %v839 = vpop.f32.mrf.mxu0
      %v840 = vadd.f32 %v245, %v839
      %841 = vmatmul.bf16.gmra.mxu0 %v326
      %v842 = vpop.f32.mrf.mxu0
      %v843 = vadd.f32 %v245, %v842
      %v844 = vpop.f32.mrf.mxu0
      %v845 = vadd.f32 %v245, %v844
      %846 = vmatmul.bf16.gmra.mxu0 %v327
      %v847 = vpop.f32.mrf.mxu0
      %v848 = vadd.f32 %v245, %v847
      %v849 = vpop.f32.mrf.mxu0
      %v850 = vadd.f32 %v245, %v849
      %851 = vmatmul.bf16.gmra.mxu0 %v328
      %v852 = vpop.f32.mrf.mxu0
      %v853 = vadd.f32 %v245, %v852
      %v854 = vpop.f32.mrf.mxu0
      %v855 = vadd.f32 %v245, %v854
      %856 = vmatmul.bf16.gmra.mxu0 %v329
      %v857 = vpop.f32.mrf.mxu0
      %v858 = vadd.f32 %v245, %v857
      %v859 = vpop.f32.mrf.mxu0
      %v860 = vadd.f32 %v245, %v859
      %861 = vdwg.mxu0
      %862 = vst [vmem:[%s174] sm:$0xff] %v516
      %863 = vst [vmem:[%s174 + $0x8] sm:$0xff] %v605
      %864 = vst [vmem:[%s174 + $0x10] sm:$0xff] %v694
      %865 = vst [vmem:[%s174 + $0x18] sm:$0xff] %v783
      %866 = vst [vmem:[%s174 + $0x20] sm:$0xff] %v518
      %867 = vst [vmem:[%s174 + $0x28] sm:$0xff] %v607
      %868 = vst [vmem:[%s174 + $0x30] sm:$0xff] %v696
      %869 = vst [vmem:[%s174 + $0x38] sm:$0xff] %v785
      %870 = vst [vmem:[%s174 + $0x40] sm:$0xff] %v521
      %871 = vst [vmem:[%s174 + $0x48] sm:$0xff] %v610
      %872 = vst [vmem:[%s174 + $0x50] sm:$0xff] %v699
      %873 = vst [vmem:[%s174 + $0x58] sm:$0xff] %v788
      %874 = vst [vmem:[%s174 + $0x60] sm:$0xff] %v523
      %875 = vst [vmem:[%s174 + $0x68] sm:$0xff] %v612
      %876 = vst [vmem:[%s174 + $0x70] sm:$0xff] %v701
      %877 = vst [vmem:[%s174 + $0x78] sm:$0xff] %v790
      %878 = vst [vmem:[%s174 + $0x80] sm:$0xff] %v526
      %879 = vst [vmem:[%s174 + $0x88] sm:$0xff] %v615
      %880 = vst [vmem:[%s174 + $0x90] sm:$0xff] %v704
      %881 = vst [vmem:[%s174 + $0x98] sm:$0xff] %v793
      %882 = vst [vmem:[%s174 + $0xa0] sm:$0xff] %v528
      %883 = vst [vmem:[%s174 + $0xa8] sm:$0xff] %v617
      %884 = vst [vmem:[%s174 + $0xb0] sm:$0xff] %v706
      %885 = vst [vmem:[%s174 + $0xb8] sm:$0xff] %v795
      %886 = vst [vmem:[%s174 + $0xc0] sm:$0xff] %v531
      %887 = vst [vmem:[%s174 + $0xc8] sm:$0xff] %v620
      %888 = vst [vmem:[%s174 + $0xd0] sm:$0xff] %v709
      %889 = vst [vmem:[%s174 + $0xd8] sm:$0xff] %v798
      %890 = vst [vmem:[%s174 + $0xe0] sm:$0xff] %v533
      %891 = vst [vmem:[%s174 + $0xe8] sm:$0xff] %v622
      %892 = vst [vmem:[%s174 + $0xf0] sm:$0xff] %v711
      %893 = vst [vmem:[%s174 + $0xf8] sm:$0xff] %v800
      %894 = vst [vmem:[%s174 + $0x100] sm:$0xff] %v536
      %895 = vst [vmem:[%s174 + $0x108] sm:$0xff] %v625
      %896 = vst [vmem:[%s174 + $0x110] sm:$0xff] %v714
      %897 = vst [vmem:[%s174 + $0x118] sm:$0xff] %v803
      %898 = vst [vmem:[%s174 + $0x120] sm:$0xff] %v538
      %899 = vst [vmem:[%s174 + $0x128] sm:$0xff] %v627
      %900 = vst [vmem:[%s174 + $0x130] sm:$0xff] %v716
      %901 = vst [vmem:[%s174 + $0x138] sm:$0xff] %v805
      %902 = vst [vmem:[%s174 + $0x140] sm:$0xff] %v541
      %903 = vst [vmem:[%s174 + $0x148] sm:$0xff] %v630
      %904 = vst [vmem:[%s174 + $0x150] sm:$0xff] %v719
      %905 = vst [vmem:[%s174 + $0x158] sm:$0xff] %v808
      %906 = vst [vmem:[%s174 + $0x160] sm:$0xff] %v543
      %907 = vst [vmem:[%s174 + $0x168] sm:$0xff] %v632
      %908 = vst [vmem:[%s174 + $0x170] sm:$0xff] %v721
      %909 = vst [vmem:[%s174 + $0x178] sm:$0xff] %v810
      %910 = vst [vmem:[%s174 + $0x180] sm:$0xff] %v546
      %911 = vst [vmem:[%s174 + $0x188] sm:$0xff] %v635
      %912 = vst [vmem:[%s174 + $0x190] sm:$0xff] %v724
      %913 = vst [vmem:[%s174 + $0x198] sm:$0xff] %v813
      %914 = vst [vmem:[%s174 + $0x1a0] sm:$0xff] %v548
      %915 = vst [vmem:[%s174 + $0x1a8] sm:$0xff] %v637
      %916 = vst [vmem:[%s174 + $0x1b0] sm:$0xff] %v726
      %917 = vst [vmem:[%s174 + $0x1b8] sm:$0xff] %v815
      %918 = vst [vmem:[%s174 + $0x1c0] sm:$0xff] %v551
      %919 = vst [vmem:[%s174 + $0x1c8] sm:$0xff] %v640
      %920 = vst [vmem:[%s174 + $0x1d0] sm:$0xff] %v729
      %921 = vst [vmem:[%s174 + $0x1d8] sm:$0xff] %v818
      %922 = vst [vmem:[%s174 + $0x1e0] sm:$0xff] %v553
      %923 = vst [vmem:[%s174 + $0x1e8] sm:$0xff] %v642
      %924 = vst [vmem:[%s174 + $0x1f0] sm:$0xff] %v731
      %925 = vst [vmem:[%s174 + $0x1f8] sm:$0xff] %v820
      %926 = vst [vmem:[%s174 + $0x200] sm:$0xff] %v556
      %927 = vst [vmem:[%s174 + $0x208] sm:$0xff] %v645
      %928 = vst [vmem:[%s174 + $0x210] sm:$0xff] %v734
      %929 = vst [vmem:[%s174 + $0x218] sm:$0xff] %v823
      %930 = vst [vmem:[%s174 + $0x220] sm:$0xff] %v558
      %931 = vst [vmem:[%s174 + $0x228] sm:$0xff] %v647
      %932 = vst [vmem:[%s174 + $0x230] sm:$0xff] %v736
      %933 = vst [vmem:[%s174 + $0x238] sm:$0xff] %v825
      %934 = vst [vmem:[%s174 + $0x240] sm:$0xff] %v561
      %935 = vst [vmem:[%s174 + $0x248] sm:$0xff] %v650
      %936 = vst [vmem:[%s174 + $0x250] sm:$0xff] %v739
      %937 = vst [vmem:[%s174 + $0x258] sm:$0xff] %v828
      %938 = vst [vmem:[%s174 + $0x260] sm:$0xff] %v563
      %939 = vst [vmem:[%s174 + $0x268] sm:$0xff] %v652
      %940 = vst [vmem:[%s174 + $0x270] sm:$0xff] %v741
      %941 = vst [vmem:[%s174 + $0x278] sm:$0xff] %v830
      %942 = vst [vmem:[%s174 + $0x280] sm:$0xff] %v566
      %943 = vst [vmem:[%s174 + $0x288] sm:$0xff] %v655
      %944 = vst [vmem:[%s174 + $0x290] sm:$0xff] %v744
      %945 = vst [vmem:[%s174 + $0x298] sm:$0xff] %v833
      %946 = vst [vmem:[%s174 + $0x2a0] sm:$0xff] %v568
      %947 = vst [vmem:[%s174 + $0x2a8] sm:$0xff] %v657
      %948 = vst [vmem:[%s174 + $0x2b0] sm:$0xff] %v746
      %949 = vst [vmem:[%s174 + $0x2b8] sm:$0xff] %v835
      %950 = vst [vmem:[%s174 + $0x2c0] sm:$0xff] %v571
      %951 = vst [vmem:[%s174 + $0x2c8] sm:$0xff] %v660
      %952 = vst [vmem:[%s174 + $0x2d0] sm:$0xff] %v749
      %953 = vst [vmem:[%s174 + $0x2d8] sm:$0xff] %v838
      %954 = vst [vmem:[%s174 + $0x2e0] sm:$0xff] %v573
      %955 = vst [vmem:[%s174 + $0x2e8] sm:$0xff] %v662
      %956 = vst [vmem:[%s174 + $0x2f0] sm:$0xff] %v751
      %957 = vst [vmem:[%s174 + $0x2f8] sm:$0xff] %v840
      %958 = vst [vmem:[%s174 + $0x300] sm:$0xff] %v576
      %959 = vst [vmem:[%s174 + $0x308] sm:$0xff] %v665
      %960 = vst [vmem:[%s174 + $0x310] sm:$0xff] %v754
      %961 = vst [vmem:[%s174 + $0x318] sm:$0xff] %v843
      %962 = vst [vmem:[%s174 + $0x320] sm:$0xff] %v578
      %963 = vst [vmem:[%s174 + $0x328] sm:$0xff] %v667
      %964 = vst [vmem:[%s174 + $0x330] sm:$0xff] %v756
      %965 = vst [vmem:[%s174 + $0x338] sm:$0xff] %v845
      %966 = vst [vmem:[%s174 + $0x340] sm:$0xff] %v581
      %967 = vst [vmem:[%s174 + $0x348] sm:$0xff] %v670
      %968 = vst [vmem:[%s174 + $0x350] sm:$0xff] %v759
      %969 = vst [vmem:[%s174 + $0x358] sm:$0xff] %v848
      %970 = vst [vmem:[%s174 + $0x360] sm:$0xff] %v583
      %971 = vst [vmem:[%s174 + $0x368] sm:$0xff] %v672
      %972 = vst [vmem:[%s174 + $0x370] sm:$0xff] %v761
      %973 = vst [vmem:[%s174 + $0x378] sm:$0xff] %v850
      %974 = vst [vmem:[%s174 + $0x380] sm:$0xff] %v586
      %975 = vst [vmem:[%s174 + $0x388] sm:$0xff] %v675
      %976 = vst [vmem:[%s174 + $0x390] sm:$0xff] %v764
      %977 = vst [vmem:[%s174 + $0x398] sm:$0xff] %v853
      %978 = vst [vmem:[%s174 + $0x3a0] sm:$0xff] %v588
      %979 = vst [vmem:[%s174 + $0x3a8] sm:$0xff] %v677
      %980 = vst [vmem:[%s174 + $0x3b0] sm:$0xff] %v766
      %981 = vst [vmem:[%s174 + $0x3b8] sm:$0xff] %v855
      %982 = vst [vmem:[%s174 + $0x3c0] sm:$0xff] %v591
      %983 = vst [vmem:[%s174 + $0x3c8] sm:$0xff] %v680
      %984 = vst [vmem:[%s174 + $0x3d0] sm:$0xff] %v769
      %985 = vst [vmem:[%s174 + $0x3d8] sm:$0xff] %v858
      %986 = vst [vmem:[%s174 + $0x3e0] sm:$0xff] %v593
      %987 = vst [vmem:[%s174 + $0x3e8] sm:$0xff] %v682
      %988 = vst [vmem:[%s174 + $0x3f0] sm:$0xff] %v771
      %989 = vst [vmem:[%s174 + $0x3f8] sm:$0xff] %v860
      %s990 = smul.u32 32, %s14
      %p991 = scmp.lt.s32.totalorder %s990, 63
      %s992 = scalar_select %p991, %s990, 63
      %s993 = smul.addr %s992, 4
      %s994 = smul.addr %s993, 8
      %s995 = scalar_lea.vmem %s3, %s994
      // Predicated region
      $region33: #{cdbn_segmentor_forward.6} parent=31 // pred_check
        %p996 = pneg %p100
      $region34: #{cdbn_segmentor_forward.6} parent=31 // pred_check_branch
        %998 = sbr.rel (%p996) target = $region36
      $region35: #{cdbn_segmentor_forward.6} parent=31 // pred_region
        %s999 = smul.u32 32, %s14
      $region36: #{cdbn_segmentor_forward.6} parent=31 // pred_fallthru
        _
    $region32: #{cdbn_segmentor_forward.6} parent=5 // pred_fallthru
      _
    %p1000 = scmp.le.s32.totalorder 2, %s9
    // Predicated region
    $region37: #{cdbn_segmentor_forward.6} parent=5 // pred_check
      %p1001 = pneg %p1000
    $region38: #{cdbn_segmentor_forward.6} parent=5 // pred_check_branch
      %1003 = sbr.rel (%p1001) target = $region40
    $region39: #{cdbn_segmentor_forward.6} parent=5 // pred_region
      %s1004 = ssub.s32 %s9, 2
      // Predicated region
      $region41: #{cdbn_segmentor_forward.6} parent=39 // pred_check
        %p1005 = pneg %p106
      $region42: #{cdbn_segmentor_forward.6} parent=39 // pred_check_branch
        %1007 = sbr.rel (%p1005) target = $region44
      $region43: #{cdbn_segmentor_forward.6} parent=39 // pred_region
        %s1008 = smul.u32 32, %s15
        %p1009 = scmp.lt.s32.totalorder %s1008, 63
        %s1010 = scalar_select %p1009, %s1008, 63
        %s1011 = smul.addr %s1010, 4
        %s1012 = smul.addr %s1011, 8
        %s1013 = scalar_lea.vmem %s3, %s1012
      $region44: #{cdbn_segmentor_forward.6} parent=39 // pred_fallthru
        _
    $region40: #{cdbn_segmentor_forward.6} parent=5 // pred_fallthru
      _
  $region6: #{cdbn_segmentor_forward.6} parent=0 // loop_footer
    %s13 = sadd.s32 1, %s9
  $region7: #{cdbn_segmentor_forward.6} parent=0 // loop_footer_branch
    %8 = sbr.rel target = $region3
  $region8: #{cdbn_segmentor_forward.6} parent=0 // loop_exit
    _

</llo_original>
